<compile_context>
chip_gen: v6e
topology: v6e:2x2x1
jax: 0.10.0
libtpu: 0.0.40
codegen_flags: <defaults>
</compile_context>

<pallas_src>
import functools

import jax
import jax.numpy as jnp
from jax import lax
from jax.experimental import pallas as pl
from jax.experimental.pallas import tpu as pltpu

# ---------------- model config (matches ModelConfig defaults) ----------------
N_EMBD = 32
N_HEAD = 2
N_LAYER = 2
BLOCK_SIZE = 32                 # max sequence length
HEAD_SIZE = N_EMBD // N_HEAD    # 16
HIDDEN = 4 * N_EMBD             # 128
VOCAB_SIZE = 65
VOCAB_PAD = 128                 # lane-dense padded vocab for lm_head output
TOK_PAD = 128                   # row-padded token table for one-hot gather
LN_EPS = 1e-5
# dropout = 0.0 -> no-op, omitted


# ------------------------------ kernel ---------------------------------------
def _layernorm(h, gamma, beta):
    mu = jnp.mean(h, axis=-1, keepdims=True)
    var = jnp.mean((h - mu) ** 2, axis=-1, keepdims=True)
    return (h - mu) * lax.rsqrt(var + LN_EPS) * gamma + beta


def gpt_fused_kernel(idx_ref, tok_ref, pos_ref, wqkv_ref, wp_ref, w1_ref,
                     w2_ref, lvec_ref, wlm_ref, fvec_ref, out_ref,
                     *, seq_len, chunk_b):
    T = seq_len
    R = chunk_b * T

    # ---- fused embedding: one-hot gather (MXU matmul) + positional add ----
    ids = idx_ref[...]                                           # (R, 1) int32
    vcol = lax.broadcasted_iota(jnp.int32, (R, TOK_PAD), 1)
    onehot = (vcol == ids).astype(jnp.float32)                   # (R, TOK_PAD)
    x = jnp.dot(onehot, tok_ref[...],
                preferred_element_type=jnp.float32)              # (R, C)
    pos = pos_ref[0:T, :]                                        # (T, C)
    if chunk_b > 1:
        pos = jnp.concatenate([pos] * chunk_b, axis=0)           # (R, C)
    x = x + pos

    # Pure lower-triangular causal mask, one (T, T) per program (static, reused).
    rr = lax.broadcasted_iota(jnp.int32, (T, T), 0)
    cc = lax.broadcasted_iota(jnp.int32, (T, T), 1)
    causal = cc <= rr

    for l in range(N_LAYER):                                     # static unroll
        # Static ref-level slices (narrow loads, no full-slab materialization).
        ln1_g = lvec_ref[l, 0:1, 0:N_EMBD]
        ln1_b = lvec_ref[l, 1:2, 0:N_EMBD]
        bp    = lvec_ref[l, 2:3, 0:N_EMBD]
        ln2_g = lvec_ref[l, 3:4, 0:N_EMBD]
        ln2_b = lvec_ref[l, 4:5, 0:N_EMBD]
        b1    = lvec_ref[l, 5:6, :]                              # (1, HIDDEN)
        b2    = lvec_ref[l, 6:7, 0:N_EMBD]

        # ---- self attention (pre-LN) ----
        h = _layernorm(x, ln1_g, ln1_b)                          # (R, C)
        # Fused QKV for all heads; 1/sqrt(head_size) already folded into wq.
        qkv = jnp.dot(h, wqkv_ref[l],
                      preferred_element_type=jnp.float32)        # (R, 3C)

        # Per-batch-segment attention: no masked cross-batch work.
        sa_parts = []
        for b in range(chunk_b):                                 # static unroll
            r0 = b * T
            sa_b = jnp.zeros((T, N_EMBD), jnp.float32)
            for hi in range(N_HEAD):                             # static unroll
                q = qkv[r0:r0 + T, hi * HEAD_SIZE:(hi + 1) * HEAD_SIZE]
                k = qkv[r0:r0 + T,
                        N_EMBD + hi * HEAD_SIZE:N_EMBD + (hi + 1) * HEAD_SIZE]
                v = qkv[r0:r0 + T,
                        2 * N_EMBD + hi * HEAD_SIZE:2 * N_EMBD + (hi + 1) * HEAD_SIZE]

                # q @ k^T without materializing the transpose (scale pre-folded).
                s = lax.dot_general(q, k, (((1,), (1,)), ((), ())),
                                    preferred_element_type=jnp.float32)
                s = jnp.where(causal, s, -1e30)
                s = s - jnp.max(s, axis=-1, keepdims=True)
                p = jnp.exp(s)
                denom = jnp.sum(p, axis=-1, keepdims=True)
                # fold 1/denom after p@v (divide (T,H) not (T,T))
                o = jnp.dot(p, v, preferred_element_type=jnp.float32) / denom
                # per-head partial projection, summed (replaces concat + proj)
                sa_b = sa_b + jnp.dot(
                    o, wp_ref[l, hi * HEAD_SIZE:(hi + 1) * HEAD_SIZE, :],
                    preferred_element_type=jnp.float32)
            sa_parts.append(sa_b)
        sa = sa_parts[0] if chunk_b == 1 else jnp.concatenate(sa_parts, axis=0)
        x = x + sa + bp

        # ---- feed forward (pre-LN) ----
        h2 = _layernorm(x, ln2_g, ln2_b)
        ff = jnp.dot(h2, w1_ref[l], preferred_element_type=jnp.float32) + b1
        ff = jnp.maximum(ff, 0.0)
        ff = jnp.dot(ff, w2_ref[l], preferred_element_type=jnp.float32) + b2
        x = x + ff

    # ---- final LayerNorm + lm_head (lane-padded to VOCAB_PAD columns) ----
    lnf_g = fvec_ref[0:1, 0:N_EMBD]
    lnf_b = fvec_ref[1:2, 0:N_EMBD]
    blm   = fvec_ref[2:3, :]                                     # (1, VOCAB_PAD)
    h = _layernorm(x, lnf_g, lnf_b)
    out_ref[...] = (jnp.dot(h, wlm_ref[...],
                            preferred_element_type=jnp.float32) + blm)


# ------------------------------ wrappers --------------------------------------
def _const_spec(arr):
    # Constant index_map: the block never changes with the grid step, so the
    # weight slab stays resident in VMEM across all grid iterations (no
    # re-fetch; double-buffering is irrelevant at ~50 KB of weights).
    nd = arr.ndim
    return pl.BlockSpec(arr.shape, lambda i, _nd=nd: (0,) * _nd)


def run_gpt_fused(idx_flat, packed, *, seq_len, batch_chunks=1):
    """idx_flat: (B*T, 1) int32 token ids. Returns padded logits (B*T, VOCAB_PAD)."""
    BT = idx_flat.shape[0]
    assert BT % batch_chunks == 0
    R = BT // batch_chunks
    assert R % seq_len == 0
    chunk_b = R // seq_len

    weights = [packed["tok_pad"], packed["pos_table"], packed["wqkv"],
               packed["wp"], packed["w1"], packed["w2"], packed["lvec"],
               packed["wlm_pad"], packed["fvec"]]
    kernel = functools.partial(gpt_fused_kernel, seq_len=seq_len,
                               chunk_b=chunk_b)
    return pl.pallas_call(
        kernel,
        out_shape=jax.ShapeDtypeStruct((BT, VOCAB_PAD), jnp.float32),
        grid=(batch_chunks,),
        in_specs=[pl.BlockSpec((R, 1), lambda i: (i, 0))]
                 + [_const_spec(w) for w in weights],
        out_specs=pl.BlockSpec((R, VOCAB_PAD), lambda i: (i, 0)),
        compiler_params=pltpu.CompilerParams(
            dimension_semantics=("parallel",)),
    )(idx_flat, *weights)


@functools.partial(jax.jit, static_argnames=("batch_chunks",))
def gpt_forward(idx, packed, batch_chunks=1):
    """idx: (B, T) int32 token ids. Returns logits (B, T, VOCAB_SIZE)."""
    B, T = idx.shape
    idx_flat = idx.reshape(B * T, 1).astype(jnp.int32)
    logits_pad = run_gpt_fused(idx_flat, packed, seq_len=T,
                               batch_chunks=batch_chunks)
    # Only remaining out-of-kernel op: drop the zero-padded vocab columns.
    return logits_pad.reshape(B, T, VOCAB_PAD)[..., :VOCAB_SIZE]


# ----------------------- parameter init + packing -----------------------------
def init_params(key):
    def normal(key, shape):
        return 0.02 * jax.random.normal(key, shape, dtype=jnp.float32)

    keys = iter(jax.random.split(key, 64))
    params = {
        "tok_table": normal(next(keys), (VOCAB_SIZE, N_EMBD)),
        "pos_table": normal(next(keys), (BLOCK_SIZE, N_EMBD)),
        "lnf_g": jnp.ones((1, N_EMBD), jnp.float32),
        "lnf_b": jnp.zeros((1, N_EMBD), jnp.float32),
        "wlm": normal(next(keys), (N_EMBD, VOCAB_SIZE)),
        "blm": jnp.zeros((1, VOCAB_SIZE), jnp.float32),
        "blocks": [],
    }
    for _ in range(N_LAYER):
        layer = {
            "ln1_g": jnp.ones((1, N_EMBD), jnp.float32),
            "ln1_b": jnp.zeros((1, N_EMBD), jnp.float32),
            "wq": normal(next(keys), (N_HEAD, N_EMBD, HEAD_SIZE)),
            "wk": normal(next(keys), (N_HEAD, N_EMBD, HEAD_SIZE)),
            "wv": normal(next(keys), (N_HEAD, N_EMBD, HEAD_SIZE)),
            "wp": normal(next(keys), (N_EMBD, N_EMBD)),
            "bp": jnp.zeros((1, N_EMBD), jnp.float32),
            "ln2_g": jnp.ones((1, N_EMBD), jnp.float32),
            "ln2_b": jnp.zeros((1, N_EMBD), jnp.float32),
            "w1": normal(next(keys), (N_EMBD, HIDDEN)),
            "b1": jnp.zeros((1, HIDDEN), jnp.float32),
            "w2": normal(next(keys), (HIDDEN, N_EMBD)),
            "b2": jnp.zeros((1, N_EMBD), jnp.float32),
        }
        params["blocks"].append(layer)
    return params


def pack_params(p):
    """Pack logical params into a few contiguous f32 slabs for the kernel."""
    def row_pad(v, width):
        return jnp.pad(v, ((0, 0), (0, width - v.shape[-1])))

    scale = jnp.float32(HEAD_SIZE) ** -0.5       # folded into wq at pack time
    wqkv, wp, w1, w2, lvec = [], [], [], [], []
    for layer in p["blocks"]:
        wq = jnp.concatenate([layer["wq"][h] * scale for h in range(N_HEAD)],
                             axis=-1)
        wk = jnp.concatenate([layer["wk"][h] for h in range(N_HEAD)], axis=-1)
        wv = jnp.concatenate([layer["wv"][h] for h in range(N_HEAD)], axis=-1)
        wqkv.append(jnp.concatenate([wq, wk, wv], axis=-1))     # (C, 3C)
        wp.append(layer["wp"])
        w1.append(layer["w1"])
        w2.append(layer["w2"])
        vec = jnp.concatenate([
            row_pad(layer["ln1_g"], HIDDEN), row_pad(layer["ln1_b"], HIDDEN),
            row_pad(layer["bp"], HIDDEN),
            row_pad(layer["ln2_g"], HIDDEN), row_pad(layer["ln2_b"], HIDDEN),
            layer["b1"],                                        # (1, HIDDEN)
            row_pad(layer["b2"], HIDDEN),
            jnp.zeros((1, HIDDEN), jnp.float32),
        ], axis=0)                                              # (8, HIDDEN)
        lvec.append(vec)

    # Token table row-padded to TOK_PAD for the in-kernel one-hot gather.
    tok_pad = jnp.pad(p["tok_table"], ((0, TOK_PAD - VOCAB_SIZE), (0, 0)))
    # lm_head: zero-pad vocab dim to VOCAB_PAD so the kernel output is lane-dense.
    wlm_pad = row_pad(p["wlm"], VOCAB_PAD)                      # (C, VOCAB_PAD)
    fvec = jnp.concatenate([
        row_pad(p["lnf_g"], VOCAB_PAD),
        row_pad(p["lnf_b"], VOCAB_PAD),
        row_pad(p["blm"], VOCAB_PAD),
        jnp.zeros((5, VOCAB_PAD), jnp.float32),
    ], axis=0)                                                  # (8, VOCAB_PAD)

    return {
        "tok_pad": tok_pad, "pos_table": p["pos_table"],
        "wqkv": jnp.stack(wqkv), "wp": jnp.stack(wp),
        "w1": jnp.stack(w1), "w2": jnp.stack(w2), "lvec": jnp.stack(lvec),
        "wlm_pad": wlm_pad, "fvec": fvec,
    }


# ------------------------------ pure-JAX reference ----------------------------
def _ref_layernorm(h, g, b):
    mu = jnp.mean(h, axis=-1, keepdims=True)
    var = jnp.mean((h - mu) ** 2, axis=-1, keepdims=True)
    return (h - mu) / jnp.sqrt(var + LN_EPS) * g + b


def reference_forward(idx, params):
    B, T = idx.shape
    x = jnp.take(params["tok_table"], idx, axis=0) + params["pos_table"][:T][None]
    causal = jnp.tril(jnp.ones((T, T), bool))
    for layer in params["blocks"]:
        h = _ref_layernorm(x, layer["ln1_g"], layer["ln1_b"])
        outs = []
        for hi in range(N_HEAD):
            q = h @ layer["wq"][hi]
            k = h @ layer["wk"][hi]
            v = h @ layer["wv"][hi]
            wei = (q @ jnp.swapaxes(k, -1, -2)) * HEAD_SIZE ** -0.5
            wei = jnp.where(causal, wei, -jnp.inf)
            wei = jax.nn.softmax(wei, axis=-1)
            outs.append(wei @ v)
        sa = jnp.concatenate(outs, axis=-1) @ layer["wp"] + layer["bp"]
        x = x + sa
        h2 = _ref_layernorm(x, layer["ln2_g"], layer["ln2_b"])
        ff = jnp.maximum(h2 @ layer["w1"] + layer["b1"], 0.0) @ layer["w2"] + layer["b2"]
        x = x + ff
    h = _ref_layernorm(x, params["lnf_g"], params["lnf_b"])
    return h @ params["wlm"] + params["blm"]


# ---------------------------------- main --------------------------------------
if __name__ == "__main__":
    key = jax.random.PRNGKey(0)
    pkey, ikey = jax.random.split(key)
    params = init_params(pkey)
    packed = pack_params(params)

    B, T = 2, BLOCK_SIZE          # small batch, full context length (32)
    idx = jax.random.randint(ikey, (B, T), 0, VOCAB_SIZE, dtype=jnp.int32)

    ref = reference_forward(idx, params)

    # batch_chunks=1: single fused program over the whole slab (v5e/v6e, 1 TC).
    logits = jax.block_until_ready(gpt_forward(idx, packed, batch_chunks=1))
    assert logits.shape == (B, T, VOCAB_SIZE)
    assert jnp.max(jnp.abs(logits - ref)) < 1e-4, "Pallas mismatch (batch_chunks=1)"

    # batch_chunks=2: one batch element per grid step (v7x, one per TensorCore).
    logits2 = jax.block_until_ready(gpt_forward(idx, packed, batch_chunks=2))
    assert jnp.max(jnp.abs(logits2 - ref)) < 1e-4, "Pallas mismatch (batch_chunks=2)"

    print("KERNEL_OK")
</pallas_src>

<mosaic_0001>
module attributes {stable_mosaic.version = 11 : i64} {
  func.func @gpt_fused_kernel(%arg0: i32, %arg1: memref<64x1xi32, #tpu.memory_space<vmem>>, %arg2: memref<128x32xf32, #tpu.memory_space<vmem>>, %arg3: memref<32x32xf32, #tpu.memory_space<vmem>>, %arg4: memref<2x32x96xf32, #tpu.memory_space<vmem>>, %arg5: memref<2x32x32xf32, #tpu.memory_space<vmem>>, %arg6: memref<2x32x128xf32, #tpu.memory_space<vmem>>, %arg7: memref<2x128x32xf32, #tpu.memory_space<vmem>>, %arg8: memref<2x8x128xf32, #tpu.memory_space<vmem>>, %arg9: memref<32x128xf32, #tpu.memory_space<vmem>>, %arg10: memref<8x128xf32, #tpu.memory_space<vmem>>, %arg11: memref<64x128xf32, #tpu.memory_space<vmem>>) attributes {dimension_semantics = [#tpu.dimension_semantics<parallel>], iteration_bounds = array<i64: 1>, scalar_prefetch = 0 : i64, scratch_operands = 0 : i64, tpu.core_type = #tpu.core_type<tc>, window_params = [{transform_indices = @transform_0, window_bounds = array<i64: 64, 1>}, {pipeline_mode = #tpu.pipeline_mode<synchronous>, transform_indices = @transform_1, window_bounds = array<i64: 128, 32>}, {pipeline_mode = #tpu.pipeline_mode<synchronous>, transform_indices = @transform_2, window_bounds = array<i64: 32, 32>}, {pipeline_mode = #tpu.pipeline_mode<synchronous>, transform_indices = @transform_3, window_bounds = array<i64: 2, 32, 96>}, {pipeline_mode = #tpu.pipeline_mode<synchronous>, transform_indices = @transform_4, window_bounds = array<i64: 2, 32, 32>}, {pipeline_mode = #tpu.pipeline_mode<synchronous>, transform_indices = @transform_5, window_bounds = array<i64: 2, 32, 128>}, {pipeline_mode = #tpu.pipeline_mode<synchronous>, transform_indices = @transform_6, window_bounds = array<i64: 2, 128, 32>}, {pipeline_mode = #tpu.pipeline_mode<synchronous>, transform_indices = @transform_7, window_bounds = array<i64: 2, 8, 128>}, {pipeline_mode = #tpu.pipeline_mode<synchronous>, transform_indices = @transform_8, window_bounds = array<i64: 32, 128>}, {pipeline_mode = #tpu.pipeline_mode<synchronous>, transform_indices = @transform_9, window_bounds = array<i64: 8, 128>}, {transform_indices = @transform_10, window_bounds = array<i64: 64, 128>}]} {
    %c0 = arith.constant 0 : index
    %c0_0 = arith.constant 0 : index
    %0 = vector.load %arg1[%c0, %c0_0] : memref<64x1xi32, #tpu.memory_space<vmem>>, vector<64x1xi32>
    %1 = tpu.iota {dimensions = array<i32: 1>} : vector<64x128xi32>
    %2 = vector.broadcast %0 : vector<64x1xi32> to vector<64x128xi32>
    %3 = arith.cmpi eq, %1, %2 : vector<64x128xi32>
    %4 = arith.extui %3 : vector<64x128xi1> to vector<64x128xi32>
    %5 = arith.sitofp %4 : vector<64x128xi32> to vector<64x128xf32>
    %c0_1 = arith.constant 0 : index
    %c0_2 = arith.constant 0 : index
    %6 = vector.load %arg2[%c0_1, %c0_2] : memref<128x32xf32, #tpu.memory_space<vmem>>, vector<128x32xf32>
    %cst = arith.constant dense<0.000000e+00> : vector<64x32xf32>
    %7 = tpu.matmul %5, %6, %cst {dimension_numbers = #tpu.dot_dimension_numbers<[1], [0], [0], [1], [0, 0, 1, 1], [], []>} : vector<64x128xf32>, vector<128x32xf32>, vector<64x32xf32> -> vector<64x32xf32>
    %c0_3 = arith.constant 0 : index
    %c0_4 = arith.constant 0 : index
    %8 = vector.load %arg3[%c0_3, %c0_4] : memref<32x32xf32, #tpu.memory_space<vmem>>, vector<32x32xf32>
    %9 = tpu.concatenate %8, %8 in 0 : vector<32x32xf32>, vector<32x32xf32> -> vector<64x32xf32>
    %10 = arith.addf %7, %9 : vector<64x32xf32>
    %11 = tpu.iota {dimensions = array<i32: 0>} : vector<32x32xi32>
    %12 = tpu.iota {dimensions = array<i32: 1>} : vector<32x32xi32>
    %13 = arith.cmpi sle, %12, %11 : vector<32x32xi32>
    %c0_5 = arith.constant 0 : index
    %c0_6 = arith.constant 0 : index
    %c0_7 = arith.constant 0 : index
    %14 = vector.load %arg8[%c0_5, %c0_6, %c0_7] : memref<2x8x128xf32, #tpu.memory_space<vmem>>, vector<1x1x32xf32>
    %15 = vector.shape_cast %14 : vector<1x1x32xf32> to vector<1x32xf32>
    %c0_8 = arith.constant 0 : index
    %c1 = arith.constant 1 : index
    %c0_9 = arith.constant 0 : index
    %16 = vector.load %arg8[%c0_8, %c1, %c0_9] : memref<2x8x128xf32, #tpu.memory_space<vmem>>, vector<1x1x32xf32>
    %17 = vector.shape_cast %16 : vector<1x1x32xf32> to vector<1x32xf32>
    %c0_10 = arith.constant 0 : index
    %c2 = arith.constant 2 : index
    %c0_11 = arith.constant 0 : index
    %18 = vector.load %arg8[%c0_10, %c2, %c0_11] : memref<2x8x128xf32, #tpu.memory_space<vmem>>, vector<1x1x32xf32>
    %19 = vector.shape_cast %18 : vector<1x1x32xf32> to vector<1x32xf32>
    %c0_12 = arith.constant 0 : index
    %c3 = arith.constant 3 : index
    %c0_13 = arith.constant 0 : index
    %20 = vector.load %arg8[%c0_12, %c3, %c0_13] : memref<2x8x128xf32, #tpu.memory_space<vmem>>, vector<1x1x32xf32>
    %21 = vector.shape_cast %20 : vector<1x1x32xf32> to vector<1x32xf32>
    %c0_14 = arith.constant 0 : index
    %c4 = arith.constant 4 : index
    %c0_15 = arith.constant 0 : index
    %22 = vector.load %arg8[%c0_14, %c4, %c0_15] : memref<2x8x128xf32, #tpu.memory_space<vmem>>, vector<1x1x32xf32>
    %23 = vector.shape_cast %22 : vector<1x1x32xf32> to vector<1x32xf32>
    %c0_16 = arith.constant 0 : index
    %c5 = arith.constant 5 : index
    %c0_17 = arith.constant 0 : index
    %24 = vector.load %arg8[%c0_16, %c5, %c0_17] : memref<2x8x128xf32, #tpu.memory_space<vmem>>, vector<1x1x128xf32>
    %25 = vector.shape_cast %24 : vector<1x1x128xf32> to vector<1x128xf32>
    %c0_18 = arith.constant 0 : index
    %c6 = arith.constant 6 : index
    %c0_19 = arith.constant 0 : index
    %26 = vector.load %arg8[%c0_18, %c6, %c0_19] : memref<2x8x128xf32, #tpu.memory_space<vmem>>, vector<1x1x32xf32>
    %27 = vector.shape_cast %26 : vector<1x1x32xf32> to vector<1x32xf32>
    %cst_20 = arith.constant dense<0.000000e+00> : vector<64xf32>
    %28 = vector.multi_reduction <add>, %10, %cst_20 [1] : vector<64x32xf32> to vector<64xf32>
    %29 = vector.shape_cast %28 : vector<64xf32> to vector<64x1xf32>
    %cst_21 = arith.constant 3.200000e+01 : f32
    %30 = vector.broadcast %cst_21 : f32 to vector<64x1xf32>
    %31 = arith.divf %29, %30 : vector<64x1xf32>
    %32 = vector.broadcast %31 : vector<64x1xf32> to vector<64x32xf32>
    %33 = arith.subf %10, %32 : vector<64x32xf32>
    %34 = arith.mulf %33, %33 : vector<64x32xf32>
    %cst_22 = arith.constant dense<0.000000e+00> : vector<64xf32>
    %35 = vector.multi_reduction <add>, %34, %cst_22 [1] : vector<64x32xf32> to vector<64xf32>
    %36 = vector.shape_cast %35 : vector<64xf32> to vector<64x1xf32>
    %cst_23 = arith.constant 3.200000e+01 : f32
    %37 = vector.broadcast %cst_23 : f32 to vector<64x1xf32>
    %38 = arith.divf %36, %37 : vector<64x1xf32>
    %39 = vector.broadcast %31 : vector<64x1xf32> to vector<64x32xf32>
    %40 = arith.subf %10, %39 : vector<64x32xf32>
    %cst_24 = arith.constant 9.99999974E-6 : f32
    %41 = vector.broadcast %cst_24 : f32 to vector<64x1xf32>
    %42 = arith.addf %38, %41 : vector<64x1xf32>
    %43 = math.rsqrt %42 : vector<64x1xf32>
    %44 = vector.broadcast %43 : vector<64x1xf32> to vector<64x32xf32>
    %45 = arith.mulf %40, %44 : vector<64x32xf32>
    %46 = vector.broadcast %15 : vector<1x32xf32> to vector<64x32xf32>
    %47 = arith.mulf %45, %46 : vector<64x32xf32>
    %48 = vector.broadcast %17 : vector<1x32xf32> to vector<64x32xf32>
    %49 = arith.addf %47, %48 : vector<64x32xf32>
    %c0_25 = arith.constant 0 : index
    %c0_26 = arith.constant 0 : index
    %c0_27 = arith.constant 0 : index
    %50 = vector.load %arg4[%c0_25, %c0_26, %c0_27] : memref<2x32x96xf32, #tpu.memory_space<vmem>>, vector<1x32x96xf32>
    %51 = vector.shape_cast %50 : vector<1x32x96xf32> to vector<32x96xf32>
    %cst_28 = arith.constant dense<0.000000e+00> : vector<64x96xf32>
    %52 = tpu.matmul %49, %51, %cst_28 {dimension_numbers = #tpu.dot_dimension_numbers<[1], [0], [0], [1], [0, 0, 1, 1], [], []>} : vector<64x32xf32>, vector<32x96xf32>, vector<64x96xf32> -> vector<64x96xf32>
    %cst_29 = arith.constant 0.000000e+00 : f32
    %53 = vector.broadcast %cst_29 : f32 to vector<32x32xf32>
    %54 = vector.extract_strided_slice %52 {offsets = [0, 0], sizes = [32, 16], strides = [1, 1]} : vector<64x96xf32> to vector<32x16xf32>
    %55 = vector.extract_strided_slice %52 {offsets = [0, 32], sizes = [32, 16], strides = [1, 1]} : vector<64x96xf32> to vector<32x16xf32>
    %56 = vector.extract_strided_slice %52 {offsets = [0, 64], sizes = [32, 16], strides = [1, 1]} : vector<64x96xf32> to vector<32x16xf32>
    %cst_30 = arith.constant dense<0.000000e+00> : vector<32x32xf32>
    %57 = tpu.matmul %54, %55, %cst_30 {dimension_numbers = #tpu.dot_dimension_numbers<[1], [1], [0], [0], [0, 0, 1, 0], [], []>} : vector<32x16xf32>, vector<32x16xf32>, vector<32x32xf32> -> vector<32x32xf32>
    %cst_31 = arith.constant -1.000000e+30 : f32
    %58 = vector.broadcast %cst_31 : f32 to vector<32x32xf32>
    %59 = arith.select %13, %57, %58 : vector<32x32xi1>, vector<32x32xf32>
    %cst_32 = arith.constant dense<0xFF800000> : vector<32xf32>
    %60 = vector.multi_reduction <maximumf>, %59, %cst_32 [1] : vector<32x32xf32> to vector<32xf32>
    %61 = vector.shape_cast %60 : vector<32xf32> to vector<32x1xf32>
    %62 = vector.broadcast %61 : vector<32x1xf32> to vector<32x32xf32>
    %63 = arith.subf %59, %62 : vector<32x32xf32>
    %64 = math.exp %63 : vector<32x32xf32>
    %cst_33 = arith.constant dense<0.000000e+00> : vector<32xf32>
    %65 = vector.multi_reduction <add>, %64, %cst_33 [1] : vector<32x32xf32> to vector<32xf32>
    %66 = vector.shape_cast %65 : vector<32xf32> to vector<32x1xf32>
    %cst_34 = arith.constant dense<0.000000e+00> : vector<32x16xf32>
    %67 = tpu.matmul %64, %56, %cst_34 {dimension_numbers = #tpu.dot_dimension_numbers<[1], [0], [0], [1], [0, 0, 1, 1], [], []>} : vector<32x32xf32>, vector<32x16xf32>, vector<32x16xf32> -> vector<32x16xf32>
    %68 = vector.broadcast %66 : vector<32x1xf32> to vector<32x16xf32>
    %69 = arith.divf %67, %68 : vector<32x16xf32>
    %c0_35 = arith.constant 0 : index
    %c0_36 = arith.constant 0 : index
    %c0_37 = arith.constant 0 : index
    %70 = vector.load %arg5[%c0_35, %c0_36, %c0_37] : memref<2x32x32xf32, #tpu.memory_space<vmem>>, vector<1x16x32xf32>
    %71 = vector.shape_cast %70 : vector<1x16x32xf32> to vector<16x32xf32>
    %cst_38 = arith.constant dense<0.000000e+00> : vector<32x32xf32>
    %72 = tpu.matmul %69, %71, %cst_38 {dimension_numbers = #tpu.dot_dimension_numbers<[1], [0], [0], [1], [0, 0, 1, 1], [], []>} : vector<32x16xf32>, vector<16x32xf32>, vector<32x32xf32> -> vector<32x32xf32>
    %73 = arith.addf %53, %72 : vector<32x32xf32>
    %74 = vector.extract_strided_slice %52 {offsets = [0, 16], sizes = [32, 16], strides = [1, 1]} : vector<64x96xf32> to vector<32x16xf32>
    %75 = vector.extract_strided_slice %52 {offsets = [0, 48], sizes = [32, 16], strides = [1, 1]} : vector<64x96xf32> to vector<32x16xf32>
    %76 = vector.extract_strided_slice %52 {offsets = [0, 80], sizes = [32, 16], strides = [1, 1]} : vector<64x96xf32> to vector<32x16xf32>
    %cst_39 = arith.constant dense<0.000000e+00> : vector<32x32xf32>
    %77 = tpu.matmul %74, %75, %cst_39 {dimension_numbers = #tpu.dot_dimension_numbers<[1], [1], [0], [0], [0, 0, 1, 0], [], []>} : vector<32x16xf32>, vector<32x16xf32>, vector<32x32xf32> -> vector<32x32xf32>
    %cst_40 = arith.constant -1.000000e+30 : f32
    %78 = vector.broadcast %cst_40 : f32 to vector<32x32xf32>
    %79 = arith.select %13, %77, %78 : vector<32x32xi1>, vector<32x32xf32>
    %cst_41 = arith.constant dense<0xFF800000> : vector<32xf32>
    %80 = vector.multi_reduction <maximumf>, %79, %cst_41 [1] : vector<32x32xf32> to vector<32xf32>
    %81 = vector.shape_cast %80 : vector<32xf32> to vector<32x1xf32>
    %82 = vector.broadcast %81 : vector<32x1xf32> to vector<32x32xf32>
    %83 = arith.subf %79, %82 : vector<32x32xf32>
    %84 = math.exp %83 : vector<32x32xf32>
    %cst_42 = arith.constant dense<0.000000e+00> : vector<32xf32>
    %85 = vector.multi_reduction <add>, %84, %cst_42 [1] : vector<32x32xf32> to vector<32xf32>
    %86 = vector.shape_cast %85 : vector<32xf32> to vector<32x1xf32>
    %cst_43 = arith.constant dense<0.000000e+00> : vector<32x16xf32>
    %87 = tpu.matmul %84, %76, %cst_43 {dimension_numbers = #tpu.dot_dimension_numbers<[1], [0], [0], [1], [0, 0, 1, 1], [], []>} : vector<32x32xf32>, vector<32x16xf32>, vector<32x16xf32> -> vector<32x16xf32>
    %88 = vector.broadcast %86 : vector<32x1xf32> to vector<32x16xf32>
    %89 = arith.divf %87, %88 : vector<32x16xf32>
    %c0_44 = arith.constant 0 : index
    %c16 = arith.constant 16 : index
    %c0_45 = arith.constant 0 : index
    %90 = vector.load %arg5[%c0_44, %c16, %c0_45] : memref<2x32x32xf32, #tpu.memory_space<vmem>>, vector<1x16x32xf32>
    %91 = vector.shape_cast %90 : vector<1x16x32xf32> to vector<16x32xf32>
    %cst_46 = arith.constant dense<0.000000e+00> : vector<32x32xf32>
    %92 = tpu.matmul %89, %91, %cst_46 {dimension_numbers = #tpu.dot_dimension_numbers<[1], [0], [0], [1], [0, 0, 1, 1], [], []>} : vector<32x16xf32>, vector<16x32xf32>, vector<32x32xf32> -> vector<32x32xf32>
    %93 = arith.addf %73, %92 : vector<32x32xf32>
    %cst_47 = arith.constant 0.000000e+00 : f32
    %94 = vector.broadcast %cst_47 : f32 to vector<32x32xf32>
    %95 = vector.extract_strided_slice %52 {offsets = [32, 0], sizes = [32, 16], strides = [1, 1]} : vector<64x96xf32> to vector<32x16xf32>
    %96 = vector.extract_strided_slice %52 {offsets = [32, 32], sizes = [32, 16], strides = [1, 1]} : vector<64x96xf32> to vector<32x16xf32>
    %97 = vector.extract_strided_slice %52 {offsets = [32, 64], sizes = [32, 16], strides = [1, 1]} : vector<64x96xf32> to vector<32x16xf32>
    %cst_48 = arith.constant dense<0.000000e+00> : vector<32x32xf32>
    %98 = tpu.matmul %95, %96, %cst_48 {dimension_numbers = #tpu.dot_dimension_numbers<[1], [1], [0], [0], [0, 0, 1, 0], [], []>} : vector<32x16xf32>, vector<32x16xf32>, vector<32x32xf32> -> vector<32x32xf32>
    %cst_49 = arith.constant -1.000000e+30 : f32
    %99 = vector.broadcast %cst_49 : f32 to vector<32x32xf32>
    %100 = arith.select %13, %98, %99 : vector<32x32xi1>, vector<32x32xf32>
    %cst_50 = arith.constant dense<0xFF800000> : vector<32xf32>
    %101 = vector.multi_reduction <maximumf>, %100, %cst_50 [1] : vector<32x32xf32> to vector<32xf32>
    %102 = vector.shape_cast %101 : vector<32xf32> to vector<32x1xf32>
    %103 = vector.broadcast %102 : vector<32x1xf32> to vector<32x32xf32>
    %104 = arith.subf %100, %103 : vector<32x32xf32>
    %105 = math.exp %104 : vector<32x32xf32>
    %cst_51 = arith.constant dense<0.000000e+00> : vector<32xf32>
    %106 = vector.multi_reduction <add>, %105, %cst_51 [1] : vector<32x32xf32> to vector<32xf32>
    %107 = vector.shape_cast %106 : vector<32xf32> to vector<32x1xf32>
    %cst_52 = arith.constant dense<0.000000e+00> : vector<32x16xf32>
    %108 = tpu.matmul %105, %97, %cst_52 {dimension_numbers = #tpu.dot_dimension_numbers<[1], [0], [0], [1], [0, 0, 1, 1], [], []>} : vector<32x32xf32>, vector<32x16xf32>, vector<32x16xf32> -> vector<32x16xf32>
    %109 = vector.broadcast %107 : vector<32x1xf32> to vector<32x16xf32>
    %110 = arith.divf %108, %109 : vector<32x16xf32>
    %c0_53 = arith.constant 0 : index
    %c0_54 = arith.constant 0 : index
    %c0_55 = arith.constant 0 : index
    %111 = vector.load %arg5[%c0_53, %c0_54, %c0_55] : memref<2x32x32xf32, #tpu.memory_space<vmem>>, vector<1x16x32xf32>
    %112 = vector.shape_cast %111 : vector<1x16x32xf32> to vector<16x32xf32>
    %cst_56 = arith.constant dense<0.000000e+00> : vector<32x32xf32>
    %113 = tpu.matmul %110, %112, %cst_56 {dimension_numbers = #tpu.dot_dimension_numbers<[1], [0], [0], [1], [0, 0, 1, 1], [], []>} : vector<32x16xf32>, vector<16x32xf32>, vector<32x32xf32> -> vector<32x32xf32>
    %114 = arith.addf %94, %113 : vector<32x32xf32>
    %115 = vector.extract_strided_slice %52 {offsets = [32, 16], sizes = [32, 16], strides = [1, 1]} : vector<64x96xf32> to vector<32x16xf32>
    %116 = vector.extract_strided_slice %52 {offsets = [32, 48], sizes = [32, 16], strides = [1, 1]} : vector<64x96xf32> to vector<32x16xf32>
    %117 = vector.extract_strided_slice %52 {offsets = [32, 80], sizes = [32, 16], strides = [1, 1]} : vector<64x96xf32> to vector<32x16xf32>
    %cst_57 = arith.constant dense<0.000000e+00> : vector<32x32xf32>
    %118 = tpu.matmul %115, %116, %cst_57 {dimension_numbers = #tpu.dot_dimension_numbers<[1], [1], [0], [0], [0, 0, 1, 0], [], []>} : vector<32x16xf32>, vector<32x16xf32>, vector<32x32xf32> -> vector<32x32xf32>
    %cst_58 = arith.constant -1.000000e+30 : f32
    %119 = vector.broadcast %cst_58 : f32 to vector<32x32xf32>
    %120 = arith.select %13, %118, %119 : vector<32x32xi1>, vector<32x32xf32>
    %cst_59 = arith.constant dense<0xFF800000> : vector<32xf32>
    %121 = vector.multi_reduction <maximumf>, %120, %cst_59 [1] : vector<32x32xf32> to vector<32xf32>
    %122 = vector.shape_cast %121 : vector<32xf32> to vector<32x1xf32>
    %123 = vector.broadcast %122 : vector<32x1xf32> to vector<32x32xf32>
    %124 = arith.subf %120, %123 : vector<32x32xf32>
    %125 = math.exp %124 : vector<32x32xf32>
    %cst_60 = arith.constant dense<0.000000e+00> : vector<32xf32>
    %126 = vector.multi_reduction <add>, %125, %cst_60 [1] : vector<32x32xf32> to vector<32xf32>
    %127 = vector.shape_cast %126 : vector<32xf32> to vector<32x1xf32>
    %cst_61 = arith.constant dense<0.000000e+00> : vector<32x16xf32>
    %128 = tpu.matmul %125, %117, %cst_61 {dimension_numbers = #tpu.dot_dimension_numbers<[1], [0], [0], [1], [0, 0, 1, 1], [], []>} : vector<32x32xf32>, vector<32x16xf32>, vector<32x16xf32> -> vector<32x16xf32>
    %129 = vector.broadcast %127 : vector<32x1xf32> to vector<32x16xf32>
    %130 = arith.divf %128, %129 : vector<32x16xf32>
    %c0_62 = arith.constant 0 : index
    %c16_63 = arith.constant 16 : index
    %c0_64 = arith.constant 0 : index
    %131 = vector.load %arg5[%c0_62, %c16_63, %c0_64] : memref<2x32x32xf32, #tpu.memory_space<vmem>>, vector<1x16x32xf32>
    %132 = vector.shape_cast %131 : vector<1x16x32xf32> to vector<16x32xf32>
    %cst_65 = arith.constant dense<0.000000e+00> : vector<32x32xf32>
    %133 = tpu.matmul %130, %132, %cst_65 {dimension_numbers = #tpu.dot_dimension_numbers<[1], [0], [0], [1], [0, 0, 1, 1], [], []>} : vector<32x16xf32>, vector<16x32xf32>, vector<32x32xf32> -> vector<32x32xf32>
    %134 = arith.addf %114, %133 : vector<32x32xf32>
    %135 = tpu.concatenate %93, %134 in 0 : vector<32x32xf32>, vector<32x32xf32> -> vector<64x32xf32>
    %136 = arith.addf %10, %135 : vector<64x32xf32>
    %137 = vector.broadcast %19 : vector<1x32xf32> to vector<64x32xf32>
    %138 = arith.addf %136, %137 : vector<64x32xf32>
    %cst_66 = arith.constant dense<0.000000e+00> : vector<64xf32>
    %139 = vector.multi_reduction <add>, %138, %cst_66 [1] : vector<64x32xf32> to vector<64xf32>
    %140 = vector.shape_cast %139 : vector<64xf32> to vector<64x1xf32>
    %cst_67 = arith.constant 3.200000e+01 : f32
    %141 = vector.broadcast %cst_67 : f32 to vector<64x1xf32>
    %142 = arith.divf %140, %141 : vector<64x1xf32>
    %143 = vector.broadcast %142 : vector<64x1xf32> to vector<64x32xf32>
    %144 = arith.subf %138, %143 : vector<64x32xf32>
    %145 = arith.mulf %144, %144 : vector<64x32xf32>
    %cst_68 = arith.constant dense<0.000000e+00> : vector<64xf32>
    %146 = vector.multi_reduction <add>, %145, %cst_68 [1] : vector<64x32xf32> to vector<64xf32>
    %147 = vector.shape_cast %146 : vector<64xf32> to vector<64x1xf32>
    %cst_69 = arith.constant 3.200000e+01 : f32
    %148 = vector.broadcast %cst_69 : f32 to vector<64x1xf32>
    %149 = arith.divf %147, %148 : vector<64x1xf32>
    %150 = vector.broadcast %142 : vector<64x1xf32> to vector<64x32xf32>
    %151 = arith.subf %138, %150 : vector<64x32xf32>
    %cst_70 = arith.constant 9.99999974E-6 : f32
    %152 = vector.broadcast %cst_70 : f32 to vector<64x1xf32>
    %153 = arith.addf %149, %152 : vector<64x1xf32>
    %154 = math.rsqrt %153 : vector<64x1xf32>
    %155 = vector.broadcast %154 : vector<64x1xf32> to vector<64x32xf32>
    %156 = arith.mulf %151, %155 : vector<64x32xf32>
    %157 = vector.broadcast %21 : vector<1x32xf32> to vector<64x32xf32>
    %158 = arith.mulf %156, %157 : vector<64x32xf32>
    %159 = vector.broadcast %23 : vector<1x32xf32> to vector<64x32xf32>
    %160 = arith.addf %158, %159 : vector<64x32xf32>
    %c0_71 = arith.constant 0 : index
    %c0_72 = arith.constant 0 : index
    %c0_73 = arith.constant 0 : index
    %161 = vector.load %arg6[%c0_71, %c0_72, %c0_73] : memref<2x32x128xf32, #tpu.memory_space<vmem>>, vector<1x32x128xf32>
    %162 = vector.shape_cast %161 : vector<1x32x128xf32> to vector<32x128xf32>
    %cst_74 = arith.constant dense<0.000000e+00> : vector<64x128xf32>
    %163 = tpu.matmul %160, %162, %cst_74 {dimension_numbers = #tpu.dot_dimension_numbers<[1], [0], [0], [1], [0, 0, 1, 1], [], []>} : vector<64x32xf32>, vector<32x128xf32>, vector<64x128xf32> -> vector<64x128xf32>
    %164 = vector.broadcast %25 : vector<1x128xf32> to vector<64x128xf32>
    %165 = arith.addf %163, %164 : vector<64x128xf32>
    %cst_75 = arith.constant 0.000000e+00 : f32
    %166 = vector.broadcast %cst_75 : f32 to vector<64x128xf32>
    %167 = arith.maximumf %165, %166 : vector<64x128xf32>
    %c0_76 = arith.constant 0 : index
    %c0_77 = arith.constant 0 : index
    %c0_78 = arith.constant 0 : index
    %168 = vector.load %arg7[%c0_76, %c0_77, %c0_78] : memref<2x128x32xf32, #tpu.memory_space<vmem>>, vector<1x128x32xf32>
    %169 = vector.shape_cast %168 : vector<1x128x32xf32> to vector<128x32xf32>
    %cst_79 = arith.constant dense<0.000000e+00> : vector<64x32xf32>
    %170 = tpu.matmul %167, %169, %cst_79 {dimension_numbers = #tpu.dot_dimension_numbers<[1], [0], [0], [1], [0, 0, 1, 1], [], []>} : vector<64x128xf32>, vector<128x32xf32>, vector<64x32xf32> -> vector<64x32xf32>
    %171 = vector.broadcast %27 : vector<1x32xf32> to vector<64x32xf32>
    %172 = arith.addf %170, %171 : vector<64x32xf32>
    %173 = arith.addf %138, %172 : vector<64x32xf32>
    %c1_80 = arith.constant 1 : index
    %c0_81 = arith.constant 0 : index
    %c0_82 = arith.constant 0 : index
    %174 = vector.load %arg8[%c1_80, %c0_81, %c0_82] : memref<2x8x128xf32, #tpu.memory_space<vmem>>, vector<1x1x32xf32>
    %175 = vector.shape_cast %174 : vector<1x1x32xf32> to vector<1x32xf32>
    %c1_83 = arith.constant 1 : index
    %c1_84 = arith.constant 1 : index
    %c0_85 = arith.constant 0 : index
    %176 = vector.load %arg8[%c1_83, %c1_84, %c0_85] : memref<2x8x128xf32, #tpu.memory_space<vmem>>, vector<1x1x32xf32>
    %177 = vector.shape_cast %176 : vector<1x1x32xf32> to vector<1x32xf32>
    %c1_86 = arith.constant 1 : index
    %c2_87 = arith.constant 2 : index
    %c0_88 = arith.constant 0 : index
    %178 = vector.load %arg8[%c1_86, %c2_87, %c0_88] : memref<2x8x128xf32, #tpu.memory_space<vmem>>, vector<1x1x32xf32>
    %179 = vector.shape_cast %178 : vector<1x1x32xf32> to vector<1x32xf32>
    %c1_89 = arith.constant 1 : index
    %c3_90 = arith.constant 3 : index
    %c0_91 = arith.constant 0 : index
    %180 = vector.load %arg8[%c1_89, %c3_90, %c0_91] : memref<2x8x128xf32, #tpu.memory_space<vmem>>, vector<1x1x32xf32>
    %181 = vector.shape_cast %180 : vector<1x1x32xf32> to vector<1x32xf32>
    %c1_92 = arith.constant 1 : index
    %c4_93 = arith.constant 4 : index
    %c0_94 = arith.constant 0 : index
    %182 = vector.load %arg8[%c1_92, %c4_93, %c0_94] : memref<2x8x128xf32, #tpu.memory_space<vmem>>, vector<1x1x32xf32>
    %183 = vector.shape_cast %182 : vector<1x1x32xf32> to vector<1x32xf32>
    %c1_95 = arith.constant 1 : index
    %c5_96 = arith.constant 5 : index
    %c0_97 = arith.constant 0 : index
    %184 = vector.load %arg8[%c1_95, %c5_96, %c0_97] : memref<2x8x128xf32, #tpu.memory_space<vmem>>, vector<1x1x128xf32>
    %185 = vector.shape_cast %184 : vector<1x1x128xf32> to vector<1x128xf32>
    %c1_98 = arith.constant 1 : index
    %c6_99 = arith.constant 6 : index
    %c0_100 = arith.constant 0 : index
    %186 = vector.load %arg8[%c1_98, %c6_99, %c0_100] : memref<2x8x128xf32, #tpu.memory_space<vmem>>, vector<1x1x32xf32>
    %187 = vector.shape_cast %186 : vector<1x1x32xf32> to vector<1x32xf32>
    %cst_101 = arith.constant dense<0.000000e+00> : vector<64xf32>
    %188 = vector.multi_reduction <add>, %173, %cst_101 [1] : vector<64x32xf32> to vector<64xf32>
    %189 = vector.shape_cast %188 : vector<64xf32> to vector<64x1xf32>
    %cst_102 = arith.constant 3.200000e+01 : f32
    %190 = vector.broadcast %cst_102 : f32 to vector<64x1xf32>
    %191 = arith.divf %189, %190 : vector<64x1xf32>
    %192 = vector.broadcast %191 : vector<64x1xf32> to vector<64x32xf32>
    %193 = arith.subf %173, %192 : vector<64x32xf32>
    %194 = arith.mulf %193, %193 : vector<64x32xf32>
    %cst_103 = arith.constant dense<0.000000e+00> : vector<64xf32>
    %195 = vector.multi_reduction <add>, %194, %cst_103 [1] : vector<64x32xf32> to vector<64xf32>
    %196 = vector.shape_cast %195 : vector<64xf32> to vector<64x1xf32>
    %cst_104 = arith.constant 3.200000e+01 : f32
    %197 = vector.broadcast %cst_104 : f32 to vector<64x1xf32>
    %198 = arith.divf %196, %197 : vector<64x1xf32>
    %199 = vector.broadcast %191 : vector<64x1xf32> to vector<64x32xf32>
    %200 = arith.subf %173, %199 : vector<64x32xf32>
    %cst_105 = arith.constant 9.99999974E-6 : f32
    %201 = vector.broadcast %cst_105 : f32 to vector<64x1xf32>
    %202 = arith.addf %198, %201 : vector<64x1xf32>
    %203 = math.rsqrt %202 : vector<64x1xf32>
    %204 = vector.broadcast %203 : vector<64x1xf32> to vector<64x32xf32>
    %205 = arith.mulf %200, %204 : vector<64x32xf32>
    %206 = vector.broadcast %175 : vector<1x32xf32> to vector<64x32xf32>
    %207 = arith.mulf %205, %206 : vector<64x32xf32>
    %208 = vector.broadcast %177 : vector<1x32xf32> to vector<64x32xf32>
    %209 = arith.addf %207, %208 : vector<64x32xf32>
    %c1_106 = arith.constant 1 : index
    %c0_107 = arith.constant 0 : index
    %c0_108 = arith.constant 0 : index
    %210 = vector.load %arg4[%c1_106, %c0_107, %c0_108] : memref<2x32x96xf32, #tpu.memory_space<vmem>>, vector<1x32x96xf32>
    %211 = vector.shape_cast %210 : vector<1x32x96xf32> to vector<32x96xf32>
    %cst_109 = arith.constant dense<0.000000e+00> : vector<64x96xf32>
    %212 = tpu.matmul %209, %211, %cst_109 {dimension_numbers = #tpu.dot_dimension_numbers<[1], [0], [0], [1], [0, 0, 1, 1], [], []>} : vector<64x32xf32>, vector<32x96xf32>, vector<64x96xf32> -> vector<64x96xf32>
    %cst_110 = arith.constant 0.000000e+00 : f32
    %213 = vector.broadcast %cst_110 : f32 to vector<32x32xf32>
    %214 = vector.extract_strided_slice %212 {offsets = [0, 0], sizes = [32, 16], strides = [1, 1]} : vector<64x96xf32> to vector<32x16xf32>
    %215 = vector.extract_strided_slice %212 {offsets = [0, 32], sizes = [32, 16], strides = [1, 1]} : vector<64x96xf32> to vector<32x16xf32>
    %216 = vector.extract_strided_slice %212 {offsets = [0, 64], sizes = [32, 16], strides = [1, 1]} : vector<64x96xf32> to vector<32x16xf32>
    %cst_111 = arith.constant dense<0.000000e+00> : vector<32x32xf32>
    %217 = tpu.matmul %214, %215, %cst_111 {dimension_numbers = #tpu.dot_dimension_numbers<[1], [1], [0], [0], [0, 0, 1, 0], [], []>} : vector<32x16xf32>, vector<32x16xf32>, vector<32x32xf32> -> vector<32x32xf32>
    %cst_112 = arith.constant -1.000000e+30 : f32
    %218 = vector.broadcast %cst_112 : f32 to vector<32x32xf32>
    %219 = arith.select %13, %217, %218 : vector<32x32xi1>, vector<32x32xf32>
    %cst_113 = arith.constant dense<0xFF800000> : vector<32xf32>
    %220 = vector.multi_reduction <maximumf>, %219, %cst_113 [1] : vector<32x32xf32> to vector<32xf32>
    %221 = vector.shape_cast %220 : vector<32xf32> to vector<32x1xf32>
    %222 = vector.broadcast %221 : vector<32x1xf32> to vector<32x32xf32>
    %223 = arith.subf %219, %222 : vector<32x32xf32>
    %224 = math.exp %223 : vector<32x32xf32>
    %cst_114 = arith.constant dense<0.000000e+00> : vector<32xf32>
    %225 = vector.multi_reduction <add>, %224, %cst_114 [1] : vector<32x32xf32> to vector<32xf32>
    %226 = vector.shape_cast %225 : vector<32xf32> to vector<32x1xf32>
    %cst_115 = arith.constant dense<0.000000e+00> : vector<32x16xf32>
    %227 = tpu.matmul %224, %216, %cst_115 {dimension_numbers = #tpu.dot_dimension_numbers<[1], [0], [0], [1], [0, 0, 1, 1], [], []>} : vector<32x32xf32>, vector<32x16xf32>, vector<32x16xf32> -> vector<32x16xf32>
    %228 = vector.broadcast %226 : vector<32x1xf32> to vector<32x16xf32>
    %229 = arith.divf %227, %228 : vector<32x16xf32>
    %c1_116 = arith.constant 1 : index
    %c0_117 = arith.constant 0 : index
    %c0_118 = arith.constant 0 : index
    %230 = vector.load %arg5[%c1_116, %c0_117, %c0_118] : memref<2x32x32xf32, #tpu.memory_space<vmem>>, vector<1x16x32xf32>
    %231 = vector.shape_cast %230 : vector<1x16x32xf32> to vector<16x32xf32>
    %cst_119 = arith.constant dense<0.000000e+00> : vector<32x32xf32>
    %232 = tpu.matmul %229, %231, %cst_119 {dimension_numbers = #tpu.dot_dimension_numbers<[1], [0], [0], [1], [0, 0, 1, 1], [], []>} : vector<32x16xf32>, vector<16x32xf32>, vector<32x32xf32> -> vector<32x32xf32>
    %233 = arith.addf %213, %232 : vector<32x32xf32>
    %234 = vector.extract_strided_slice %212 {offsets = [0, 16], sizes = [32, 16], strides = [1, 1]} : vector<64x96xf32> to vector<32x16xf32>
    %235 = vector.extract_strided_slice %212 {offsets = [0, 48], sizes = [32, 16], strides = [1, 1]} : vector<64x96xf32> to vector<32x16xf32>
    %236 = vector.extract_strided_slice %212 {offsets = [0, 80], sizes = [32, 16], strides = [1, 1]} : vector<64x96xf32> to vector<32x16xf32>
    %cst_120 = arith.constant dense<0.000000e+00> : vector<32x32xf32>
    %237 = tpu.matmul %234, %235, %cst_120 {dimension_numbers = #tpu.dot_dimension_numbers<[1], [1], [0], [0], [0, 0, 1, 0], [], []>} : vector<32x16xf32>, vector<32x16xf32>, vector<32x32xf32> -> vector<32x32xf32>
    %cst_121 = arith.constant -1.000000e+30 : f32
    %238 = vector.broadcast %cst_121 : f32 to vector<32x32xf32>
    %239 = arith.select %13, %237, %238 : vector<32x32xi1>, vector<32x32xf32>
    %cst_122 = arith.constant dense<0xFF800000> : vector<32xf32>
    %240 = vector.multi_reduction <maximumf>, %239, %cst_122 [1] : vector<32x32xf32> to vector<32xf32>
    %241 = vector.shape_cast %240 : vector<32xf32> to vector<32x1xf32>
    %242 = vector.broadcast %241 : vector<32x1xf32> to vector<32x32xf32>
    %243 = arith.subf %239, %242 : vector<32x32xf32>
    %244 = math.exp %243 : vector<32x32xf32>
    %cst_123 = arith.constant dense<0.000000e+00> : vector<32xf32>
    %245 = vector.multi_reduction <add>, %244, %cst_123 [1] : vector<32x32xf32> to vector<32xf32>
    %246 = vector.shape_cast %245 : vector<32xf32> to vector<32x1xf32>
    %cst_124 = arith.constant dense<0.000000e+00> : vector<32x16xf32>
    %247 = tpu.matmul %244, %236, %cst_124 {dimension_numbers = #tpu.dot_dimension_numbers<[1], [0], [0], [1], [0, 0, 1, 1], [], []>} : vector<32x32xf32>, vector<32x16xf32>, vector<32x16xf32> -> vector<32x16xf32>
    %248 = vector.broadcast %246 : vector<32x1xf32> to vector<32x16xf32>
    %249 = arith.divf %247, %248 : vector<32x16xf32>
    %c1_125 = arith.constant 1 : index
    %c16_126 = arith.constant 16 : index
    %c0_127 = arith.constant 0 : index
    %250 = vector.load %arg5[%c1_125, %c16_126, %c0_127] : memref<2x32x32xf32, #tpu.memory_space<vmem>>, vector<1x16x32xf32>
    %251 = vector.shape_cast %250 : vector<1x16x32xf32> to vector<16x32xf32>
    %cst_128 = arith.constant dense<0.000000e+00> : vector<32x32xf32>
    %252 = tpu.matmul %249, %251, %cst_128 {dimension_numbers = #tpu.dot_dimension_numbers<[1], [0], [0], [1], [0, 0, 1, 1], [], []>} : vector<32x16xf32>, vector<16x32xf32>, vector<32x32xf32> -> vector<32x32xf32>
    %253 = arith.addf %233, %252 : vector<32x32xf32>
    %cst_129 = arith.constant 0.000000e+00 : f32
    %254 = vector.broadcast %cst_129 : f32 to vector<32x32xf32>
    %255 = vector.extract_strided_slice %212 {offsets = [32, 0], sizes = [32, 16], strides = [1, 1]} : vector<64x96xf32> to vector<32x16xf32>
    %256 = vector.extract_strided_slice %212 {offsets = [32, 32], sizes = [32, 16], strides = [1, 1]} : vector<64x96xf32> to vector<32x16xf32>
    %257 = vector.extract_strided_slice %212 {offsets = [32, 64], sizes = [32, 16], strides = [1, 1]} : vector<64x96xf32> to vector<32x16xf32>
    %cst_130 = arith.constant dense<0.000000e+00> : vector<32x32xf32>
    %258 = tpu.matmul %255, %256, %cst_130 {dimension_numbers = #tpu.dot_dimension_numbers<[1], [1], [0], [0], [0, 0, 1, 0], [], []>} : vector<32x16xf32>, vector<32x16xf32>, vector<32x32xf32> -> vector<32x32xf32>
    %cst_131 = arith.constant -1.000000e+30 : f32
    %259 = vector.broadcast %cst_131 : f32 to vector<32x32xf32>
    %260 = arith.select %13, %258, %259 : vector<32x32xi1>, vector<32x32xf32>
    %cst_132 = arith.constant dense<0xFF800000> : vector<32xf32>
    %261 = vector.multi_reduction <maximumf>, %260, %cst_132 [1] : vector<32x32xf32> to vector<32xf32>
    %262 = vector.shape_cast %261 : vector<32xf32> to vector<32x1xf32>
    %263 = vector.broadcast %262 : vector<32x1xf32> to vector<32x32xf32>
    %264 = arith.subf %260, %263 : vector<32x32xf32>
    %265 = math.exp %264 : vector<32x32xf32>
    %cst_133 = arith.constant dense<0.000000e+00> : vector<32xf32>
    %266 = vector.multi_reduction <add>, %265, %cst_133 [1] : vector<32x32xf32> to vector<32xf32>
    %267 = vector.shape_cast %266 : vector<32xf32> to vector<32x1xf32>
    %cst_134 = arith.constant dense<0.000000e+00> : vector<32x16xf32>
    %268 = tpu.matmul %265, %257, %cst_134 {dimension_numbers = #tpu.dot_dimension_numbers<[1], [0], [0], [1], [0, 0, 1, 1], [], []>} : vector<32x32xf32>, vector<32x16xf32>, vector<32x16xf32> -> vector<32x16xf32>
    %269 = vector.broadcast %267 : vector<32x1xf32> to vector<32x16xf32>
    %270 = arith.divf %268, %269 : vector<32x16xf32>
    %c1_135 = arith.constant 1 : index
    %c0_136 = arith.constant 0 : index
    %c0_137 = arith.constant 0 : index
    %271 = vector.load %arg5[%c1_135, %c0_136, %c0_137] : memref<2x32x32xf32, #tpu.memory_space<vmem>>, vector<1x16x32xf32>
    %272 = vector.shape_cast %271 : vector<1x16x32xf32> to vector<16x32xf32>
    %cst_138 = arith.constant dense<0.000000e+00> : vector<32x32xf32>
    %273 = tpu.matmul %270, %272, %cst_138 {dimension_numbers = #tpu.dot_dimension_numbers<[1], [0], [0], [1], [0, 0, 1, 1], [], []>} : vector<32x16xf32>, vector<16x32xf32>, vector<32x32xf32> -> vector<32x32xf32>
    %274 = arith.addf %254, %273 : vector<32x32xf32>
    %275 = vector.extract_strided_slice %212 {offsets = [32, 16], sizes = [32, 16], strides = [1, 1]} : vector<64x96xf32> to vector<32x16xf32>
    %276 = vector.extract_strided_slice %212 {offsets = [32, 48], sizes = [32, 16], strides = [1, 1]} : vector<64x96xf32> to vector<32x16xf32>
    %277 = vector.extract_strided_slice %212 {offsets = [32, 80], sizes = [32, 16], strides = [1, 1]} : vector<64x96xf32> to vector<32x16xf32>
    %cst_139 = arith.constant dense<0.000000e+00> : vector<32x32xf32>
    %278 = tpu.matmul %275, %276, %cst_139 {dimension_numbers = #tpu.dot_dimension_numbers<[1], [1], [0], [0], [0, 0, 1, 0], [], []>} : vector<32x16xf32>, vector<32x16xf32>, vector<32x32xf32> -> vector<32x32xf32>
    %cst_140 = arith.constant -1.000000e+30 : f32
    %279 = vector.broadcast %cst_140 : f32 to vector<32x32xf32>
    %280 = arith.select %13, %278, %279 : vector<32x32xi1>, vector<32x32xf32>
    %cst_141 = arith.constant dense<0xFF800000> : vector<32xf32>
    %281 = vector.multi_reduction <maximumf>, %280, %cst_141 [1] : vector<32x32xf32> to vector<32xf32>
    %282 = vector.shape_cast %281 : vector<32xf32> to vector<32x1xf32>
    %283 = vector.broadcast %282 : vector<32x1xf32> to vector<32x32xf32>
    %284 = arith.subf %280, %283 : vector<32x32xf32>
    %285 = math.exp %284 : vector<32x32xf32>
    %cst_142 = arith.constant dense<0.000000e+00> : vector<32xf32>
    %286 = vector.multi_reduction <add>, %285, %cst_142 [1] : vector<32x32xf32> to vector<32xf32>
    %287 = vector.shape_cast %286 : vector<32xf32> to vector<32x1xf32>
    %cst_143 = arith.constant dense<0.000000e+00> : vector<32x16xf32>
    %288 = tpu.matmul %285, %277, %cst_143 {dimension_numbers = #tpu.dot_dimension_numbers<[1], [0], [0], [1], [0, 0, 1, 1], [], []>} : vector<32x32xf32>, vector<32x16xf32>, vector<32x16xf32> -> vector<32x16xf32>
    %289 = vector.broadcast %287 : vector<32x1xf32> to vector<32x16xf32>
    %290 = arith.divf %288, %289 : vector<32x16xf32>
    %c1_144 = arith.constant 1 : index
    %c16_145 = arith.constant 16 : index
    %c0_146 = arith.constant 0 : index
    %291 = vector.load %arg5[%c1_144, %c16_145, %c0_146] : memref<2x32x32xf32, #tpu.memory_space<vmem>>, vector<1x16x32xf32>
    %292 = vector.shape_cast %291 : vector<1x16x32xf32> to vector<16x32xf32>
    %cst_147 = arith.constant dense<0.000000e+00> : vector<32x32xf32>
    %293 = tpu.matmul %290, %292, %cst_147 {dimension_numbers = #tpu.dot_dimension_numbers<[1], [0], [0], [1], [0, 0, 1, 1], [], []>} : vector<32x16xf32>, vector<16x32xf32>, vector<32x32xf32> -> vector<32x32xf32>
    %294 = arith.addf %274, %293 : vector<32x32xf32>
    %295 = tpu.concatenate %253, %294 in 0 : vector<32x32xf32>, vector<32x32xf32> -> vector<64x32xf32>
    %296 = arith.addf %173, %295 : vector<64x32xf32>
    %297 = vector.broadcast %179 : vector<1x32xf32> to vector<64x32xf32>
    %298 = arith.addf %296, %297 : vector<64x32xf32>
    %cst_148 = arith.constant dense<0.000000e+00> : vector<64xf32>
    %299 = vector.multi_reduction <add>, %298, %cst_148 [1] : vector<64x32xf32> to vector<64xf32>
    %300 = vector.shape_cast %299 : vector<64xf32> to vector<64x1xf32>
    %cst_149 = arith.constant 3.200000e+01 : f32
    %301 = vector.broadcast %cst_149 : f32 to vector<64x1xf32>
    %302 = arith.divf %300, %301 : vector<64x1xf32>
    %303 = vector.broadcast %302 : vector<64x1xf32> to vector<64x32xf32>
    %304 = arith.subf %298, %303 : vector<64x32xf32>
    %305 = arith.mulf %304, %304 : vector<64x32xf32>
    %cst_150 = arith.constant dense<0.000000e+00> : vector<64xf32>
    %306 = vector.multi_reduction <add>, %305, %cst_150 [1] : vector<64x32xf32> to vector<64xf32>
    %307 = vector.shape_cast %306 : vector<64xf32> to vector<64x1xf32>
    %cst_151 = arith.constant 3.200000e+01 : f32
    %308 = vector.broadcast %cst_151 : f32 to vector<64x1xf32>
    %309 = arith.divf %307, %308 : vector<64x1xf32>
    %310 = vector.broadcast %302 : vector<64x1xf32> to vector<64x32xf32>
    %311 = arith.subf %298, %310 : vector<64x32xf32>
    %cst_152 = arith.constant 9.99999974E-6 : f32
    %312 = vector.broadcast %cst_152 : f32 to vector<64x1xf32>
    %313 = arith.addf %309, %312 : vector<64x1xf32>
    %314 = math.rsqrt %313 : vector<64x1xf32>
    %315 = vector.broadcast %314 : vector<64x1xf32> to vector<64x32xf32>
    %316 = arith.mulf %311, %315 : vector<64x32xf32>
    %317 = vector.broadcast %181 : vector<1x32xf32> to vector<64x32xf32>
    %318 = arith.mulf %316, %317 : vector<64x32xf32>
    %319 = vector.broadcast %183 : vector<1x32xf32> to vector<64x32xf32>
    %320 = arith.addf %318, %319 : vector<64x32xf32>
    %c1_153 = arith.constant 1 : index
    %c0_154 = arith.constant 0 : index
    %c0_155 = arith.constant 0 : index
    %321 = vector.load %arg6[%c1_153, %c0_154, %c0_155] : memref<2x32x128xf32, #tpu.memory_space<vmem>>, vector<1x32x128xf32>
    %322 = vector.shape_cast %321 : vector<1x32x128xf32> to vector<32x128xf32>
    %cst_156 = arith.constant dense<0.000000e+00> : vector<64x128xf32>
    %323 = tpu.matmul %320, %322, %cst_156 {dimension_numbers = #tpu.dot_dimension_numbers<[1], [0], [0], [1], [0, 0, 1, 1], [], []>} : vector<64x32xf32>, vector<32x128xf32>, vector<64x128xf32> -> vector<64x128xf32>
    %324 = vector.broadcast %185 : vector<1x128xf32> to vector<64x128xf32>
    %325 = arith.addf %323, %324 : vector<64x128xf32>
    %cst_157 = arith.constant 0.000000e+00 : f32
    %326 = vector.broadcast %cst_157 : f32 to vector<64x128xf32>
    %327 = arith.maximumf %325, %326 : vector<64x128xf32>
    %c1_158 = arith.constant 1 : index
    %c0_159 = arith.constant 0 : index
    %c0_160 = arith.constant 0 : index
    %328 = vector.load %arg7[%c1_158, %c0_159, %c0_160] : memref<2x128x32xf32, #tpu.memory_space<vmem>>, vector<1x128x32xf32>
    %329 = vector.shape_cast %328 : vector<1x128x32xf32> to vector<128x32xf32>
    %cst_161 = arith.constant dense<0.000000e+00> : vector<64x32xf32>
    %330 = tpu.matmul %327, %329, %cst_161 {dimension_numbers = #tpu.dot_dimension_numbers<[1], [0], [0], [1], [0, 0, 1, 1], [], []>} : vector<64x128xf32>, vector<128x32xf32>, vector<64x32xf32> -> vector<64x32xf32>
    %331 = vector.broadcast %187 : vector<1x32xf32> to vector<64x32xf32>
    %332 = arith.addf %330, %331 : vector<64x32xf32>
    %333 = arith.addf %298, %332 : vector<64x32xf32>
    %c0_162 = arith.constant 0 : index
    %c0_163 = arith.constant 0 : index
    %334 = vector.load %arg10[%c0_162, %c0_163] : memref<8x128xf32, #tpu.memory_space<vmem>>, vector<1x32xf32>
    %c1_164 = arith.constant 1 : index
    %c0_165 = arith.constant 0 : index
    %335 = vector.load %arg10[%c1_164, %c0_165] : memref<8x128xf32, #tpu.memory_space<vmem>>, vector<1x32xf32>
    %c2_166 = arith.constant 2 : index
    %c0_167 = arith.constant 0 : index
    %336 = vector.load %arg10[%c2_166, %c0_167] : memref<8x128xf32, #tpu.memory_space<vmem>>, vector<1x128xf32>
    %cst_168 = arith.constant dense<0.000000e+00> : vector<64xf32>
    %337 = vector.multi_reduction <add>, %333, %cst_168 [1] : vector<64x32xf32> to vector<64xf32>
    %338 = vector.shape_cast %337 : vector<64xf32> to vector<64x1xf32>
    %cst_169 = arith.constant 3.200000e+01 : f32
    %339 = vector.broadcast %cst_169 : f32 to vector<64x1xf32>
    %340 = arith.divf %338, %339 : vector<64x1xf32>
    %341 = vector.broadcast %340 : vector<64x1xf32> to vector<64x32xf32>
    %342 = arith.subf %333, %341 : vector<64x32xf32>
    %343 = arith.mulf %342, %342 : vector<64x32xf32>
    %cst_170 = arith.constant dense<0.000000e+00> : vector<64xf32>
    %344 = vector.multi_reduction <add>, %343, %cst_170 [1] : vector<64x32xf32> to vector<64xf32>
    %345 = vector.shape_cast %344 : vector<64xf32> to vector<64x1xf32>
    %cst_171 = arith.constant 3.200000e+01 : f32
    %346 = vector.broadcast %cst_171 : f32 to vector<64x1xf32>
    %347 = arith.divf %345, %346 : vector<64x1xf32>
    %348 = vector.broadcast %340 : vector<64x1xf32> to vector<64x32xf32>
    %349 = arith.subf %333, %348 : vector<64x32xf32>
    %cst_172 = arith.constant 9.99999974E-6 : f32
    %350 = vector.broadcast %cst_172 : f32 to vector<64x1xf32>
    %351 = arith.addf %347, %350 : vector<64x1xf32>
    %352 = math.rsqrt %351 : vector<64x1xf32>
    %353 = vector.broadcast %352 : vector<64x1xf32> to vector<64x32xf32>
    %354 = arith.mulf %349, %353 : vector<64x32xf32>
    %355 = vector.broadcast %334 : vector<1x32xf32> to vector<64x32xf32>
    %356 = arith.mulf %354, %355 : vector<64x32xf32>
    %357 = vector.broadcast %335 : vector<1x32xf32> to vector<64x32xf32>
    %358 = arith.addf %356, %357 : vector<64x32xf32>
    %c0_173 = arith.constant 0 : index
    %c0_174 = arith.constant 0 : index
    %359 = vector.load %arg9[%c0_173, %c0_174] : memref<32x128xf32, #tpu.memory_space<vmem>>, vector<32x128xf32>
    %cst_175 = arith.constant dense<0.000000e+00> : vector<64x128xf32>
    %360 = tpu.matmul %358, %359, %cst_175 {dimension_numbers = #tpu.dot_dimension_numbers<[1], [0], [0], [1], [0, 0, 1, 1], [], []>} : vector<64x32xf32>, vector<32x128xf32>, vector<64x128xf32> -> vector<64x128xf32>
    %361 = vector.broadcast %336 : vector<1x128xf32> to vector<64x128xf32>
    %362 = arith.addf %360, %361 : vector<64x128xf32>
    %c0_176 = arith.constant 0 : index
    %c0_177 = arith.constant 0 : index
    %363 = vector.load %arg11[%c0_176, %c0_177] : memref<64x128xf32, #tpu.memory_space<vmem>>, vector<64x128xf32>
    tpu.vector_store %arg11[%c0_176, %c0_177], %362 {strides = array<i32>} : memref<64x128xf32, #tpu.memory_space<vmem>>, vector<64x128xf32>,
    return
  }
  func.func @transform_0(%arg0: i32) -> (i32, i32) {
    %c0_i32 = arith.constant 0 : i32
    %c0_i32_0 = arith.constant 0 : i32
    return %arg0, %c0_i32 : i32, i32
  }
  func.func @transform_1(%arg0: i32) -> (i32, i32) {
    %c0_i32 = arith.constant 0 : i32
    %c0_i32_0 = arith.constant 0 : i32
    %c0_i32_1 = arith.constant 0 : i32
    return %c0_i32, %c0_i32_0 : i32, i32
  }
  func.func @transform_2(%arg0: i32) -> (i32, i32) {
    %c0_i32 = arith.constant 0 : i32
    %c0_i32_0 = arith.constant 0 : i32
    %c0_i32_1 = arith.constant 0 : i32
    return %c0_i32, %c0_i32_0 : i32, i32
  }
  func.func @transform_3(%arg0: i32) -> (i32, i32, i32) {
    %c0_i32 = arith.constant 0 : i32
    %c0_i32_0 = arith.constant 0 : i32
    %c0_i32_1 = arith.constant 0 : i32
    %c0_i32_2 = arith.constant 0 : i32
    return %c0_i32, %c0_i32_0, %c0_i32_1 : i32, i32, i32
  }
  func.func @transform_4(%arg0: i32) -> (i32, i32, i32) {
    %c0_i32 = arith.constant 0 : i32
    %c0_i32_0 = arith.constant 0 : i32
    %c0_i32_1 = arith.constant 0 : i32
    %c0_i32_2 = arith.constant 0 : i32
    return %c0_i32, %c0_i32_0, %c0_i32_1 : i32, i32, i32
  }
  func.func @transform_5(%arg0: i32) -> (i32, i32, i32) {
    %c0_i32 = arith.constant 0 : i32
    %c0_i32_0 = arith.constant 0 : i32
    %c0_i32_1 = arith.constant 0 : i32
    %c0_i32_2 = arith.constant 0 : i32
    return %c0_i32, %c0_i32_0, %c0_i32_1 : i32, i32, i32
  }
  func.func @transform_6(%arg0: i32) -> (i32, i32, i32) {
    %c0_i32 = arith.constant 0 : i32
    %c0_i32_0 = arith.constant 0 : i32
    %c0_i32_1 = arith.constant 0 : i32
    %c0_i32_2 = arith.constant 0 : i32
    return %c0_i32, %c0_i32_0, %c0_i32_1 : i32, i32, i32
  }
  func.func @transform_7(%arg0: i32) -> (i32, i32, i32) {
    %c0_i32 = arith.constant 0 : i32
    %c0_i32_0 = arith.constant 0 : i32
    %c0_i32_1 = arith.constant 0 : i32
    %c0_i32_2 = arith.constant 0 : i32
    return %c0_i32, %c0_i32_0, %c0_i32_1 : i32, i32, i32
  }
  func.func @transform_8(%arg0: i32) -> (i32, i32) {
    %c0_i32 = arith.constant 0 : i32
    %c0_i32_0 = arith.constant 0 : i32
    %c0_i32_1 = arith.constant 0 : i32
    return %c0_i32, %c0_i32_0 : i32, i32
  }
  func.func @transform_9(%arg0: i32) -> (i32, i32) {
    %c0_i32 = arith.constant 0 : i32
    %c0_i32_0 = arith.constant 0 : i32
    %c0_i32_1 = arith.constant 0 : i32
    return %c0_i32, %c0_i32_0 : i32, i32
  }
  func.func @transform_10(%arg0: i32) -> (i32, i32) {
    %c0_i32 = arith.constant 0 : i32
    %c0_i32_0 = arith.constant 0 : i32
    return %arg0, %c0_i32 : i32, i32
  }
}

</mosaic_0001>

<llo_original>
// kernel: gpt_forward.1
$region0: #{gpt_forward.1}
  #allocation0 [shape = 'u32[]', space=smem, size = 0x4, offset = 0x4, fixed_abs, tag = 'smem constant byte address 0x4 - core index']
  #allocation1 [shape = 'u32[144,128]{1,0:T(1,128)}', space=vmem, size = 0x12000, scoped, tag = 'internal scratch']
  %s0 = inlined_call_operand.vmem [shape: s32[64,1], index: 0, kind: input, shape index: {}]
  %s1 = inlined_call_operand.vmem [shape: f32[128,32], index: 1, kind: input, shape index: {}]
  %s2 = inlined_call_operand.vmem [shape: f32[32,32], index: 2, kind: input, shape index: {}]
  %s3 = inlined_call_operand.vmem [shape: f32[2,32,96], index: 3, kind: input, shape index: {}]
  %s4 = inlined_call_operand.vmem [shape: f32[2,32,32], index: 4, kind: input, shape index: {}]
  %s5 = inlined_call_operand.vmem [shape: f32[2,32,128], index: 5, kind: input, shape index: {}]
  %s6 = inlined_call_operand.vmem [shape: f32[2,128,32], index: 6, kind: input, shape index: {}]
  %s7 = inlined_call_operand.vmem [shape: f32[2,8,128], index: 7, kind: input, shape index: {}]
  %s8 = inlined_call_operand.vmem [shape: f32[32,128], index: 8, kind: input, shape index: {}]
  %s9 = inlined_call_operand.vmem [shape: f32[8,128], index: 9, kind: input, shape index: {}]
  %s10 = inlined_call_operand.hbm [shape: f32[64,128], index: 10, kind: output, shape index: {}]
  %s11 = sld [smem:[#allocation0]]
  $region50: #{gpt_forward.1} parent=0
    _
  %s13 = ssub.s32 1, %s11
  %s14 = scalar_select 0, %s13, %s11
  $region1: #{gpt_forward.1} parent=0
    #allocation2 [shape = 'u8[32768]{0}', space=vmem, size = 0x8000, scoped, tag = 'output window, operand 0, single buffered']
    #allocation3 [shape = 's32[1]{0}', space=sflag, size = 0x4, scoped, tag = 'scoped memory for gpt_forward.1']
    %15 = vsyncpa [#allocation3], 0
    // Predicated region
    $region2: #{gpt_forward.1} parent=1 // pred_check
      _
    $region3: #{gpt_forward.1} parent=1 // pred_check_branch
      %17 = sbr.rel (0) target = $region5
    $region4: #{gpt_forward.1} parent=1 // pred_region
      _
    $region5: #{gpt_forward.1} parent=1 // pred_fallthru
      _
    // Predicated region
    $region6: #{gpt_forward.1} parent=1 // pred_check
      _
    $region7: #{gpt_forward.1} parent=1 // pred_check_branch
      %19 = sbr.rel (0) target = $region9
    $region8: #{gpt_forward.1} parent=1 // pred_region
      _
    $region9: #{gpt_forward.1} parent=1 // pred_fallthru
      _
    // Predicated region
    $region10: #{gpt_forward.1} parent=1 // pred_check
      _
    $region11: #{gpt_forward.1} parent=1 // pred_check_branch
      %21 = sbr.rel (0) target = $region13
    $region12: #{gpt_forward.1} parent=1 // pred_region
      _
    $region13: #{gpt_forward.1} parent=1 // pred_fallthru
      _
    // Predicated region
    $region14: #{gpt_forward.1} parent=1 // pred_check
      _
    $region15: #{gpt_forward.1} parent=1 // pred_check_branch
      %23 = sbr.rel (0) target = $region17
    $region16: #{gpt_forward.1} parent=1 // pred_region
      _
    $region17: #{gpt_forward.1} parent=1 // pred_fallthru
      _
    // Predicated region
    $region18: #{gpt_forward.1} parent=1 // pred_check
      _
    $region19: #{gpt_forward.1} parent=1 // pred_check_branch
      %25 = sbr.rel (0) target = $region21
    $region20: #{gpt_forward.1} parent=1 // pred_region
      _
    $region21: #{gpt_forward.1} parent=1 // pred_fallthru
      _
    // Predicated region
    $region22: #{gpt_forward.1} parent=1 // pred_check
      _
    $region23: #{gpt_forward.1} parent=1 // pred_check_branch
      %27 = sbr.rel (0) target = $region25
    $region24: #{gpt_forward.1} parent=1 // pred_region
      _
    $region25: #{gpt_forward.1} parent=1 // pred_fallthru
      _
    // Predicated region
    $region26: #{gpt_forward.1} parent=1 // pred_check
      _
    $region27: #{gpt_forward.1} parent=1 // pred_check_branch
      %29 = sbr.rel (0) target = $region29
    $region28: #{gpt_forward.1} parent=1 // pred_region
      _
    $region29: #{gpt_forward.1} parent=1 // pred_fallthru
      _
    // Predicated region
    $region30: #{gpt_forward.1} parent=1 // pred_check
      _
    $region31: #{gpt_forward.1} parent=1 // pred_check_branch
      %31 = sbr.rel (0) target = $region33
    $region32: #{gpt_forward.1} parent=1 // pred_region
      _
    $region33: #{gpt_forward.1} parent=1 // pred_fallthru
      _
    // Predicated region
    $region34: #{gpt_forward.1} parent=1 // pred_check
      _
    $region35: #{gpt_forward.1} parent=1 // pred_check_branch
      %33 = sbr.rel (0) target = $region37
    $region36: #{gpt_forward.1} parent=1 // pred_region
      _
    $region37: #{gpt_forward.1} parent=1 // pred_fallthru
      _
    // Predicated region
    $region38: #{gpt_forward.1} parent=1 // pred_check
      _
    $region39: #{gpt_forward.1} parent=1 // pred_check_branch
      %35 = sbr.rel (0) target = $region41
    $region40: #{gpt_forward.1} parent=1 // pred_region
      _
    $region41: #{gpt_forward.1} parent=1 // pred_fallthru
      _
    %v36 = vld [vmem:[%s0] sm:$0xff]
    %v37 = vld [vmem:[%s0 + $0x8] sm:$0xff]
    %v38 = vld [vmem:[%s0 + $0x10] sm:$0xff]
    %v39 = vld [vmem:[%s0 + $0x18] sm:$0xff]
    %v40 = vld [vmem:[%s0 + $0x20] sm:$0xff]
    %v41 = vld [vmem:[%s0 + $0x28] sm:$0xff]
    %v42 = vld [vmem:[%s0 + $0x30] sm:$0xff]
    %v43 = vld [vmem:[%s0 + $0x38] sm:$0xff]
    %v44 = vlaneseq
    %v45 = vand.u32 %v44, 127
    %46 = vset.pattern.permute.xlu0 0
    %47 = vperm.xlu0 %46, %v36
    %v48 = vpop.permute.xlu0 %47
    %49 = vset.pattern.permute.xlu0 0
    %50 = vperm.xlu0 %49, %v37
    %v51 = vpop.permute.xlu0 %50
    %52 = vset.pattern.permute.xlu0 0
    %53 = vperm.xlu0 %52, %v38
    %v54 = vpop.permute.xlu0 %53
    %55 = vset.pattern.permute.xlu0 0
    %56 = vperm.xlu0 %55, %v39
    %v57 = vpop.permute.xlu0 %56
    %58 = vset.pattern.permute.xlu0 0
    %59 = vperm.xlu0 %58, %v40
    %v60 = vpop.permute.xlu0 %59
    %61 = vset.pattern.permute.xlu0 0
    %62 = vperm.xlu0 %61, %v41
    %v63 = vpop.permute.xlu0 %62
    %64 = vset.pattern.permute.xlu0 0
    %65 = vperm.xlu0 %64, %v42
    %v66 = vpop.permute.xlu0 %65
    %67 = vset.pattern.permute.xlu0 0
    %68 = vperm.xlu0 %67, %v43
    %v69 = vpop.permute.xlu0 %68
    %vm70 = vcmp.eq.s32.totalorder %v45, %v48
    %vm71 = vcmp.eq.s32.totalorder %v45, %v51
    %vm72 = vcmp.eq.s32.totalorder %v45, %v54
    %vm73 = vcmp.eq.s32.totalorder %v45, %v57
    %vm74 = vcmp.eq.s32.totalorder %v45, %v60
    %vm75 = vcmp.eq.s32.totalorder %v45, %v63
    %vm76 = vcmp.eq.s32.totalorder %v45, %v66
    %vm77 = vcmp.eq.s32.totalorder %v45, %v69
    %v78 = vsel %vm70, 1, 0
    %v79 = vsel %vm71, 1, 0
    %v80 = vsel %vm72, 1, 0
    %v81 = vsel %vm73, 1, 0
    %v82 = vsel %vm74, 1, 0
    %v83 = vsel %vm75, 1, 0
    %v84 = vsel %vm76, 1, 0
    %v85 = vsel %vm77, 1, 0
    %v86 = vcvt.s32.f32 %v78
    %v87 = vcvt.s32.f32 %v79
    %v88 = vcvt.s32.f32 %v80
    %v89 = vcvt.s32.f32 %v81
    %v90 = vcvt.s32.f32 %v82
    %v91 = vcvt.s32.f32 %v83
    %v92 = vcvt.s32.f32 %v84
    %v93 = vcvt.s32.f32 %v85
    %v94 = vld [vmem:[%s1] sm:$0xff]
    %v95 = vld [vmem:[%s1 + $0x8] sm:$0xff]
    %v96 = vld [vmem:[%s1 + $0x10] sm:$0xff]
    %v97 = vld [vmem:[%s1 + $0x18] sm:$0xff]
    %v98 = vld [vmem:[%s1 + $0x20] sm:$0xff]
    %v99 = vld [vmem:[%s1 + $0x28] sm:$0xff]
    %v100 = vld [vmem:[%s1 + $0x30] sm:$0xff]
    %v101 = vld [vmem:[%s1 + $0x38] sm:$0xff]
    %v102 = vld [vmem:[%s1 + $0x40] sm:$0xff]
    %v103 = vld [vmem:[%s1 + $0x48] sm:$0xff]
    %v104 = vld [vmem:[%s1 + $0x50] sm:$0xff]
    %v105 = vld [vmem:[%s1 + $0x58] sm:$0xff]
    %v106 = vld [vmem:[%s1 + $0x60] sm:$0xff]
    %v107 = vld [vmem:[%s1 + $0x68] sm:$0xff]
    %v108 = vld [vmem:[%s1 + $0x70] sm:$0xff]
    %v109 = vld [vmem:[%s1 + $0x78] sm:$0xff]
    %v110 = vld [vmem:[%s2] sm:$0xff]
    %v111 = vld [vmem:[%s2 + $0x8] sm:$0xff]
    %v112 = vld [vmem:[%s2 + $0x10] sm:$0xff]
    %v113 = vld [vmem:[%s2 + $0x18] sm:$0xff]
    %114 = vmatprep.subr.mxu0 0.0
    %115 = vmatpush1.msra.mxu0 %v109
    %116 = vmatprep.subr.mxu0 0.0
    %117 = vmatpush1.msra.mxu0 %v108
    %118 = vmatprep.subr.mxu0 0.0
    %119 = vmatpush1.msra.mxu0 %v107
    %120 = vmatprep.subr.mxu0 0.0
    %121 = vmatpush1.msra.mxu0 %v106
    %122 = vmatprep.subr.mxu0 0.0
    %123 = vmatpush1.msra.mxu0 %v105
    %124 = vmatprep.subr.mxu0 0.0
    %125 = vmatpush1.msra.mxu0 %v104
    %126 = vmatprep.subr.mxu0 0.0
    %127 = vmatpush1.msra.mxu0 %v103
    %128 = vmatprep.subr.mxu0 0.0
    %129 = vmatpush1.msra.mxu0 %v102
    %130 = vmatprep.subr.mxu0 0.0
    %131 = vmatpush1.msra.mxu0 %v101
    %132 = vmatprep.subr.mxu0 0.0
    %133 = vmatpush1.msra.mxu0 %v100
    %134 = vmatprep.subr.mxu0 0.0
    %135 = vmatpush1.msra.mxu0 %v99
    %136 = vmatprep.subr.mxu0 0.0
    %137 = vmatpush1.msra.mxu0 %v98
    %138 = vmatprep.subr.mxu0 0.0
    %139 = vmatpush1.msra.mxu0 %v97
    %140 = vmatprep.subr.mxu0 0.0
    %141 = vmatpush1.msra.mxu0 %v96
    %142 = vmatprep.subr.mxu0 0.0
    %143 = vmatpush1.msra.mxu0 %v95
    %144 = vmatprep.subr.mxu0 0.0
    %145 = vmatpush1.msra.mxu0 %v94
    %146 = vmatprep.subr.mxu0 0.0
    %147 = vmatpush2.msra.mxu0 0.0
    %148 = vmatprep.subr.mxu0 0.0
    %149 = vmatpush2.msra.mxu0 0.0
    %150 = vmatprep.subr.mxu0 0.0
    %151 = vmatpush2.msra.mxu0 0.0
    %152 = vmatprep.subr.mxu0 0.0
    %153 = vmatpush2.msra.mxu0 0.0
    %154 = vmatprep.subr.mxu0 0.0
    %155 = vmatpush2.msra.mxu0 0.0
    %156 = vmatprep.subr.mxu0 0.0
    %157 = vmatpush2.msra.mxu0 0.0
    %158 = vmatprep.subr.mxu0 0.0
    %159 = vmatpush2.msra.mxu0 0.0
    %160 = vmatprep.subr.mxu0 0.0
    %161 = vmatpush2.msra.mxu0 0.0
    %162 = vmatprep.subr.mxu0 0.0
    %163 = vmatpush2.msra.mxu0 0.0
    %164 = vmatprep.subr.mxu0 0.0
    %165 = vmatpush2.msra.mxu0 0.0
    %166 = vmatprep.subr.mxu0 0.0
    %167 = vmatpush2.msra.mxu0 0.0
    %168 = vmatprep.subr.mxu0 0.0
    %169 = vmatpush2.msra.mxu0 0.0
    %170 = vmatprep.subr.mxu0 0.0
    %171 = vmatpush2.msra.mxu0 0.0
    %172 = vmatprep.subr.mxu0 0.0
    %173 = vmatpush2.msra.mxu0 0.0
    %174 = vmatprep.subr.mxu0 0.0
    %175 = vmatpush2.msra.mxu0 0.0
    %176 = vmatprep.subr.mxu0 0.0
    %177 = vmatpush2.msra.mxu0 0.0
    %178 = vmatprep.mubr.f32.mxu0 0.0
    %179 = vmatmul.mubr.f32.gmra.mxu0 %v86
    %v180 = vpop.f32.mrf.mxu0
    %v181 = vadd.f32 %v110, %v180
    %v182 = vpop.f32.mrf.mxu0
    %183 = vmatprep.mubr.f32.mxu0 0.0
    %184 = vmatmul.mubr.f32.gmra.mxu0 %v87
    %v185 = vpop.f32.mrf.mxu0
    %v186 = vadd.f32 %v111, %v185
    %v187 = vpop.f32.mrf.mxu0
    %188 = vmatprep.mubr.f32.mxu0 0.0
    %189 = vmatmul.mubr.f32.gmra.mxu0 %v88
    %v190 = vpop.f32.mrf.mxu0
    %v191 = vadd.f32 %v112, %v190
    %v192 = vpop.f32.mrf.mxu0
    %193 = vmatprep.mubr.f32.mxu0 0.0
    %194 = vmatmul.mubr.f32.gmra.mxu0 %v89
    %v195 = vpop.f32.mrf.mxu0
    %v196 = vadd.f32 %v113, %v195
    %v197 = vpop.f32.mrf.mxu0
    %198 = vmatprep.mubr.f32.mxu0 0.0
    %199 = vmatmul.mubr.f32.gmra.mxu0 %v90
    %v200 = vpop.f32.mrf.mxu0
    %v201 = vadd.f32 %v110, %v200
    %v202 = vpop.f32.mrf.mxu0
    %203 = vmatprep.mubr.f32.mxu0 0.0
    %204 = vmatmul.mubr.f32.gmra.mxu0 %v91
    %v205 = vpop.f32.mrf.mxu0
    %v206 = vadd.f32 %v111, %v205
    %v207 = vpop.f32.mrf.mxu0
    %208 = vmatprep.mubr.f32.mxu0 0.0
    %209 = vmatmul.mubr.f32.gmra.mxu0 %v92
    %v210 = vpop.f32.mrf.mxu0
    %v211 = vadd.f32 %v112, %v210
    %v212 = vpop.f32.mrf.mxu0
    %213 = vmatprep.mubr.f32.mxu0 0.0
    %214 = vmatmul.mubr.f32.gmra.mxu0 %v93
    %v215 = vpop.f32.mrf.mxu0
    %v216 = vadd.f32 %v113, %v215
    %v217 = vpop.f32.mrf.mxu0
    %218 = vdwg.mxu0
    %v219 = vlaneseq
    %v220 = vshrl.u32 %v219, 7
    %v221 = vadd.s32 %v220, 8
    %v222 = vadd.s32 %v220, 16
    %v223 = vadd.s32 %v220, 24
    %vm224 = vcmp.le.s32.totalorder %v45, %v220
    %vm225 = vcmp.le.s32.totalorder %v45, %v221
    %vm226 = vcmp.le.s32.totalorder %v45, %v222
    %vm227 = vcmp.le.s32.totalorder %v45, %v223
    %v228 = vld [vmem:[%s7] sm:$0x1]
    %v229 = vld [vmem:[%s7 + $0x1] sm:$0x1]
    %v230 = vld [vmem:[%s7 + $0x2] sm:$0x1]
    %v231 = vld [vmem:[%s7 + $0x3] sm:$0x1]
    %v232 = vld [vmem:[%s7 + $0x4] sm:$0x1]
    %v233 = vld [vmem:[%s7 + $0x5] sm:$0x1]
    %v234 = vld [vmem:[%s7 + $0x6] sm:$0x1]
    %vm235 = vcmask 261120
    %v236 = vsel %vm235, %v181, 0.0
    %237 = vadd.xlane.f32.xlu0 %v236
    %v238 = vpop.xlane.xlu0 %237
    %v239 = vsel %vm235, %v186, 0.0
    %240 = vadd.xlane.f32.xlu0 %v239
    %v241 = vpop.xlane.xlu0 %240
    %v242 = vsel %vm235, %v191, 0.0
    %243 = vadd.xlane.f32.xlu0 %v242
    %v244 = vpop.xlane.xlu0 %243
    %v245 = vsel %vm235, %v196, 0.0
    %246 = vadd.xlane.f32.xlu0 %v245
    %v247 = vpop.xlane.xlu0 %246
    %v248 = vsel %vm235, %v201, 0.0
    %249 = vadd.xlane.f32.xlu0 %v248
    %v250 = vpop.xlane.xlu0 %249
    %v251 = vsel %vm235, %v206, 0.0
    %252 = vadd.xlane.f32.xlu0 %v251
    %v253 = vpop.xlane.xlu0 %252
    %v254 = vsel %vm235, %v211, 0.0
    %255 = vadd.xlane.f32.xlu0 %v254
    %v256 = vpop.xlane.xlu0 %255
    %v257 = vsel %vm235, %v216, 0.0
    %258 = vadd.xlane.f32.xlu0 %v257
    %v259 = vpop.xlane.xlu0 %258
    %v260 = vrcp.pop 32.0
    %v261 = vmul.f32 %v238, %v260
    %v262 = vmul.f32 %v241, %v260
    %v263 = vmul.f32 %v244, %v260
    %v264 = vmul.f32 %v247, %v260
    %v265 = vmul.f32 %v250, %v260
    %v266 = vmul.f32 %v253, %v260
    %v267 = vmul.f32 %v256, %v260
    %v268 = vmul.f32 %v259, %v260
    %v269 = vsub.f32 %v181, %v261
    %v270 = vsub.f32 %v186, %v262
    %v271 = vsub.f32 %v191, %v263
    %v272 = vsub.f32 %v196, %v264
    %v273 = vsub.f32 %v201, %v265
    %v274 = vsub.f32 %v206, %v266
    %v275 = vsub.f32 %v211, %v267
    %v276 = vsub.f32 %v216, %v268
    %v277 = vmul.f32 %v269, %v269
    %v278 = vmul.f32 %v270, %v270
    %v279 = vmul.f32 %v271, %v271
    %v280 = vmul.f32 %v272, %v272
    %v281 = vmul.f32 %v273, %v273
    %v282 = vmul.f32 %v274, %v274
    %v283 = vmul.f32 %v275, %v275
    %v284 = vmul.f32 %v276, %v276
    %v285 = vsel %vm235, %v277, 0.0
    %286 = vadd.xlane.f32.xlu0 %v285
    %v287 = vpop.xlane.xlu0 %286
    %v288 = vsel %vm235, %v278, 0.0
    %289 = vadd.xlane.f32.xlu0 %v288
    %v290 = vpop.xlane.xlu0 %289
    %v291 = vsel %vm235, %v279, 0.0
    %292 = vadd.xlane.f32.xlu0 %v291
    %v293 = vpop.xlane.xlu0 %292
    %v294 = vsel %vm235, %v280, 0.0
    %295 = vadd.xlane.f32.xlu0 %v294
    %v296 = vpop.xlane.xlu0 %295
    %v297 = vsel %vm235, %v281, 0.0
    %298 = vadd.xlane.f32.xlu0 %v297
    %v299 = vpop.xlane.xlu0 %298
    %v300 = vsel %vm235, %v282, 0.0
    %301 = vadd.xlane.f32.xlu0 %v300
    %v302 = vpop.xlane.xlu0 %301
    %v303 = vsel %vm235, %v283, 0.0
    %304 = vadd.xlane.f32.xlu0 %v303
    %v305 = vpop.xlane.xlu0 %304
    %v306 = vsel %vm235, %v284, 0.0
    %307 = vadd.xlane.f32.xlu0 %v306
    %v308 = vpop.xlane.xlu0 %307
    %v309 = vmul.f32 %v287, %v260
    %v310 = vmul.f32 %v290, %v260
    %v311 = vmul.f32 %v293, %v260
    %v312 = vmul.f32 %v296, %v260
    %v313 = vmul.f32 %v299, %v260
    %v314 = vmul.f32 %v302, %v260
    %v315 = vmul.f32 %v305, %v260
    %v316 = vmul.f32 %v308, %v260
    %v317 = vadd.f32 %v309, 1e-05
    %v318 = vadd.f32 %v310, 1e-05
    %v319 = vadd.f32 %v311, 1e-05
    %v320 = vadd.f32 %v312, 1e-05
    %v321 = vadd.f32 %v313, 1e-05
    %v322 = vadd.f32 %v314, 1e-05
    %v323 = vadd.f32 %v315, 1e-05
    %v324 = vadd.f32 %v316, 1e-05
    %v325 = vrsqrt.pop %v317
    %v326 = vrsqrt.pop %v318
    %v327 = vrsqrt.pop %v319
    %v328 = vrsqrt.pop %v320
    %v329 = vrsqrt.pop %v321
    %v330 = vrsqrt.pop %v322
    %v331 = vrsqrt.pop %v323
    %v332 = vrsqrt.pop %v324
    %v333 = vmul.f32 %v269, %v325
    %v334 = vmul.f32 %v270, %v326
    %v335 = vmul.f32 %v271, %v327
    %v336 = vmul.f32 %v272, %v328
    %v337 = vmul.f32 %v273, %v329
    %v338 = vmul.f32 %v274, %v330
    %v339 = vmul.f32 %v275, %v331
    %v340 = vmul.f32 %v276, %v332
    %v341 = vlaneseq
    %v342 = vshrl.u32 %v341, 7
    %v343 = vsub.s32 0, %v342
    %v344 = vrot.slane %v228, %v343
    %v345 = vmul.f32 %v333, %v344
    %v346 = vmul.f32 %v334, %v344
    %v347 = vmul.f32 %v335, %v344
    %v348 = vmul.f32 %v336, %v344
    %v349 = vmul.f32 %v337, %v344
    %v350 = vmul.f32 %v338, %v344
    %v351 = vmul.f32 %v339, %v344
    %v352 = vmul.f32 %v340, %v344
    %v353 = vlaneseq
    %v354 = vshrl.u32 %v353, 7
    %v355 = vsub.s32 0, %v354
    %v356 = vrot.slane %v229, %v355
    %v357 = vadd.f32 %v345, %v356
    %v358 = vadd.f32 %v346, %v356
    %v359 = vadd.f32 %v347, %v356
    %v360 = vadd.f32 %v348, %v356
    %v361 = vadd.f32 %v349, %v356
    %v362 = vadd.f32 %v350, %v356
    %v363 = vadd.f32 %v351, %v356
    %v364 = vadd.f32 %v352, %v356
    %v365 = vld [vmem:[%s3] sm:$0xff]
    %v366 = vld [vmem:[%s3 + $0x8] sm:$0xff]
    %v367 = vld [vmem:[%s3 + $0x10] sm:$0xff]
    %v368 = vld [vmem:[%s3 + $0x18] sm:$0xff]
    %v370 = vsel %vm235, %v357, 0
    %v373 = vsel %vm235, %v358, 0
    %v376 = vsel %vm235, %v359, 0
    %v379 = vsel %vm235, %v360, 0
    %v382 = vsel %vm235, %v361, 0
    %v385 = vsel %vm235, %v362, 0
    %v388 = vsel %vm235, %v363, 0
    %v391 = vsel %vm235, %v364, 0
    %393 = vmatprep.subr.mxu0 0.0
    %394 = vmatpush1.msra.mxu0 0.0
    %395 = vmatprep.subr.mxu0 0.0
    %396 = vmatpush1.msra.mxu0 0.0
    %397 = vmatprep.subr.mxu0 0.0
    %398 = vmatpush1.msra.mxu0 0.0
    %399 = vmatprep.subr.mxu0 0.0
    %400 = vmatpush1.msra.mxu0 0.0
    %401 = vmatprep.subr.mxu0 0.0
    %402 = vmatpush1.msra.mxu0 0.0
    %403 = vmatprep.subr.mxu0 0.0
    %404 = vmatpush1.msra.mxu0 0.0
    %405 = vmatprep.subr.mxu0 0.0
    %406 = vmatpush1.msra.mxu0 0.0
    %407 = vmatprep.subr.mxu0 0.0
    %408 = vmatpush1.msra.mxu0 0.0
    %409 = vmatprep.subr.mxu0 0.0
    %410 = vmatpush1.msra.mxu0 0.0
    %411 = vmatprep.subr.mxu0 0.0
    %412 = vmatpush1.msra.mxu0 0.0
    %413 = vmatprep.subr.mxu0 0.0
    %414 = vmatpush1.msra.mxu0 0.0
    %415 = vmatprep.subr.mxu0 0.0
    %416 = vmatpush1.msra.mxu0 0.0
    %417 = vmatprep.subr.mxu0 0.0
    %418 = vmatpush1.msra.mxu0 %v368
    %419 = vmatprep.subr.mxu0 0.0
    %420 = vmatpush1.msra.mxu0 %v367
    %421 = vmatprep.subr.mxu0 0.0
    %422 = vmatpush1.msra.mxu0 %v366
    %423 = vmatprep.subr.mxu0 0.0
    %424 = vmatpush1.msra.mxu0 %v365
    %425 = vmatprep.subr.mxu0 0.0
    %426 = vmatpush2.msra.mxu0 0.0
    %427 = vmatprep.subr.mxu0 0.0
    %428 = vmatpush2.msra.mxu0 0.0
    %429 = vmatprep.subr.mxu0 0.0
    %430 = vmatpush2.msra.mxu0 0.0
    %431 = vmatprep.subr.mxu0 0.0
    %432 = vmatpush2.msra.mxu0 0.0
    %433 = vmatprep.subr.mxu0 0.0
    %434 = vmatpush2.msra.mxu0 0.0
    %435 = vmatprep.subr.mxu0 0.0
    %436 = vmatpush2.msra.mxu0 0.0
    %437 = vmatprep.subr.mxu0 0.0
    %438 = vmatpush2.msra.mxu0 0.0
    %439 = vmatprep.subr.mxu0 0.0
    %440 = vmatpush2.msra.mxu0 0.0
    %441 = vmatprep.subr.mxu0 0.0
    %442 = vmatpush2.msra.mxu0 0.0
    %443 = vmatprep.subr.mxu0 0.0
    %444 = vmatpush2.msra.mxu0 0.0
    %445 = vmatprep.subr.mxu0 0.0
    %446 = vmatpush2.msra.mxu0 0.0
    %447 = vmatprep.subr.mxu0 0.0
    %448 = vmatpush2.msra.mxu0 0.0
    %449 = vmatprep.subr.mxu0 0.0
    %450 = vmatpush2.msra.mxu0 0.0
    %451 = vmatprep.subr.mxu0 0.0
    %452 = vmatpush2.msra.mxu0 0.0
    %453 = vmatprep.subr.mxu0 0.0
    %454 = vmatpush2.msra.mxu0 0.0
    %455 = vmatprep.subr.mxu0 0.0
    %456 = vmatpush2.msra.mxu0 0.0
    %457 = vmatprep.mubr.f32.mxu0 0.0
    %458 = vmatmul.mubr.f32.gmra.mxu0 %v370
    %v459 = vpop.f32.mrf.mxu0
    %v460 = vadd.f32 0.0, %v459
    %v461 = vpop.f32.mrf.mxu0
    %462 = vmatprep.mubr.f32.mxu0 0.0
    %463 = vmatmul.mubr.f32.gmra.mxu0 %v373
    %v464 = vpop.f32.mrf.mxu0
    %v465 = vadd.f32 0.0, %v464
    %v466 = vpop.f32.mrf.mxu0
    %467 = vmatprep.mubr.f32.mxu0 0.0
    %468 = vmatmul.mubr.f32.gmra.mxu0 %v376
    %v469 = vpop.f32.mrf.mxu0
    %v470 = vadd.f32 0.0, %v469
    %v471 = vpop.f32.mrf.mxu0
    %472 = vmatprep.mubr.f32.mxu0 0.0
    %473 = vmatmul.mubr.f32.gmra.mxu0 %v379
    %v474 = vpop.f32.mrf.mxu0
    %v475 = vadd.f32 0.0, %v474
    %v476 = vpop.f32.mrf.mxu0
    %477 = vmatprep.mubr.f32.mxu0 0.0
    %478 = vmatmul.mubr.f32.gmra.mxu0 %v382
    %v479 = vpop.f32.mrf.mxu0
    %v480 = vadd.f32 0.0, %v479
    %v481 = vpop.f32.mrf.mxu0
    %482 = vmatprep.mubr.f32.mxu0 0.0
    %483 = vmatmul.mubr.f32.gmra.mxu0 %v385
    %v484 = vpop.f32.mrf.mxu0
    %v485 = vadd.f32 0.0, %v484
    %v486 = vpop.f32.mrf.mxu0
    %487 = vmatprep.mubr.f32.mxu0 0.0
    %488 = vmatmul.mubr.f32.gmra.mxu0 %v388
    %v489 = vpop.f32.mrf.mxu0
    %v490 = vadd.f32 0.0, %v489
    %v491 = vpop.f32.mrf.mxu0
    %492 = vmatprep.mubr.f32.mxu0 0.0
    %493 = vmatmul.mubr.f32.gmra.mxu0 %v391
    %v494 = vpop.f32.mrf.mxu0
    %v495 = vadd.f32 0.0, %v494
    %v496 = vpop.f32.mrf.mxu0
    %497 = vdwg.mxu0
    %502 = vrot.lane.b32.xlu0 %v460, 96
    %v503 = vpop.permute.xlu0 %502
    %504 = vrot.lane.b32.xlu0 %v465, 96
    %v505 = vpop.permute.xlu0 %504
    %506 = vrot.lane.b32.xlu0 %v470, 96
    %v507 = vpop.permute.xlu0 %506
    %508 = vrot.lane.b32.xlu0 %v475, 96
    %v509 = vpop.permute.xlu0 %508
    %vm510 = vcmask 130048
    %v511 = vsel %vm510, %v460, 0
    %v513 = vsel %vm510, %v465, 0
    %v515 = vsel %vm510, %v470, 0
    %v517 = vsel %vm510, %v475, 0
    %v519 = vsel %vm510, %v503, 0
    %v521 = vsel %vm510, %v505, 0
    %v523 = vsel %vm510, %v507, 0
    %v525 = vsel %vm510, %v509, 0
    %527 = vmatprep.subr.mxu0 0.0
    %528 = vmatpush1.xpose.msra.mxu0 0.0
    %529 = vmatprep.subr.mxu0 0.0
    %530 = vmatpush1.xpose.msra.mxu0 0.0
    %531 = vmatprep.subr.mxu0 0.0
    %532 = vmatpush1.xpose.msra.mxu0 0.0
    %533 = vmatprep.subr.mxu0 0.0
    %534 = vmatpush1.xpose.msra.mxu0 0.0
    %535 = vmatprep.subr.mxu0 0.0
    %536 = vmatpush1.xpose.msra.mxu0 0.0
    %537 = vmatprep.subr.mxu0 0.0
    %538 = vmatpush1.xpose.msra.mxu0 0.0
    %539 = vmatprep.subr.mxu0 0.0
    %540 = vmatpush1.xpose.msra.mxu0 0.0
    %541 = vmatprep.subr.mxu0 0.0
    %542 = vmatpush1.xpose.msra.mxu0 0.0
    %543 = vmatprep.subr.mxu0 0.0
    %544 = vmatpush1.xpose.msra.mxu0 0.0
    %545 = vmatprep.subr.mxu0 0.0
    %546 = vmatpush1.xpose.msra.mxu0 0.0
    %547 = vmatprep.subr.mxu0 0.0
    %548 = vmatpush1.xpose.msra.mxu0 0.0
    %549 = vmatprep.subr.mxu0 0.0
    %550 = vmatpush1.xpose.msra.mxu0 0.0
    %551 = vmatprep.subr.mxu0 0.0
    %552 = vmatpush1.xpose.msra.mxu0 %v525
    %553 = vmatprep.subr.mxu0 0.0
    %554 = vmatpush1.xpose.msra.mxu0 %v523
    %555 = vmatprep.subr.mxu0 0.0
    %556 = vmatpush1.xpose.msra.mxu0 %v521
    %557 = vmatprep.subr.mxu0 0.0
    %558 = vmatpush1.xpose.msra.mxu0 %v519
    %559 = vmatprep.subr.mxu0 0.0
    %560 = vmatpush2.xpose.msra.mxu0 0.0
    %561 = vmatprep.subr.mxu0 0.0
    %562 = vmatpush2.xpose.msra.mxu0 0.0
    %563 = vmatprep.subr.mxu0 0.0
    %564 = vmatpush2.xpose.msra.mxu0 0.0
    %565 = vmatprep.subr.mxu0 0.0
    %566 = vmatpush2.xpose.msra.mxu0 0.0
    %567 = vmatprep.subr.mxu0 0.0
    %568 = vmatpush2.xpose.msra.mxu0 0.0
    %569 = vmatprep.subr.mxu0 0.0
    %570 = vmatpush2.xpose.msra.mxu0 0.0
    %571 = vmatprep.subr.mxu0 0.0
    %572 = vmatpush2.xpose.msra.mxu0 0.0
    %573 = vmatprep.subr.mxu0 0.0
    %574 = vmatpush2.xpose.msra.mxu0 0.0
    %575 = vmatprep.subr.mxu0 0.0
    %576 = vmatpush2.xpose.msra.mxu0 0.0
    %577 = vmatprep.subr.mxu0 0.0
    %578 = vmatpush2.xpose.msra.mxu0 0.0
    %579 = vmatprep.subr.mxu0 0.0
    %580 = vmatpush2.xpose.msra.mxu0 0.0
    %581 = vmatprep.subr.mxu0 0.0
    %582 = vmatpush2.xpose.msra.mxu0 0.0
    %583 = vmatprep.subr.mxu0 0.0
    %584 = vmatpush2.xpose.msra.mxu0 0.0
    %585 = vmatprep.subr.mxu0 0.0
    %586 = vmatpush2.xpose.msra.mxu0 0.0
    %587 = vmatprep.subr.mxu0 0.0
    %588 = vmatpush2.xpose.msra.mxu0 0.0
    %589 = vmatprep.subr.mxu0 0.0
    %590 = vmatpush2.xpose.msra.mxu0 0.0
    %591 = vmatprep.mubr.f32.mxu0 0.0
    %592 = vmatmul.mubr.f32.gmra.mxu0 %v511
    %v593 = vpop.f32.mrf.mxu0
    %v594 = vadd.f32 0.0, %v593
    %v595 = vpop.f32.mrf.mxu0
    %596 = vmatprep.mubr.f32.mxu0 0.0
    %597 = vmatmul.mubr.f32.gmra.mxu0 %v513
    %v598 = vpop.f32.mrf.mxu0
    %v599 = vadd.f32 0.0, %v598
    %v600 = vpop.f32.mrf.mxu0
    %601 = vmatprep.mubr.f32.mxu0 0.0
    %602 = vmatmul.mubr.f32.gmra.mxu0 %v515
    %v603 = vpop.f32.mrf.mxu0
    %v604 = vadd.f32 0.0, %v603
    %v605 = vpop.f32.mrf.mxu0
    %606 = vmatprep.mubr.f32.mxu0 0.0
    %607 = vmatmul.mubr.f32.gmra.mxu0 %v517
    %v608 = vpop.f32.mrf.mxu0
    %v609 = vadd.f32 0.0, %v608
    %v610 = vpop.f32.mrf.mxu0
    %611 = vdwg.mxu0
    %v612 = vsel %vm224, %v594, -1e+30
    %v613 = vsel %vm225, %v599, -1e+30
    %v614 = vsel %vm226, %v604, -1e+30
    %v615 = vsel %vm227, %v609, -1e+30
    %v616 = vsel %vm235, %v612, -inf
    %617 = vmax.xlane.f32.xlu0 %v616
    %v618 = vpop.xlane.xlu0 %617
    %v619 = vsel %vm235, %v613, -inf
    %620 = vmax.xlane.f32.xlu0 %v619
    %v621 = vpop.xlane.xlu0 %620
    %v622 = vsel %vm235, %v614, -inf
    %623 = vmax.xlane.f32.xlu0 %v622
    %v624 = vpop.xlane.xlu0 %623
    %v625 = vsel %vm235, %v615, -inf
    %626 = vmax.xlane.f32.xlu0 %v625
    %v627 = vpop.xlane.xlu0 %626
    %v628 = vsub.f32 %v612, %v618
    %v629 = vsub.f32 %v613, %v621
    %v630 = vsub.f32 %v614, %v624
    %v631 = vsub.f32 %v615, %v627
    %v632 = vmul.f32 %v628, 1.442695
    %v633 = vpow.pop %v632
    %v634 = vmul.f32 %v629, 1.442695
    %v635 = vpow.pop %v634
    %v636 = vmul.f32 %v630, 1.442695
    %v637 = vpow.pop %v636
    %v638 = vmul.f32 %v631, 1.442695
    %v639 = vpow.pop %v638
    %v640 = vsel %vm235, %v633, 0.0
    %641 = vadd.xlane.f32.xlu0 %v640
    %v642 = vpop.xlane.xlu0 %641
    %v643 = vsel %vm235, %v635, 0.0
    %644 = vadd.xlane.f32.xlu0 %v643
    %v645 = vpop.xlane.xlu0 %644
    %v646 = vsel %vm235, %v637, 0.0
    %647 = vadd.xlane.f32.xlu0 %v646
    %v648 = vpop.xlane.xlu0 %647
    %v649 = vsel %vm235, %v639, 0.0
    %650 = vadd.xlane.f32.xlu0 %v649
    %v651 = vpop.xlane.xlu0 %650
    %652 = vrot.lane.b32.xlu0 %v460, 64
    %v653 = vpop.permute.xlu0 %652
    %654 = vrot.lane.b32.xlu0 %v465, 64
    %v655 = vpop.permute.xlu0 %654
    %656 = vrot.lane.b32.xlu0 %v470, 64
    %v657 = vpop.permute.xlu0 %656
    %658 = vrot.lane.b32.xlu0 %v475, 64
    %v659 = vpop.permute.xlu0 %658
    %v665 = vsel %vm235, %v633, 0
    %v668 = vsel %vm235, %v635, 0
    %v671 = vsel %vm235, %v637, 0
    %v674 = vsel %vm235, %v639, 0
    %676 = vmatprep.subr.mxu0 0.0
    %677 = vmatpush1.msra.mxu0 0.0
    %678 = vmatprep.subr.mxu0 0.0
    %679 = vmatpush1.msra.mxu0 0.0
    %680 = vmatprep.subr.mxu0 0.0
    %681 = vmatpush1.msra.mxu0 0.0
    %682 = vmatprep.subr.mxu0 0.0
    %683 = vmatpush1.msra.mxu0 0.0
    %684 = vmatprep.subr.mxu0 0.0
    %685 = vmatpush1.msra.mxu0 0.0
    %686 = vmatprep.subr.mxu0 0.0
    %687 = vmatpush1.msra.mxu0 0.0
    %688 = vmatprep.subr.mxu0 0.0
    %689 = vmatpush1.msra.mxu0 0.0
    %690 = vmatprep.subr.mxu0 0.0
    %691 = vmatpush1.msra.mxu0 0.0
    %692 = vmatprep.subr.mxu0 0.0
    %693 = vmatpush1.msra.mxu0 0.0
    %694 = vmatprep.subr.mxu0 0.0
    %695 = vmatpush1.msra.mxu0 0.0
    %696 = vmatprep.subr.mxu0 0.0
    %697 = vmatpush1.msra.mxu0 0.0
    %698 = vmatprep.subr.mxu0 0.0
    %699 = vmatpush1.msra.mxu0 0.0
    %700 = vmatprep.subr.mxu0 0.0
    %701 = vmatpush1.msra.mxu0 %v659
    %702 = vmatprep.subr.mxu0 0.0
    %703 = vmatpush1.msra.mxu0 %v657
    %704 = vmatprep.subr.mxu0 0.0
    %705 = vmatpush1.msra.mxu0 %v655
    %706 = vmatprep.subr.mxu0 0.0
    %707 = vmatpush1.msra.mxu0 %v653
    %708 = vmatprep.subr.mxu0 0.0
    %709 = vmatpush2.msra.mxu0 0.0
    %710 = vmatprep.subr.mxu0 0.0
    %711 = vmatpush2.msra.mxu0 0.0
    %712 = vmatprep.subr.mxu0 0.0
    %713 = vmatpush2.msra.mxu0 0.0
    %714 = vmatprep.subr.mxu0 0.0
    %715 = vmatpush2.msra.mxu0 0.0
    %716 = vmatprep.subr.mxu0 0.0
    %717 = vmatpush2.msra.mxu0 0.0
    %718 = vmatprep.subr.mxu0 0.0
    %719 = vmatpush2.msra.mxu0 0.0
    %720 = vmatprep.subr.mxu0 0.0
    %721 = vmatpush2.msra.mxu0 0.0
    %722 = vmatprep.subr.mxu0 0.0
    %723 = vmatpush2.msra.mxu0 0.0
    %724 = vmatprep.subr.mxu0 0.0
    %725 = vmatpush2.msra.mxu0 0.0
    %726 = vmatprep.subr.mxu0 0.0
    %727 = vmatpush2.msra.mxu0 0.0
    %728 = vmatprep.subr.mxu0 0.0
    %729 = vmatpush2.msra.mxu0 0.0
    %730 = vmatprep.subr.mxu0 0.0
    %731 = vmatpush2.msra.mxu0 0.0
    %732 = vmatprep.subr.mxu0 0.0
    %733 = vmatpush2.msra.mxu0 0.0
    %734 = vmatprep.subr.mxu0 0.0
    %735 = vmatpush2.msra.mxu0 0.0
    %736 = vmatprep.subr.mxu0 0.0
    %737 = vmatpush2.msra.mxu0 0.0
    %738 = vmatprep.subr.mxu0 0.0
    %739 = vmatpush2.msra.mxu0 0.0
    %740 = vmatprep.mubr.f32.mxu0 0.0
    %741 = vmatmul.mubr.f32.gmra.mxu0 %v665
    %v742 = vpop.f32.mrf.mxu0
    %v743 = vadd.f32 0.0, %v742
    %v744 = vpop.f32.mrf.mxu0
    %745 = vmatprep.mubr.f32.mxu0 0.0
    %746 = vmatmul.mubr.f32.gmra.mxu0 %v668
    %v747 = vpop.f32.mrf.mxu0
    %v748 = vadd.f32 0.0, %v747
    %v749 = vpop.f32.mrf.mxu0
    %750 = vmatprep.mubr.f32.mxu0 0.0
    %751 = vmatmul.mubr.f32.gmra.mxu0 %v671
    %v752 = vpop.f32.mrf.mxu0
    %v753 = vadd.f32 0.0, %v752
    %v754 = vpop.f32.mrf.mxu0
    %755 = vmatprep.mubr.f32.mxu0 0.0
    %756 = vmatmul.mubr.f32.gmra.mxu0 %v674
    %v757 = vpop.f32.mrf.mxu0
    %v758 = vadd.f32 0.0, %v757
    %v759 = vpop.f32.mrf.mxu0
    %760 = vdwg.mxu0
    %v761 = vrcp.pop %v642
    %v762 = vmul.f32 %v743, %v761
    %v763 = vrcp.pop %v645
    %v764 = vmul.f32 %v748, %v763
    %v765 = vrcp.pop %v648
    %v766 = vmul.f32 %v753, %v765
    %v767 = vrcp.pop %v651
    %v768 = vmul.f32 %v758, %v767
    %v769 = vld [vmem:[%s4] sm:$0xff]
    %v770 = vld [vmem:[%s4 + $0x8] sm:$0xff]
    %771 = vrot.lane.b32.xlu0 %v460, 112
    %v772 = vpop.permute.xlu0 %771
    %773 = vrot.lane.b32.xlu0 %v465, 112
    %v774 = vpop.permute.xlu0 %773
    %775 = vrot.lane.b32.xlu0 %v470, 112
    %v776 = vpop.permute.xlu0 %775
    %777 = vrot.lane.b32.xlu0 %v475, 112
    %v778 = vpop.permute.xlu0 %777
    %779 = vrot.lane.b32.xlu0 %v460, 80
    %v780 = vpop.permute.xlu0 %779
    %781 = vrot.lane.b32.xlu0 %v465, 80
    %v782 = vpop.permute.xlu0 %781
    %783 = vrot.lane.b32.xlu0 %v470, 80
    %v784 = vpop.permute.xlu0 %783
    %785 = vrot.lane.b32.xlu0 %v475, 80
    %v786 = vpop.permute.xlu0 %785
    %v787 = vsel %vm510, %v772, 0
    %v789 = vsel %vm510, %v774, 0
    %v791 = vsel %vm510, %v776, 0
    %v793 = vsel %vm510, %v778, 0
    %v795 = vsel %vm510, %v780, 0
    %v797 = vsel %vm510, %v782, 0
    %v799 = vsel %vm510, %v784, 0
    %v801 = vsel %vm510, %v786, 0
    %803 = vmatprep.subr.mxu0 0.0
    %804 = vmatpush1.xpose.msra.mxu0 0.0
    %805 = vmatprep.subr.mxu0 0.0
    %806 = vmatpush1.xpose.msra.mxu0 0.0
    %807 = vmatprep.subr.mxu0 0.0
    %808 = vmatpush1.xpose.msra.mxu0 0.0
    %809 = vmatprep.subr.mxu0 0.0
    %810 = vmatpush1.xpose.msra.mxu0 0.0
    %811 = vmatprep.subr.mxu0 0.0
    %812 = vmatpush1.xpose.msra.mxu0 0.0
    %813 = vmatprep.subr.mxu0 0.0
    %814 = vmatpush1.xpose.msra.mxu0 0.0
    %815 = vmatprep.subr.mxu0 0.0
    %816 = vmatpush1.xpose.msra.mxu0 0.0
    %817 = vmatprep.subr.mxu0 0.0
    %818 = vmatpush1.xpose.msra.mxu0 0.0
    %819 = vmatprep.subr.mxu0 0.0
    %820 = vmatpush1.xpose.msra.mxu0 0.0
    %821 = vmatprep.subr.mxu0 0.0
    %822 = vmatpush1.xpose.msra.mxu0 0.0
    %823 = vmatprep.subr.mxu0 0.0
    %824 = vmatpush1.xpose.msra.mxu0 0.0
    %825 = vmatprep.subr.mxu0 0.0
    %826 = vmatpush1.xpose.msra.mxu0 0.0
    %827 = vmatprep.subr.mxu0 0.0
    %828 = vmatpush1.xpose.msra.mxu0 %v801
    %829 = vmatprep.subr.mxu0 0.0
    %830 = vmatpush1.xpose.msra.mxu0 %v799
    %831 = vmatprep.subr.mxu0 0.0
    %832 = vmatpush1.xpose.msra.mxu0 %v797
    %833 = vmatprep.subr.mxu0 0.0
    %834 = vmatpush1.xpose.msra.mxu0 %v795
    %835 = vmatprep.subr.mxu0 0.0
    %836 = vmatpush2.xpose.msra.mxu0 0.0
    %837 = vmatprep.subr.mxu0 0.0
    %838 = vmatpush2.xpose.msra.mxu0 0.0
    %839 = vmatprep.subr.mxu0 0.0
    %840 = vmatpush2.xpose.msra.mxu0 0.0
    %841 = vmatprep.subr.mxu0 0.0
    %842 = vmatpush2.xpose.msra.mxu0 0.0
    %843 = vmatprep.subr.mxu0 0.0
    %844 = vmatpush2.xpose.msra.mxu0 0.0
    %845 = vmatprep.subr.mxu0 0.0
    %846 = vmatpush2.xpose.msra.mxu0 0.0
    %847 = vmatprep.subr.mxu0 0.0
    %848 = vmatpush2.xpose.msra.mxu0 0.0
    %849 = vmatprep.subr.mxu0 0.0
    %850 = vmatpush2.xpose.msra.mxu0 0.0
    %851 = vmatprep.subr.mxu0 0.0
    %852 = vmatpush2.xpose.msra.mxu0 0.0
    %853 = vmatprep.subr.mxu0 0.0
    %854 = vmatpush2.xpose.msra.mxu0 0.0
    %855 = vmatprep.subr.mxu0 0.0
    %856 = vmatpush2.xpose.msra.mxu0 0.0
    %857 = vmatprep.subr.mxu0 0.0
    %858 = vmatpush2.xpose.msra.mxu0 0.0
    %859 = vmatprep.subr.mxu0 0.0
    %860 = vmatpush2.xpose.msra.mxu0 0.0
    %861 = vmatprep.subr.mxu0 0.0
    %862 = vmatpush2.xpose.msra.mxu0 0.0
    %863 = vmatprep.subr.mxu0 0.0
    %864 = vmatpush2.xpose.msra.mxu0 0.0
    %865 = vmatprep.subr.mxu0 0.0
    %866 = vmatpush2.xpose.msra.mxu0 0.0
    %867 = vmatprep.mubr.f32.mxu0 0.0
    %868 = vmatmul.mubr.f32.gmra.mxu0 %v787
    %v869 = vpop.f32.mrf.mxu0
    %v870 = vadd.f32 0.0, %v869
    %v871 = vpop.f32.mrf.mxu0
    %872 = vmatprep.mubr.f32.mxu0 0.0
    %873 = vmatmul.mubr.f32.gmra.mxu0 %v789
    %v874 = vpop.f32.mrf.mxu0
    %v875 = vadd.f32 0.0, %v874
    %v876 = vpop.f32.mrf.mxu0
    %877 = vmatprep.mubr.f32.mxu0 0.0
    %878 = vmatmul.mubr.f32.gmra.mxu0 %v791
    %v879 = vpop.f32.mrf.mxu0
    %v880 = vadd.f32 0.0, %v879
    %v881 = vpop.f32.mrf.mxu0
    %882 = vmatprep.mubr.f32.mxu0 0.0
    %883 = vmatmul.mubr.f32.gmra.mxu0 %v793
    %v884 = vpop.f32.mrf.mxu0
    %v885 = vadd.f32 0.0, %v884
    %v886 = vpop.f32.mrf.mxu0
    %887 = vdwg.mxu0
    %v888 = vsel %vm224, %v870, -1e+30
    %v889 = vsel %vm225, %v875, -1e+30
    %v890 = vsel %vm226, %v880, -1e+30
    %v891 = vsel %vm227, %v885, -1e+30
    %v892 = vsel %vm235, %v888, -inf
    %893 = vmax.xlane.f32.xlu0 %v892
    %v894 = vpop.xlane.xlu0 %893
    %v895 = vsel %vm235, %v889, -inf
    %896 = vmax.xlane.f32.xlu0 %v895
    %v897 = vpop.xlane.xlu0 %896
    %v898 = vsel %vm235, %v890, -inf
    %899 = vmax.xlane.f32.xlu0 %v898
    %v900 = vpop.xlane.xlu0 %899
    %v901 = vsel %vm235, %v891, -inf
    %902 = vmax.xlane.f32.xlu0 %v901
    %v903 = vpop.xlane.xlu0 %902
    %v904 = vsub.f32 %v888, %v894
    %v905 = vsub.f32 %v889, %v897
    %v906 = vsub.f32 %v890, %v900
    %v907 = vsub.f32 %v891, %v903
    %v908 = vmul.f32 %v904, 1.442695
    %v909 = vpow.pop %v908
    %v910 = vmul.f32 %v905, 1.442695
    %v911 = vpow.pop %v910
    %v912 = vmul.f32 %v906, 1.442695
    %v913 = vpow.pop %v912
    %v914 = vmul.f32 %v907, 1.442695
    %v915 = vpow.pop %v914
    %v916 = vsel %vm235, %v909, 0.0
    %917 = vadd.xlane.f32.xlu0 %v916
    %v918 = vpop.xlane.xlu0 %917
    %v919 = vsel %vm235, %v911, 0.0
    %920 = vadd.xlane.f32.xlu0 %v919
    %v921 = vpop.xlane.xlu0 %920
    %v922 = vsel %vm235, %v913, 0.0
    %923 = vadd.xlane.f32.xlu0 %v922
    %v924 = vpop.xlane.xlu0 %923
    %v925 = vsel %vm235, %v915, 0.0
    %926 = vadd.xlane.f32.xlu0 %v925
    %v927 = vpop.xlane.xlu0 %926
    %928 = vrot.lane.b32.xlu0 %v460, 48
    %v929 = vpop.permute.xlu0 %928
    %930 = vrot.lane.b32.xlu0 %v465, 48
    %v931 = vpop.permute.xlu0 %930
    %932 = vrot.lane.b32.xlu0 %v470, 48
    %v933 = vpop.permute.xlu0 %932
    %934 = vrot.lane.b32.xlu0 %v475, 48
    %v935 = vpop.permute.xlu0 %934
    %v941 = vsel %vm235, %v909, 0
    %v944 = vsel %vm235, %v911, 0
    %v947 = vsel %vm235, %v913, 0
    %v950 = vsel %vm235, %v915, 0
    %952 = vmatprep.subr.mxu0 0.0
    %953 = vmatpush1.msra.mxu0 0.0
    %954 = vmatprep.subr.mxu0 0.0
    %955 = vmatpush1.msra.mxu0 0.0
    %956 = vmatprep.subr.mxu0 0.0
    %957 = vmatpush1.msra.mxu0 0.0
    %958 = vmatprep.subr.mxu0 0.0
    %959 = vmatpush1.msra.mxu0 0.0
    %960 = vmatprep.subr.mxu0 0.0
    %961 = vmatpush1.msra.mxu0 0.0
    %962 = vmatprep.subr.mxu0 0.0
    %963 = vmatpush1.msra.mxu0 0.0
    %964 = vmatprep.subr.mxu0 0.0
    %965 = vmatpush1.msra.mxu0 0.0
    %966 = vmatprep.subr.mxu0 0.0
    %967 = vmatpush1.msra.mxu0 0.0
    %968 = vmatprep.subr.mxu0 0.0
    %969 = vmatpush1.msra.mxu0 0.0
    %970 = vmatprep.subr.mxu0 0.0
    %971 = vmatpush1.msra.mxu0 0.0
    %972 = vmatprep.subr.mxu0 0.0
    %973 = vmatpush1.msra.mxu0 0.0
    %974 = vmatprep.subr.mxu0 0.0
    %975 = vmatpush1.msra.mxu0 0.0
    %976 = vmatprep.subr.mxu0 0.0
    %977 = vmatpush1.msra.mxu0 %v935
    %978 = vmatprep.subr.mxu0 0.0
    %979 = vmatpush1.msra.mxu0 %v933
    %980 = vmatprep.subr.mxu0 0.0
    %981 = vmatpush1.msra.mxu0 %v931
    %982 = vmatprep.subr.mxu0 0.0
    %983 = vmatpush1.msra.mxu0 %v929
    %984 = vmatprep.subr.mxu0 0.0
    %985 = vmatpush2.msra.mxu0 0.0
    %986 = vmatprep.subr.mxu0 0.0
    %987 = vmatpush2.msra.mxu0 0.0
    %988 = vmatprep.subr.mxu0 0.0
    %989 = vmatpush2.msra.mxu0 0.0
    %990 = vmatprep.subr.mxu0 0.0
    %991 = vmatpush2.msra.mxu0 0.0
    %992 = vmatprep.subr.mxu0 0.0
    %993 = vmatpush2.msra.mxu0 0.0
    %994 = vmatprep.subr.mxu0 0.0
    %995 = vmatpush2.msra.mxu0 0.0
    %996 = vmatprep.subr.mxu0 0.0
    %997 = vmatpush2.msra.mxu0 0.0
    %998 = vmatprep.subr.mxu0 0.0
    %999 = vmatpush2.msra.mxu0 0.0
    %1000 = vmatprep.subr.mxu0 0.0
    %1001 = vmatpush2.msra.mxu0 0.0
    %1002 = vmatprep.subr.mxu0 0.0
    %1003 = vmatpush2.msra.mxu0 0.0
    %1004 = vmatprep.subr.mxu0 0.0
    %1005 = vmatpush2.msra.mxu0 0.0
    %1006 = vmatprep.subr.mxu0 0.0
    %1007 = vmatpush2.msra.mxu0 0.0
    %1008 = vmatprep.subr.mxu0 0.0
    %1009 = vmatpush2.msra.mxu0 0.0
    %1010 = vmatprep.subr.mxu0 0.0
    %1011 = vmatpush2.msra.mxu0 0.0
    %1012 = vmatprep.subr.mxu0 0.0
    %1013 = vmatpush2.msra.mxu0 0.0
    %1014 = vmatprep.subr.mxu0 0.0
    %1015 = vmatpush2.msra.mxu0 0.0
    %1016 = vmatprep.mubr.f32.mxu0 0.0
    %1017 = vmatmul.mubr.f32.gmra.mxu0 %v941
    %v1018 = vpop.f32.mrf.mxu0
    %v1019 = vadd.f32 0.0, %v1018
    %v1020 = vpop.f32.mrf.mxu0
    %1021 = vmatprep.mubr.f32.mxu0 0.0
    %1022 = vmatmul.mubr.f32.gmra.mxu0 %v944
    %v1023 = vpop.f32.mrf.mxu0
    %v1024 = vadd.f32 0.0, %v1023
    %v1025 = vpop.f32.mrf.mxu0
    %1026 = vmatprep.mubr.f32.mxu0 0.0
    %1027 = vmatmul.mubr.f32.gmra.mxu0 %v947
    %v1028 = vpop.f32.mrf.mxu0
    %v1029 = vadd.f32 0.0, %v1028
    %v1030 = vpop.f32.mrf.mxu0
    %1031 = vmatprep.mubr.f32.mxu0 0.0
    %1032 = vmatmul.mubr.f32.gmra.mxu0 %v950
    %v1033 = vpop.f32.mrf.mxu0
    %v1034 = vadd.f32 0.0, %v1033
    %v1035 = vpop.f32.mrf.mxu0
    %1036 = vdwg.mxu0
    %v1037 = vrcp.pop %v918
    %v1038 = vmul.f32 %v1019, %v1037
    %v1039 = vrcp.pop %v921
    %v1040 = vmul.f32 %v1024, %v1039
    %v1041 = vrcp.pop %v924
    %v1042 = vmul.f32 %v1029, %v1041
    %v1043 = vrcp.pop %v927
    %v1044 = vmul.f32 %v1034, %v1043
    %v1045 = vld [vmem:[%s4 + $0x10] sm:$0xff]
    %v1046 = vld [vmem:[%s4 + $0x18] sm:$0xff]
    %v1048 = vsel %vm510, %v1038, 0
    %v1051 = vsel %vm510, %v1040, 0
    %v1054 = vsel %vm510, %v1042, 0
    %v1057 = vsel %vm510, %v1044, 0
    %1059 = vmatprep.subr.mxu0 0.0
    %1060 = vmatpush1.msra.mxu0 0.0
    %1061 = vmatprep.subr.mxu0 0.0
    %1062 = vmatpush1.msra.mxu0 0.0
    %1063 = vmatprep.subr.mxu0 0.0
    %1064 = vmatpush1.msra.mxu0 0.0
    %1065 = vmatprep.subr.mxu0 0.0
    %1066 = vmatpush1.msra.mxu0 0.0
    %1067 = vmatprep.subr.mxu0 0.0
    %1068 = vmatpush1.msra.mxu0 0.0
    %1069 = vmatprep.subr.mxu0 0.0
    %1070 = vmatpush1.msra.mxu0 0.0
    %1071 = vmatprep.subr.mxu0 0.0
    %1072 = vmatpush1.msra.mxu0 0.0
    %1073 = vmatprep.subr.mxu0 0.0
    %1074 = vmatpush1.msra.mxu0 0.0
    %1075 = vmatprep.subr.mxu0 0.0
    %1076 = vmatpush1.msra.mxu0 0.0
    %1077 = vmatprep.subr.mxu0 0.0
    %1078 = vmatpush1.msra.mxu0 0.0
    %1079 = vmatprep.subr.mxu0 0.0
    %1080 = vmatpush1.msra.mxu0 0.0
    %1081 = vmatprep.subr.mxu0 0.0
    %1082 = vmatpush1.msra.mxu0 0.0
    %1083 = vmatprep.subr.mxu0 0.0
    %1084 = vmatpush1.msra.mxu0 0.0
    %1085 = vmatprep.subr.mxu0 0.0
    %1086 = vmatpush1.msra.mxu0 0.0
    %1087 = vmatprep.subr.mxu0 0.0
    %1088 = vmatpush1.msra.mxu0 %v1046
    %1089 = vmatprep.subr.mxu0 0.0
    %1090 = vmatpush1.msra.mxu0 %v1045
    %1091 = vmatprep.subr.mxu0 0.0
    %1092 = vmatpush2.msra.mxu0 0.0
    %1093 = vmatprep.subr.mxu0 0.0
    %1094 = vmatpush2.msra.mxu0 0.0
    %1095 = vmatprep.subr.mxu0 0.0
    %1096 = vmatpush2.msra.mxu0 0.0
    %1097 = vmatprep.subr.mxu0 0.0
    %1098 = vmatpush2.msra.mxu0 0.0
    %1099 = vmatprep.subr.mxu0 0.0
    %1100 = vmatpush2.msra.mxu0 0.0
    %1101 = vmatprep.subr.mxu0 0.0
    %1102 = vmatpush2.msra.mxu0 0.0
    %1103 = vmatprep.subr.mxu0 0.0
    %1104 = vmatpush2.msra.mxu0 0.0
    %1105 = vmatprep.subr.mxu0 0.0
    %1106 = vmatpush2.msra.mxu0 0.0
    %1107 = vmatprep.subr.mxu0 0.0
    %1108 = vmatpush2.msra.mxu0 0.0
    %1109 = vmatprep.subr.mxu0 0.0
    %1110 = vmatpush2.msra.mxu0 0.0
    %1111 = vmatprep.subr.mxu0 0.0
    %1112 = vmatpush2.msra.mxu0 0.0
    %1113 = vmatprep.subr.mxu0 0.0
    %1114 = vmatpush2.msra.mxu0 0.0
    %1115 = vmatprep.subr.mxu0 0.0
    %1116 = vmatpush2.msra.mxu0 0.0
    %1117 = vmatprep.subr.mxu0 0.0
    %1118 = vmatpush2.msra.mxu0 0.0
    %1119 = vmatprep.subr.mxu0 0.0
    %1120 = vmatpush2.msra.mxu0 0.0
    %1121 = vmatprep.subr.mxu0 0.0
    %1122 = vmatpush2.msra.mxu0 0.0
    %1123 = vmatprep.mubr.f32.mxu0 0.0
    %1124 = vmatmul.mubr.f32.gmra.mxu0 %v1048
    %v1125 = vpop.f32.mrf.mxu0
    %v1126 = vadd.f32 0.0, %v1125
    %v1127 = vpop.f32.mrf.mxu0
    %1128 = vmatprep.mubr.f32.mxu0 0.0
    %1129 = vmatmul.mubr.f32.gmra.mxu0 %v1051
    %v1130 = vpop.f32.mrf.mxu0
    %v1131 = vadd.f32 0.0, %v1130
    %v1132 = vpop.f32.mrf.mxu0
    %1133 = vmatprep.mubr.f32.mxu0 0.0
    %1134 = vmatmul.mubr.f32.gmra.mxu0 %v1054
    %v1135 = vpop.f32.mrf.mxu0
    %v1136 = vadd.f32 0.0, %v1135
    %v1137 = vpop.f32.mrf.mxu0
    %1138 = vmatprep.mubr.f32.mxu0 0.0
    %1139 = vmatmul.mubr.f32.gmra.mxu0 %v1057
    %v1140 = vpop.f32.mrf.mxu0
    %v1141 = vadd.f32 0.0, %v1140
    %v1142 = vpop.f32.mrf.mxu0
    %1143 = vdwg.mxu0
    %v1145 = vsel %vm510, %v762, 0
    %v1148 = vsel %vm510, %v764, 0
    %v1151 = vsel %vm510, %v766, 0
    %v1154 = vsel %vm510, %v768, 0
    %1156 = vmatprep.subr.mxu0 0.0
    %1157 = vmatpush1.msra.mxu0 0.0
    %1158 = vmatprep.subr.mxu0 0.0
    %1159 = vmatpush1.msra.mxu0 0.0
    %1160 = vmatprep.subr.mxu0 0.0
    %1161 = vmatpush1.msra.mxu0 0.0
    %1162 = vmatprep.subr.mxu0 0.0
    %1163 = vmatpush1.msra.mxu0 0.0
    %1164 = vmatprep.subr.mxu0 0.0
    %1165 = vmatpush1.msra.mxu0 0.0
    %1166 = vmatprep.subr.mxu0 0.0
    %1167 = vmatpush1.msra.mxu0 0.0
    %1168 = vmatprep.subr.mxu0 0.0
    %1169 = vmatpush1.msra.mxu0 0.0
    %1170 = vmatprep.subr.mxu0 0.0
    %1171 = vmatpush1.msra.mxu0 0.0
    %1172 = vmatprep.subr.mxu0 0.0
    %1173 = vmatpush1.msra.mxu0 0.0
    %1174 = vmatprep.subr.mxu0 0.0
    %1175 = vmatpush1.msra.mxu0 0.0
    %1176 = vmatprep.subr.mxu0 0.0
    %1177 = vmatpush1.msra.mxu0 0.0
    %1178 = vmatprep.subr.mxu0 0.0
    %1179 = vmatpush1.msra.mxu0 0.0
    %1180 = vmatprep.subr.mxu0 0.0
    %1181 = vmatpush1.msra.mxu0 0.0
    %1182 = vmatprep.subr.mxu0 0.0
    %1183 = vmatpush1.msra.mxu0 0.0
    %1184 = vmatprep.subr.mxu0 0.0
    %1185 = vmatpush1.msra.mxu0 %v770
    %1186 = vmatprep.subr.mxu0 0.0
    %1187 = vmatpush1.msra.mxu0 %v769
    %1188 = vmatprep.subr.mxu0 0.0
    %1189 = vmatpush2.msra.mxu0 0.0
    %1190 = vmatprep.subr.mxu0 0.0
    %1191 = vmatpush2.msra.mxu0 0.0
    %1192 = vmatprep.subr.mxu0 0.0
    %1193 = vmatpush2.msra.mxu0 0.0
    %1194 = vmatprep.subr.mxu0 0.0
    %1195 = vmatpush2.msra.mxu0 0.0
    %1196 = vmatprep.subr.mxu0 0.0
    %1197 = vmatpush2.msra.mxu0 0.0
    %1198 = vmatprep.subr.mxu0 0.0
    %1199 = vmatpush2.msra.mxu0 0.0
    %1200 = vmatprep.subr.mxu0 0.0
    %1201 = vmatpush2.msra.mxu0 0.0
    %1202 = vmatprep.subr.mxu0 0.0
    %1203 = vmatpush2.msra.mxu0 0.0
    %1204 = vmatprep.subr.mxu0 0.0
    %1205 = vmatpush2.msra.mxu0 0.0
    %1206 = vmatprep.subr.mxu0 0.0
    %1207 = vmatpush2.msra.mxu0 0.0
    %1208 = vmatprep.subr.mxu0 0.0
    %1209 = vmatpush2.msra.mxu0 0.0
    %1210 = vmatprep.subr.mxu0 0.0
    %1211 = vmatpush2.msra.mxu0 0.0
    %1212 = vmatprep.subr.mxu0 0.0
    %1213 = vmatpush2.msra.mxu0 0.0
    %1214 = vmatprep.subr.mxu0 0.0
    %1215 = vmatpush2.msra.mxu0 0.0
    %1216 = vmatprep.subr.mxu0 0.0
    %1217 = vmatpush2.msra.mxu0 0.0
    %1218 = vmatprep.subr.mxu0 0.0
    %1219 = vmatpush2.msra.mxu0 0.0
    %1220 = vmatprep.mubr.f32.mxu0 0.0
    %1221 = vmatmul.mubr.f32.gmra.mxu0 %v1145
    %v1222 = vpop.f32.mrf.mxu0
    %v1223 = vadd.f32 %v1126, %v1222
    %v1224 = vpop.f32.mrf.mxu0
    %1225 = vmatprep.mubr.f32.mxu0 0.0
    %1226 = vmatmul.mubr.f32.gmra.mxu0 %v1148
    %v1227 = vpop.f32.mrf.mxu0
    %v1228 = vadd.f32 %v1131, %v1227
    %v1229 = vpop.f32.mrf.mxu0
    %1230 = vmatprep.mubr.f32.mxu0 0.0
    %1231 = vmatmul.mubr.f32.gmra.mxu0 %v1151
    %v1232 = vpop.f32.mrf.mxu0
    %v1233 = vadd.f32 %v1136, %v1232
    %v1234 = vpop.f32.mrf.mxu0
    %1235 = vmatprep.mubr.f32.mxu0 0.0
    %1236 = vmatmul.mubr.f32.gmra.mxu0 %v1154
    %v1237 = vpop.f32.mrf.mxu0
    %v1238 = vadd.f32 %v1141, %v1237
    %v1239 = vpop.f32.mrf.mxu0
    %1240 = vdwg.mxu0
    %1245 = vrot.lane.b32.xlu0 %v480, 96
    %v1246 = vpop.permute.xlu0 %1245
    %1247 = vrot.lane.b32.xlu0 %v485, 96
    %v1248 = vpop.permute.xlu0 %1247
    %1249 = vrot.lane.b32.xlu0 %v490, 96
    %v1250 = vpop.permute.xlu0 %1249
    %1251 = vrot.lane.b32.xlu0 %v495, 96
    %v1252 = vpop.permute.xlu0 %1251
    %v1253 = vsel %vm510, %v480, 0
    %v1255 = vsel %vm510, %v485, 0
    %v1257 = vsel %vm510, %v490, 0
    %v1259 = vsel %vm510, %v495, 0
    %v1261 = vsel %vm510, %v1246, 0
    %v1263 = vsel %vm510, %v1248, 0
    %v1265 = vsel %vm510, %v1250, 0
    %v1267 = vsel %vm510, %v1252, 0
    %1269 = vmatprep.subr.mxu0 0.0
    %1270 = vmatpush1.xpose.msra.mxu0 0.0
    %1271 = vmatprep.subr.mxu0 0.0
    %1272 = vmatpush1.xpose.msra.mxu0 0.0
    %1273 = vmatprep.subr.mxu0 0.0
    %1274 = vmatpush1.xpose.msra.mxu0 0.0
    %1275 = vmatprep.subr.mxu0 0.0
    %1276 = vmatpush1.xpose.msra.mxu0 0.0
    %1277 = vmatprep.subr.mxu0 0.0
    %1278 = vmatpush1.xpose.msra.mxu0 0.0
    %1279 = vmatprep.subr.mxu0 0.0
    %1280 = vmatpush1.xpose.msra.mxu0 0.0
    %1281 = vmatprep.subr.mxu0 0.0
    %1282 = vmatpush1.xpose.msra.mxu0 0.0
    %1283 = vmatprep.subr.mxu0 0.0
    %1284 = vmatpush1.xpose.msra.mxu0 0.0
    %1285 = vmatprep.subr.mxu0 0.0
    %1286 = vmatpush1.xpose.msra.mxu0 0.0
    %1287 = vmatprep.subr.mxu0 0.0
    %1288 = vmatpush1.xpose.msra.mxu0 0.0
    %1289 = vmatprep.subr.mxu0 0.0
    %1290 = vmatpush1.xpose.msra.mxu0 0.0
    %1291 = vmatprep.subr.mxu0 0.0
    %1292 = vmatpush1.xpose.msra.mxu0 0.0
    %1293 = vmatprep.subr.mxu0 0.0
    %1294 = vmatpush1.xpose.msra.mxu0 %v1267
    %1295 = vmatprep.subr.mxu0 0.0
    %1296 = vmatpush1.xpose.msra.mxu0 %v1265
    %1297 = vmatprep.subr.mxu0 0.0
    %1298 = vmatpush1.xpose.msra.mxu0 %v1263
    %1299 = vmatprep.subr.mxu0 0.0
    %1300 = vmatpush1.xpose.msra.mxu0 %v1261
    %1301 = vmatprep.subr.mxu0 0.0
    %1302 = vmatpush2.xpose.msra.mxu0 0.0
    %1303 = vmatprep.subr.mxu0 0.0
    %1304 = vmatpush2.xpose.msra.mxu0 0.0
    %1305 = vmatprep.subr.mxu0 0.0
    %1306 = vmatpush2.xpose.msra.mxu0 0.0
    %1307 = vmatprep.subr.mxu0 0.0
    %1308 = vmatpush2.xpose.msra.mxu0 0.0
    %1309 = vmatprep.subr.mxu0 0.0
    %1310 = vmatpush2.xpose.msra.mxu0 0.0
    %1311 = vmatprep.subr.mxu0 0.0
    %1312 = vmatpush2.xpose.msra.mxu0 0.0
    %1313 = vmatprep.subr.mxu0 0.0
    %1314 = vmatpush2.xpose.msra.mxu0 0.0
    %1315 = vmatprep.subr.mxu0 0.0
    %1316 = vmatpush2.xpose.msra.mxu0 0.0
    %1317 = vmatprep.subr.mxu0 0.0
    %1318 = vmatpush2.xpose.msra.mxu0 0.0
    %1319 = vmatprep.subr.mxu0 0.0
    %1320 = vmatpush2.xpose.msra.mxu0 0.0
    %1321 = vmatprep.subr.mxu0 0.0
    %1322 = vmatpush2.xpose.msra.mxu0 0.0
    %1323 = vmatprep.subr.mxu0 0.0
    %1324 = vmatpush2.xpose.msra.mxu0 0.0
    %1325 = vmatprep.subr.mxu0 0.0
    %1326 = vmatpush2.xpose.msra.mxu0 0.0
    %1327 = vmatprep.subr.mxu0 0.0
    %1328 = vmatpush2.xpose.msra.mxu0 0.0
    %1329 = vmatprep.subr.mxu0 0.0
    %1330 = vmatpush2.xpose.msra.mxu0 0.0
    %1331 = vmatprep.subr.mxu0 0.0
    %1332 = vmatpush2.xpose.msra.mxu0 0.0
    %1333 = vmatprep.mubr.f32.mxu0 0.0
    %1334 = vmatmul.mubr.f32.gmra.mxu0 %v1253
    %v1335 = vpop.f32.mrf.mxu0
    %v1336 = vadd.f32 0.0, %v1335
    %v1337 = vpop.f32.mrf.mxu0
    %1338 = vmatprep.mubr.f32.mxu0 0.0
    %1339 = vmatmul.mubr.f32.gmra.mxu0 %v1255
    %v1340 = vpop.f32.mrf.mxu0
    %v1341 = vadd.f32 0.0, %v1340
    %v1342 = vpop.f32.mrf.mxu0
    %1343 = vmatprep.mubr.f32.mxu0 0.0
    %1344 = vmatmul.mubr.f32.gmra.mxu0 %v1257
    %v1345 = vpop.f32.mrf.mxu0
    %v1346 = vadd.f32 0.0, %v1345
    %v1347 = vpop.f32.mrf.mxu0
    %1348 = vmatprep.mubr.f32.mxu0 0.0
    %1349 = vmatmul.mubr.f32.gmra.mxu0 %v1259
    %v1350 = vpop.f32.mrf.mxu0
    %v1351 = vadd.f32 0.0, %v1350
    %v1352 = vpop.f32.mrf.mxu0
    %1353 = vdwg.mxu0
    %v1354 = vsel %vm224, %v1336, -1e+30
    %v1355 = vsel %vm225, %v1341, -1e+30
    %v1356 = vsel %vm226, %v1346, -1e+30
    %v1357 = vsel %vm227, %v1351, -1e+30
    %v1358 = vsel %vm235, %v1354, -inf
    %1359 = vmax.xlane.f32.xlu0 %v1358
    %v1360 = vpop.xlane.xlu0 %1359
    %v1361 = vsel %vm235, %v1355, -inf
    %1362 = vmax.xlane.f32.xlu0 %v1361
    %v1363 = vpop.xlane.xlu0 %1362
    %v1364 = vsel %vm235, %v1356, -inf
    %1365 = vmax.xlane.f32.xlu0 %v1364
    %v1366 = vpop.xlane.xlu0 %1365
    %v1367 = vsel %vm235, %v1357, -inf
    %1368 = vmax.xlane.f32.xlu0 %v1367
    %v1369 = vpop.xlane.xlu0 %1368
    %v1370 = vsub.f32 %v1354, %v1360
    %v1371 = vsub.f32 %v1355, %v1363
    %v1372 = vsub.f32 %v1356, %v1366
    %v1373 = vsub.f32 %v1357, %v1369
    %v1374 = vmul.f32 %v1370, 1.442695
    %v1375 = vpow.pop %v1374
    %v1376 = vmul.f32 %v1371, 1.442695
    %v1377 = vpow.pop %v1376
    %v1378 = vmul.f32 %v1372, 1.442695
    %v1379 = vpow.pop %v1378
    %v1380 = vmul.f32 %v1373, 1.442695
    %v1381 = vpow.pop %v1380
    %v1382 = vsel %vm235, %v1375, 0.0
    %1383 = vadd.xlane.f32.xlu0 %v1382
    %v1384 = vpop.xlane.xlu0 %1383
    %v1385 = vsel %vm235, %v1377, 0.0
    %1386 = vadd.xlane.f32.xlu0 %v1385
    %v1387 = vpop.xlane.xlu0 %1386
    %v1388 = vsel %vm235, %v1379, 0.0
    %1389 = vadd.xlane.f32.xlu0 %v1388
    %v1390 = vpop.xlane.xlu0 %1389
    %v1391 = vsel %vm235, %v1381, 0.0
    %1392 = vadd.xlane.f32.xlu0 %v1391
    %v1393 = vpop.xlane.xlu0 %1392
    %1394 = vrot.lane.b32.xlu0 %v480, 64
    %v1395 = vpop.permute.xlu0 %1394
    %1396 = vrot.lane.b32.xlu0 %v485, 64
    %v1397 = vpop.permute.xlu0 %1396
    %1398 = vrot.lane.b32.xlu0 %v490, 64
    %v1399 = vpop.permute.xlu0 %1398
    %1400 = vrot.lane.b32.xlu0 %v495, 64
    %v1401 = vpop.permute.xlu0 %1400
    %v1407 = vsel %vm235, %v1375, 0
    %v1410 = vsel %vm235, %v1377, 0
    %v1413 = vsel %vm235, %v1379, 0
    %v1416 = vsel %vm235, %v1381, 0
    %1418 = vmatprep.subr.mxu0 0.0
    %1419 = vmatpush1.msra.mxu0 0.0
    %1420 = vmatprep.subr.mxu0 0.0
    %1421 = vmatpush1.msra.mxu0 0.0
    %1422 = vmatprep.subr.mxu0 0.0
    %1423 = vmatpush1.msra.mxu0 0.0
    %1424 = vmatprep.subr.mxu0 0.0
    %1425 = vmatpush1.msra.mxu0 0.0
    %1426 = vmatprep.subr.mxu0 0.0
    %1427 = vmatpush1.msra.mxu0 0.0
    %1428 = vmatprep.subr.mxu0 0.0
    %1429 = vmatpush1.msra.mxu0 0.0
    %1430 = vmatprep.subr.mxu0 0.0
    %1431 = vmatpush1.msra.mxu0 0.0
    %1432 = vmatprep.subr.mxu0 0.0
    %1433 = vmatpush1.msra.mxu0 0.0
    %1434 = vmatprep.subr.mxu0 0.0
    %1435 = vmatpush1.msra.mxu0 0.0
    %1436 = vmatprep.subr.mxu0 0.0
    %1437 = vmatpush1.msra.mxu0 0.0
    %1438 = vmatprep.subr.mxu0 0.0
    %1439 = vmatpush1.msra.mxu0 0.0
    %1440 = vmatprep.subr.mxu0 0.0
    %1441 = vmatpush1.msra.mxu0 0.0
    %1442 = vmatprep.subr.mxu0 0.0
    %1443 = vmatpush1.msra.mxu0 %v1401
    %1444 = vmatprep.subr.mxu0 0.0
    %1445 = vmatpush1.msra.mxu0 %v1399
    %1446 = vmatprep.subr.mxu0 0.0
    %1447 = vmatpush1.msra.mxu0 %v1397
    %1448 = vmatprep.subr.mxu0 0.0
    %1449 = vmatpush1.msra.mxu0 %v1395
    %1450 = vmatprep.subr.mxu0 0.0
    %1451 = vmatpush2.msra.mxu0 0.0
    %1452 = vmatprep.subr.mxu0 0.0
    %1453 = vmatpush2.msra.mxu0 0.0
    %1454 = vmatprep.subr.mxu0 0.0
    %1455 = vmatpush2.msra.mxu0 0.0
    %1456 = vmatprep.subr.mxu0 0.0
    %1457 = vmatpush2.msra.mxu0 0.0
    %1458 = vmatprep.subr.mxu0 0.0
    %1459 = vmatpush2.msra.mxu0 0.0
    %1460 = vmatprep.subr.mxu0 0.0
    %1461 = vmatpush2.msra.mxu0 0.0
    %1462 = vmatprep.subr.mxu0 0.0
    %1463 = vmatpush2.msra.mxu0 0.0
    %1464 = vmatprep.subr.mxu0 0.0
    %1465 = vmatpush2.msra.mxu0 0.0
    %1466 = vmatprep.subr.mxu0 0.0
    %1467 = vmatpush2.msra.mxu0 0.0
    %1468 = vmatprep.subr.mxu0 0.0
    %1469 = vmatpush2.msra.mxu0 0.0
    %1470 = vmatprep.subr.mxu0 0.0
    %1471 = vmatpush2.msra.mxu0 0.0
    %1472 = vmatprep.subr.mxu0 0.0
    %1473 = vmatpush2.msra.mxu0 0.0
    %1474 = vmatprep.subr.mxu0 0.0
    %1475 = vmatpush2.msra.mxu0 0.0
    %1476 = vmatprep.subr.mxu0 0.0
    %1477 = vmatpush2.msra.mxu0 0.0
    %1478 = vmatprep.subr.mxu0 0.0
    %1479 = vmatpush2.msra.mxu0 0.0
    %1480 = vmatprep.subr.mxu0 0.0
    %1481 = vmatpush2.msra.mxu0 0.0
    %1482 = vmatprep.mubr.f32.mxu0 0.0
    %1483 = vmatmul.mubr.f32.gmra.mxu0 %v1407
    %v1484 = vpop.f32.mrf.mxu0
    %v1485 = vadd.f32 0.0, %v1484
    %v1486 = vpop.f32.mrf.mxu0
    %1487 = vmatprep.mubr.f32.mxu0 0.0
    %1488 = vmatmul.mubr.f32.gmra.mxu0 %v1410
    %v1489 = vpop.f32.mrf.mxu0
    %v1490 = vadd.f32 0.0, %v1489
    %v1491 = vpop.f32.mrf.mxu0
    %1492 = vmatprep.mubr.f32.mxu0 0.0
    %1493 = vmatmul.mubr.f32.gmra.mxu0 %v1413
    %v1494 = vpop.f32.mrf.mxu0
    %v1495 = vadd.f32 0.0, %v1494
    %v1496 = vpop.f32.mrf.mxu0
    %1497 = vmatprep.mubr.f32.mxu0 0.0
    %1498 = vmatmul.mubr.f32.gmra.mxu0 %v1416
    %v1499 = vpop.f32.mrf.mxu0
    %v1500 = vadd.f32 0.0, %v1499
    %v1501 = vpop.f32.mrf.mxu0
    %1502 = vdwg.mxu0
    %v1503 = vrcp.pop %v1384
    %v1504 = vmul.f32 %v1485, %v1503
    %v1505 = vrcp.pop %v1387
    %v1506 = vmul.f32 %v1490, %v1505
    %v1507 = vrcp.pop %v1390
    %v1508 = vmul.f32 %v1495, %v1507
    %v1509 = vrcp.pop %v1393
    %v1510 = vmul.f32 %v1500, %v1509
    %1511 = vrot.lane.b32.xlu0 %v480, 112
    %v1512 = vpop.permute.xlu0 %1511
    %1513 = vrot.lane.b32.xlu0 %v485, 112
    %v1514 = vpop.permute.xlu0 %1513
    %1515 = vrot.lane.b32.xlu0 %v490, 112
    %v1516 = vpop.permute.xlu0 %1515
    %1517 = vrot.lane.b32.xlu0 %v495, 112
    %v1518 = vpop.permute.xlu0 %1517
    %1519 = vrot.lane.b32.xlu0 %v480, 80
    %v1520 = vpop.permute.xlu0 %1519
    %1521 = vrot.lane.b32.xlu0 %v485, 80
    %v1522 = vpop.permute.xlu0 %1521
    %1523 = vrot.lane.b32.xlu0 %v490, 80
    %v1524 = vpop.permute.xlu0 %1523
    %1525 = vrot.lane.b32.xlu0 %v495, 80
    %v1526 = vpop.permute.xlu0 %1525
    %v1527 = vsel %vm510, %v1512, 0
    %v1529 = vsel %vm510, %v1514, 0
    %v1531 = vsel %vm510, %v1516, 0
    %v1533 = vsel %vm510, %v1518, 0
    %v1535 = vsel %vm510, %v1520, 0
    %v1537 = vsel %vm510, %v1522, 0
    %v1539 = vsel %vm510, %v1524, 0
    %v1541 = vsel %vm510, %v1526, 0
    %1543 = vmatprep.subr.mxu0 0.0
    %1544 = vmatpush1.xpose.msra.mxu0 0.0
    %1545 = vmatprep.subr.mxu0 0.0
    %1546 = vmatpush1.xpose.msra.mxu0 0.0
    %1547 = vmatprep.subr.mxu0 0.0
    %1548 = vmatpush1.xpose.msra.mxu0 0.0
    %1549 = vmatprep.subr.mxu0 0.0
    %1550 = vmatpush1.xpose.msra.mxu0 0.0
    %1551 = vmatprep.subr.mxu0 0.0
    %1552 = vmatpush1.xpose.msra.mxu0 0.0
    %1553 = vmatprep.subr.mxu0 0.0
    %1554 = vmatpush1.xpose.msra.mxu0 0.0
    %1555 = vmatprep.subr.mxu0 0.0
    %1556 = vmatpush1.xpose.msra.mxu0 0.0
    %1557 = vmatprep.subr.mxu0 0.0
    %1558 = vmatpush1.xpose.msra.mxu0 0.0
    %1559 = vmatprep.subr.mxu0 0.0
    %1560 = vmatpush1.xpose.msra.mxu0 0.0
    %1561 = vmatprep.subr.mxu0 0.0
    %1562 = vmatpush1.xpose.msra.mxu0 0.0
    %1563 = vmatprep.subr.mxu0 0.0
    %1564 = vmatpush1.xpose.msra.mxu0 0.0
    %1565 = vmatprep.subr.mxu0 0.0
    %1566 = vmatpush1.xpose.msra.mxu0 0.0
    %1567 = vmatprep.subr.mxu0 0.0
    %1568 = vmatpush1.xpose.msra.mxu0 %v1541
    %1569 = vmatprep.subr.mxu0 0.0
    %1570 = vmatpush1.xpose.msra.mxu0 %v1539
    %1571 = vmatprep.subr.mxu0 0.0
    %1572 = vmatpush1.xpose.msra.mxu0 %v1537
    %1573 = vmatprep.subr.mxu0 0.0
    %1574 = vmatpush1.xpose.msra.mxu0 %v1535
    %1575 = vmatprep.subr.mxu0 0.0
    %1576 = vmatpush2.xpose.msra.mxu0 0.0
    %1577 = vmatprep.subr.mxu0 0.0
    %1578 = vmatpush2.xpose.msra.mxu0 0.0
    %1579 = vmatprep.subr.mxu0 0.0
    %1580 = vmatpush2.xpose.msra.mxu0 0.0
    %1581 = vmatprep.subr.mxu0 0.0
    %1582 = vmatpush2.xpose.msra.mxu0 0.0
    %1583 = vmatprep.subr.mxu0 0.0
    %1584 = vmatpush2.xpose.msra.mxu0 0.0
    %1585 = vmatprep.subr.mxu0 0.0
    %1586 = vmatpush2.xpose.msra.mxu0 0.0
    %1587 = vmatprep.subr.mxu0 0.0
    %1588 = vmatpush2.xpose.msra.mxu0 0.0
    %1589 = vmatprep.subr.mxu0 0.0
    %1590 = vmatpush2.xpose.msra.mxu0 0.0
    %1591 = vmatprep.subr.mxu0 0.0
    %1592 = vmatpush2.xpose.msra.mxu0 0.0
    %1593 = vmatprep.subr.mxu0 0.0
    %1594 = vmatpush2.xpose.msra.mxu0 0.0
    %1595 = vmatprep.subr.mxu0 0.0
    %1596 = vmatpush2.xpose.msra.mxu0 0.0
    %1597 = vmatprep.subr.mxu0 0.0
    %1598 = vmatpush2.xpose.msra.mxu0 0.0
    %1599 = vmatprep.subr.mxu0 0.0
    %1600 = vmatpush2.xpose.msra.mxu0 0.0
    %1601 = vmatprep.subr.mxu0 0.0
    %1602 = vmatpush2.xpose.msra.mxu0 0.0
    %1603 = vmatprep.subr.mxu0 0.0
    %1604 = vmatpush2.xpose.msra.mxu0 0.0
    %1605 = vmatprep.subr.mxu0 0.0
    %1606 = vmatpush2.xpose.msra.mxu0 0.0
    %1607 = vmatprep.mubr.f32.mxu0 0.0
    %1608 = vmatmul.mubr.f32.gmra.mxu0 %v1527
    %v1609 = vpop.f32.mrf.mxu0
    %v1610 = vadd.f32 0.0, %v1609
    %v1611 = vpop.f32.mrf.mxu0
    %1612 = vmatprep.mubr.f32.mxu0 0.0
    %1613 = vmatmul.mubr.f32.gmra.mxu0 %v1529
    %v1614 = vpop.f32.mrf.mxu0
    %v1615 = vadd.f32 0.0, %v1614
    %v1616 = vpop.f32.mrf.mxu0
    %1617 = vmatprep.mubr.f32.mxu0 0.0
    %1618 = vmatmul.mubr.f32.gmra.mxu0 %v1531
    %v1619 = vpop.f32.mrf.mxu0
    %v1620 = vadd.f32 0.0, %v1619
    %v1621 = vpop.f32.mrf.mxu0
    %1622 = vmatprep.mubr.f32.mxu0 0.0
    %1623 = vmatmul.mubr.f32.gmra.mxu0 %v1533
    %v1624 = vpop.f32.mrf.mxu0
    %v1625 = vadd.f32 0.0, %v1624
    %v1626 = vpop.f32.mrf.mxu0
    %1627 = vdwg.mxu0
    %v1628 = vsel %vm224, %v1610, -1e+30
    %v1629 = vsel %vm225, %v1615, -1e+30
    %v1630 = vsel %vm226, %v1620, -1e+30
    %v1631 = vsel %vm227, %v1625, -1e+30
    %v1632 = vsel %vm235, %v1628, -inf
    %1633 = vmax.xlane.f32.xlu0 %v1632
    %v1634 = vpop.xlane.xlu0 %1633
    %v1635 = vsel %vm235, %v1629, -inf
    %1636 = vmax.xlane.f32.xlu0 %v1635
    %v1637 = vpop.xlane.xlu0 %1636
    %v1638 = vsel %vm235, %v1630, -inf
    %1639 = vmax.xlane.f32.xlu0 %v1638
    %v1640 = vpop.xlane.xlu0 %1639
    %v1641 = vsel %vm235, %v1631, -inf
    %1642 = vmax.xlane.f32.xlu0 %v1641
    %v1643 = vpop.xlane.xlu0 %1642
    %v1644 = vsub.f32 %v1628, %v1634
    %v1645 = vsub.f32 %v1629, %v1637
    %v1646 = vsub.f32 %v1630, %v1640
    %v1647 = vsub.f32 %v1631, %v1643
    %v1648 = vmul.f32 %v1644, 1.442695
    %v1649 = vpow.pop %v1648
    %v1650 = vmul.f32 %v1645, 1.442695
    %v1651 = vpow.pop %v1650
    %v1652 = vmul.f32 %v1646, 1.442695
    %v1653 = vpow.pop %v1652
    %v1654 = vmul.f32 %v1647, 1.442695
    %v1655 = vpow.pop %v1654
    %v1656 = vsel %vm235, %v1649, 0.0
    %1657 = vadd.xlane.f32.xlu0 %v1656
    %v1658 = vpop.xlane.xlu0 %1657
    %v1659 = vsel %vm235, %v1651, 0.0
    %1660 = vadd.xlane.f32.xlu0 %v1659
    %v1661 = vpop.xlane.xlu0 %1660
    %v1662 = vsel %vm235, %v1653, 0.0
    %1663 = vadd.xlane.f32.xlu0 %v1662
    %v1664 = vpop.xlane.xlu0 %1663
    %v1665 = vsel %vm235, %v1655, 0.0
    %1666 = vadd.xlane.f32.xlu0 %v1665
    %v1667 = vpop.xlane.xlu0 %1666
    %1668 = vrot.lane.b32.xlu0 %v480, 48
    %v1669 = vpop.permute.xlu0 %1668
    %1670 = vrot.lane.b32.xlu0 %v485, 48
    %v1671 = vpop.permute.xlu0 %1670
    %1672 = vrot.lane.b32.xlu0 %v490, 48
    %v1673 = vpop.permute.xlu0 %1672
    %1674 = vrot.lane.b32.xlu0 %v495, 48
    %v1675 = vpop.permute.xlu0 %1674
    %v1681 = vsel %vm235, %v1649, 0
    %v1684 = vsel %vm235, %v1651, 0
    %v1687 = vsel %vm235, %v1653, 0
    %v1690 = vsel %vm235, %v1655, 0
    %1692 = vmatprep.subr.mxu0 0.0
    %1693 = vmatpush1.msra.mxu0 0.0
    %1694 = vmatprep.subr.mxu0 0.0
    %1695 = vmatpush1.msra.mxu0 0.0
    %1696 = vmatprep.subr.mxu0 0.0
    %1697 = vmatpush1.msra.mxu0 0.0
    %1698 = vmatprep.subr.mxu0 0.0
    %1699 = vmatpush1.msra.mxu0 0.0
    %1700 = vmatprep.subr.mxu0 0.0
    %1701 = vmatpush1.msra.mxu0 0.0
    %1702 = vmatprep.subr.mxu0 0.0
    %1703 = vmatpush1.msra.mxu0 0.0
    %1704 = vmatprep.subr.mxu0 0.0
    %1705 = vmatpush1.msra.mxu0 0.0
    %1706 = vmatprep.subr.mxu0 0.0
    %1707 = vmatpush1.msra.mxu0 0.0
    %1708 = vmatprep.subr.mxu0 0.0
    %1709 = vmatpush1.msra.mxu0 0.0
    %1710 = vmatprep.subr.mxu0 0.0
    %1711 = vmatpush1.msra.mxu0 0.0
    %1712 = vmatprep.subr.mxu0 0.0
    %1713 = vmatpush1.msra.mxu0 0.0
    %1714 = vmatprep.subr.mxu0 0.0
    %1715 = vmatpush1.msra.mxu0 0.0
    %1716 = vmatprep.subr.mxu0 0.0
    %1717 = vmatpush1.msra.mxu0 %v1675
    %1718 = vmatprep.subr.mxu0 0.0
    %1719 = vmatpush1.msra.mxu0 %v1673
    %1720 = vmatprep.subr.mxu0 0.0
    %1721 = vmatpush1.msra.mxu0 %v1671
    %1722 = vmatprep.subr.mxu0 0.0
    %1723 = vmatpush1.msra.mxu0 %v1669
    %1724 = vmatprep.subr.mxu0 0.0
    %1725 = vmatpush2.msra.mxu0 0.0
    %1726 = vmatprep.subr.mxu0 0.0
    %1727 = vmatpush2.msra.mxu0 0.0
    %1728 = vmatprep.subr.mxu0 0.0
    %1729 = vmatpush2.msra.mxu0 0.0
    %1730 = vmatprep.subr.mxu0 0.0
    %1731 = vmatpush2.msra.mxu0 0.0
    %1732 = vmatprep.subr.mxu0 0.0
    %1733 = vmatpush2.msra.mxu0 0.0
    %1734 = vmatprep.subr.mxu0 0.0
    %1735 = vmatpush2.msra.mxu0 0.0
    %1736 = vmatprep.subr.mxu0 0.0
    %1737 = vmatpush2.msra.mxu0 0.0
    %1738 = vmatprep.subr.mxu0 0.0
    %1739 = vmatpush2.msra.mxu0 0.0
    %1740 = vmatprep.subr.mxu0 0.0
    %1741 = vmatpush2.msra.mxu0 0.0
    %1742 = vmatprep.subr.mxu0 0.0
    %1743 = vmatpush2.msra.mxu0 0.0
    %1744 = vmatprep.subr.mxu0 0.0
    %1745 = vmatpush2.msra.mxu0 0.0
    %1746 = vmatprep.subr.mxu0 0.0
    %1747 = vmatpush2.msra.mxu0 0.0
    %1748 = vmatprep.subr.mxu0 0.0
    %1749 = vmatpush2.msra.mxu0 0.0
    %1750 = vmatprep.subr.mxu0 0.0
    %1751 = vmatpush2.msra.mxu0 0.0
    %1752 = vmatprep.subr.mxu0 0.0
    %1753 = vmatpush2.msra.mxu0 0.0
    %1754 = vmatprep.subr.mxu0 0.0
    %1755 = vmatpush2.msra.mxu0 0.0
    %1756 = vmatprep.mubr.f32.mxu0 0.0
    %1757 = vmatmul.mubr.f32.gmra.mxu0 %v1681
    %v1758 = vpop.f32.mrf.mxu0
    %v1759 = vadd.f32 0.0, %v1758
    %v1760 = vpop.f32.mrf.mxu0
    %1761 = vmatprep.mubr.f32.mxu0 0.0
    %1762 = vmatmul.mubr.f32.gmra.mxu0 %v1684
    %v1763 = vpop.f32.mrf.mxu0
    %v1764 = vadd.f32 0.0, %v1763
    %v1765 = vpop.f32.mrf.mxu0
    %1766 = vmatprep.mubr.f32.mxu0 0.0
    %1767 = vmatmul.mubr.f32.gmra.mxu0 %v1687
    %v1768 = vpop.f32.mrf.mxu0
    %v1769 = vadd.f32 0.0, %v1768
    %v1770 = vpop.f32.mrf.mxu0
    %1771 = vmatprep.mubr.f32.mxu0 0.0
    %1772 = vmatmul.mubr.f32.gmra.mxu0 %v1690
    %v1773 = vpop.f32.mrf.mxu0
    %v1774 = vadd.f32 0.0, %v1773
    %v1775 = vpop.f32.mrf.mxu0
    %1776 = vdwg.mxu0
    %v1777 = vrcp.pop %v1658
    %v1778 = vmul.f32 %v1759, %v1777
    %v1779 = vrcp.pop %v1661
    %v1780 = vmul.f32 %v1764, %v1779
    %v1781 = vrcp.pop %v1664
    %v1782 = vmul.f32 %v1769, %v1781
    %v1783 = vrcp.pop %v1667
    %v1784 = vmul.f32 %v1774, %v1783
    %v1786 = vsel %vm510, %v1778, 0
    %v1789 = vsel %vm510, %v1780, 0
    %v1792 = vsel %vm510, %v1782, 0
    %v1795 = vsel %vm510, %v1784, 0
    %1797 = vmatprep.subr.mxu0 0.0
    %1798 = vmatpush1.msra.mxu0 0.0
    %1799 = vmatprep.subr.mxu0 0.0
    %1800 = vmatpush1.msra.mxu0 0.0
    %1801 = vmatprep.subr.mxu0 0.0
    %1802 = vmatpush1.msra.mxu0 0.0
    %1803 = vmatprep.subr.mxu0 0.0
    %1804 = vmatpush1.msra.mxu0 0.0
    %1805 = vmatprep.subr.mxu0 0.0
    %1806 = vmatpush1.msra.mxu0 0.0
    %1807 = vmatprep.subr.mxu0 0.0
    %1808 = vmatpush1.msra.mxu0 0.0
    %1809 = vmatprep.subr.mxu0 0.0
    %1810 = vmatpush1.msra.mxu0 0.0
    %1811 = vmatprep.subr.mxu0 0.0
    %1812 = vmatpush1.msra.mxu0 0.0
    %1813 = vmatprep.subr.mxu0 0.0
    %1814 = vmatpush1.msra.mxu0 0.0
    %1815 = vmatprep.subr.mxu0 0.0
    %1816 = vmatpush1.msra.mxu0 0.0
    %1817 = vmatprep.subr.mxu0 0.0
    %1818 = vmatpush1.msra.mxu0 0.0
    %1819 = vmatprep.subr.mxu0 0.0
    %1820 = vmatpush1.msra.mxu0 0.0
    %1821 = vmatprep.subr.mxu0 0.0
    %1822 = vmatpush1.msra.mxu0 0.0
    %1823 = vmatprep.subr.mxu0 0.0
    %1824 = vmatpush1.msra.mxu0 0.0
    %1825 = vmatprep.subr.mxu0 0.0
    %1826 = vmatpush1.msra.mxu0 %v1046
    %1827 = vmatprep.subr.mxu0 0.0
    %1828 = vmatpush1.msra.mxu0 %v1045
    %1829 = vmatprep.subr.mxu0 0.0
    %1830 = vmatpush2.msra.mxu0 0.0
    %1831 = vmatprep.subr.mxu0 0.0
    %1832 = vmatpush2.msra.mxu0 0.0
    %1833 = vmatprep.subr.mxu0 0.0
    %1834 = vmatpush2.msra.mxu0 0.0
    %1835 = vmatprep.subr.mxu0 0.0
    %1836 = vmatpush2.msra.mxu0 0.0
    %1837 = vmatprep.subr.mxu0 0.0
    %1838 = vmatpush2.msra.mxu0 0.0
    %1839 = vmatprep.subr.mxu0 0.0
    %1840 = vmatpush2.msra.mxu0 0.0
    %1841 = vmatprep.subr.mxu0 0.0
    %1842 = vmatpush2.msra.mxu0 0.0
    %1843 = vmatprep.subr.mxu0 0.0
    %1844 = vmatpush2.msra.mxu0 0.0
    %1845 = vmatprep.subr.mxu0 0.0
    %1846 = vmatpush2.msra.mxu0 0.0
    %1847 = vmatprep.subr.mxu0 0.0
    %1848 = vmatpush2.msra.mxu0 0.0
    %1849 = vmatprep.subr.mxu0 0.0
    %1850 = vmatpush2.msra.mxu0 0.0
    %1851 = vmatprep.subr.mxu0 0.0
    %1852 = vmatpush2.msra.mxu0 0.0
    %1853 = vmatprep.subr.mxu0 0.0
    %1854 = vmatpush2.msra.mxu0 0.0
    %1855 = vmatprep.subr.mxu0 0.0
    %1856 = vmatpush2.msra.mxu0 0.0
    %1857 = vmatprep.subr.mxu0 0.0
    %1858 = vmatpush2.msra.mxu0 0.0
    %1859 = vmatprep.subr.mxu0 0.0
    %1860 = vmatpush2.msra.mxu0 0.0
    %1861 = vmatprep.mubr.f32.mxu0 0.0
    %1862 = vmatmul.mubr.f32.gmra.mxu0 %v1786
    %v1863 = vpop.f32.mrf.mxu0
    %v1864 = vadd.f32 0.0, %v1863
    %v1865 = vpop.f32.mrf.mxu0
    %1866 = vmatprep.mubr.f32.mxu0 0.0
    %1867 = vmatmul.mubr.f32.gmra.mxu0 %v1789
    %v1868 = vpop.f32.mrf.mxu0
    %v1869 = vadd.f32 0.0, %v1868
    %v1870 = vpop.f32.mrf.mxu0
    %1871 = vmatprep.mubr.f32.mxu0 0.0
    %1872 = vmatmul.mubr.f32.gmra.mxu0 %v1792
    %v1873 = vpop.f32.mrf.mxu0
    %v1874 = vadd.f32 0.0, %v1873
    %v1875 = vpop.f32.mrf.mxu0
    %1876 = vmatprep.mubr.f32.mxu0 0.0
    %1877 = vmatmul.mubr.f32.gmra.mxu0 %v1795
    %v1878 = vpop.f32.mrf.mxu0
    %v1879 = vadd.f32 0.0, %v1878
    %v1880 = vpop.f32.mrf.mxu0
    %1881 = vdwg.mxu0
    %v1883 = vsel %vm510, %v1504, 0
    %v1886 = vsel %vm510, %v1506, 0
    %v1889 = vsel %vm510, %v1508, 0
    %v1892 = vsel %vm510, %v1510, 0
    %1894 = vmatprep.subr.mxu0 0.0
    %1895 = vmatpush1.msra.mxu0 0.0
    %1896 = vmatprep.subr.mxu0 0.0
    %1897 = vmatpush1.msra.mxu0 0.0
    %1898 = vmatprep.subr.mxu0 0.0
    %1899 = vmatpush1.msra.mxu0 0.0
    %1900 = vmatprep.subr.mxu0 0.0
    %1901 = vmatpush1.msra.mxu0 0.0
    %1902 = vmatprep.subr.mxu0 0.0
    %1903 = vmatpush1.msra.mxu0 0.0
    %1904 = vmatprep.subr.mxu0 0.0
    %1905 = vmatpush1.msra.mxu0 0.0
    %1906 = vmatprep.subr.mxu0 0.0
    %1907 = vmatpush1.msra.mxu0 0.0
    %1908 = vmatprep.subr.mxu0 0.0
    %1909 = vmatpush1.msra.mxu0 0.0
    %1910 = vmatprep.subr.mxu0 0.0
    %1911 = vmatpush1.msra.mxu0 0.0
    %1912 = vmatprep.subr.mxu0 0.0
    %1913 = vmatpush1.msra.mxu0 0.0
    %1914 = vmatprep.subr.mxu0 0.0
    %1915 = vmatpush1.msra.mxu0 0.0
    %1916 = vmatprep.subr.mxu0 0.0
    %1917 = vmatpush1.msra.mxu0 0.0
    %1918 = vmatprep.subr.mxu0 0.0
    %1919 = vmatpush1.msra.mxu0 0.0
    %1920 = vmatprep.subr.mxu0 0.0
    %1921 = vmatpush1.msra.mxu0 0.0
    %1922 = vmatprep.subr.mxu0 0.0
    %1923 = vmatpush1.msra.mxu0 %v770
    %1924 = vmatprep.subr.mxu0 0.0
    %1925 = vmatpush1.msra.mxu0 %v769
    %1926 = vmatprep.subr.mxu0 0.0
    %1927 = vmatpush2.msra.mxu0 0.0
    %1928 = vmatprep.subr.mxu0 0.0
    %1929 = vmatpush2.msra.mxu0 0.0
    %1930 = vmatprep.subr.mxu0 0.0
    %1931 = vmatpush2.msra.mxu0 0.0
    %1932 = vmatprep.subr.mxu0 0.0
    %1933 = vmatpush2.msra.mxu0 0.0
    %1934 = vmatprep.subr.mxu0 0.0
    %1935 = vmatpush2.msra.mxu0 0.0
    %1936 = vmatprep.subr.mxu0 0.0
    %1937 = vmatpush2.msra.mxu0 0.0
    %1938 = vmatprep.subr.mxu0 0.0
    %1939 = vmatpush2.msra.mxu0 0.0
    %1940 = vmatprep.subr.mxu0 0.0
    %1941 = vmatpush2.msra.mxu0 0.0
    %1942 = vmatprep.subr.mxu0 0.0
    %1943 = vmatpush2.msra.mxu0 0.0
    %1944 = vmatprep.subr.mxu0 0.0
    %1945 = vmatpush2.msra.mxu0 0.0
    %1946 = vmatprep.subr.mxu0 0.0
    %1947 = vmatpush2.msra.mxu0 0.0
    %1948 = vmatprep.subr.mxu0 0.0
    %1949 = vmatpush2.msra.mxu0 0.0
    %1950 = vmatprep.subr.mxu0 0.0
    %1951 = vmatpush2.msra.mxu0 0.0
    %1952 = vmatprep.subr.mxu0 0.0
    %1953 = vmatpush2.msra.mxu0 0.0
    %1954 = vmatprep.subr.mxu0 0.0
    %1955 = vmatpush2.msra.mxu0 0.0
    %1956 = vmatprep.subr.mxu0 0.0
    %1957 = vmatpush2.msra.mxu0 0.0
    %1958 = vmatprep.mubr.f32.mxu0 0.0
    %1959 = vmatmul.mubr.f32.gmra.mxu0 %v1883
    %v1960 = vpop.f32.mrf.mxu0
    %v1961 = vadd.f32 %v1864, %v1960
    %v1962 = vpop.f32.mrf.mxu0
    %1963 = vmatprep.mubr.f32.mxu0 0.0
    %1964 = vmatmul.mubr.f32.gmra.mxu0 %v1886
    %v1965 = vpop.f32.mrf.mxu0
    %v1966 = vadd.f32 %v1869, %v1965
    %v1967 = vpop.f32.mrf.mxu0
    %1968 = vmatprep.mubr.f32.mxu0 0.0
    %1969 = vmatmul.mubr.f32.gmra.mxu0 %v1889
    %v1970 = vpop.f32.mrf.mxu0
    %v1971 = vadd.f32 %v1874, %v1970
    %v1972 = vpop.f32.mrf.mxu0
    %1973 = vmatprep.mubr.f32.mxu0 0.0
    %1974 = vmatmul.mubr.f32.gmra.mxu0 %v1892
    %v1975 = vpop.f32.mrf.mxu0
    %v1976 = vadd.f32 %v1879, %v1975
    %v1977 = vpop.f32.mrf.mxu0
    %1978 = vdwg.mxu0
    %v1979 = vadd.f32 %v181, %v1223
    %v1980 = vadd.f32 %v186, %v1228
    %v1981 = vadd.f32 %v191, %v1233
    %v1982 = vadd.f32 %v196, %v1238
    %v1983 = vadd.f32 %v201, %v1961
    %v1984 = vadd.f32 %v206, %v1966
    %v1985 = vadd.f32 %v211, %v1971
    %v1986 = vadd.f32 %v216, %v1976
    %v1987 = vlaneseq
    %v1988 = vshrl.u32 %v1987, 7
    %v1989 = vsub.s32 0, %v1988
    %v1990 = vrot.slane %v230, %v1989
    %v1991 = vadd.f32 %v1979, %v1990
    %v1992 = vadd.f32 %v1980, %v1990
    %v1993 = vadd.f32 %v1981, %v1990
    %v1994 = vadd.f32 %v1982, %v1990
    %v1995 = vadd.f32 %v1983, %v1990
    %v1996 = vadd.f32 %v1984, %v1990
    %v1997 = vadd.f32 %v1985, %v1990
    %v1998 = vadd.f32 %v1986, %v1990
    %v1999 = vsel %vm235, %v1991, 0.0
    %2000 = vadd.xlane.f32.xlu0 %v1999
    %v2001 = vpop.xlane.xlu0 %2000
    %v2002 = vsel %vm235, %v1992, 0.0
    %2003 = vadd.xlane.f32.xlu0 %v2002
    %v2004 = vpop.xlane.xlu0 %2003
    %v2005 = vsel %vm235, %v1993, 0.0
    %2006 = vadd.xlane.f32.xlu0 %v2005
    %v2007 = vpop.xlane.xlu0 %2006
    %v2008 = vsel %vm235, %v1994, 0.0
    %2009 = vadd.xlane.f32.xlu0 %v2008
    %v2010 = vpop.xlane.xlu0 %2009
    %v2011 = vsel %vm235, %v1995, 0.0
    %2012 = vadd.xlane.f32.xlu0 %v2011
    %v2013 = vpop.xlane.xlu0 %2012
    %v2014 = vsel %vm235, %v1996, 0.0
    %2015 = vadd.xlane.f32.xlu0 %v2014
    %v2016 = vpop.xlane.xlu0 %2015
    %v2017 = vsel %vm235, %v1997, 0.0
    %2018 = vadd.xlane.f32.xlu0 %v2017
    %v2019 = vpop.xlane.xlu0 %2018
    %v2020 = vsel %vm235, %v1998, 0.0
    %2021 = vadd.xlane.f32.xlu0 %v2020
    %v2022 = vpop.xlane.xlu0 %2021
    %v2023 = vmul.f32 %v2001, %v260
    %v2024 = vmul.f32 %v2004, %v260
    %v2025 = vmul.f32 %v2007, %v260
    %v2026 = vmul.f32 %v2010, %v260
    %v2027 = vmul.f32 %v2013, %v260
    %v2028 = vmul.f32 %v2016, %v260
    %v2029 = vmul.f32 %v2019, %v260
    %v2030 = vmul.f32 %v2022, %v260
    %v2031 = vsub.f32 %v1991, %v2023
    %v2032 = vsub.f32 %v1992, %v2024
    %v2033 = vsub.f32 %v1993, %v2025
    %v2034 = vsub.f32 %v1994, %v2026
    %v2035 = vsub.f32 %v1995, %v2027
    %v2036 = vsub.f32 %v1996, %v2028
    %v2037 = vsub.f32 %v1997, %v2029
    %v2038 = vsub.f32 %v1998, %v2030
    %v2039 = vmul.f32 %v2031, %v2031
    %v2040 = vmul.f32 %v2032, %v2032
    %v2041 = vmul.f32 %v2033, %v2033
    %v2042 = vmul.f32 %v2034, %v2034
    %v2043 = vmul.f32 %v2035, %v2035
    %v2044 = vmul.f32 %v2036, %v2036
    %v2045 = vmul.f32 %v2037, %v2037
    %v2046 = vmul.f32 %v2038, %v2038
    %v2047 = vsel %vm235, %v2039, 0.0
    %2048 = vadd.xlane.f32.xlu0 %v2047
    %v2049 = vpop.xlane.xlu0 %2048
    %v2050 = vsel %vm235, %v2040, 0.0
    %2051 = vadd.xlane.f32.xlu0 %v2050
    %v2052 = vpop.xlane.xlu0 %2051
    %v2053 = vsel %vm235, %v2041, 0.0
    %2054 = vadd.xlane.f32.xlu0 %v2053
    %v2055 = vpop.xlane.xlu0 %2054
    %v2056 = vsel %vm235, %v2042, 0.0
    %2057 = vadd.xlane.f32.xlu0 %v2056
    %v2058 = vpop.xlane.xlu0 %2057
    %v2059 = vsel %vm235, %v2043, 0.0
    %2060 = vadd.xlane.f32.xlu0 %v2059
    %v2061 = vpop.xlane.xlu0 %2060
    %v2062 = vsel %vm235, %v2044, 0.0
    %2063 = vadd.xlane.f32.xlu0 %v2062
    %v2064 = vpop.xlane.xlu0 %2063
    %v2065 = vsel %vm235, %v2045, 0.0
    %2066 = vadd.xlane.f32.xlu0 %v2065
    %v2067 = vpop.xlane.xlu0 %2066
    %v2068 = vsel %vm235, %v2046, 0.0
    %2069 = vadd.xlane.f32.xlu0 %v2068
    %v2070 = vpop.xlane.xlu0 %2069
    %v2071 = vmul.f32 %v2049, %v260
    %v2072 = vmul.f32 %v2052, %v260
    %v2073 = vmul.f32 %v2055, %v260
    %v2074 = vmul.f32 %v2058, %v260
    %v2075 = vmul.f32 %v2061, %v260
    %v2076 = vmul.f32 %v2064, %v260
    %v2077 = vmul.f32 %v2067, %v260
    %v2078 = vmul.f32 %v2070, %v260
    %v2079 = vadd.f32 %v2071, 1e-05
    %v2080 = vadd.f32 %v2072, 1e-05
    %v2081 = vadd.f32 %v2073, 1e-05
    %v2082 = vadd.f32 %v2074, 1e-05
    %v2083 = vadd.f32 %v2075, 1e-05
    %v2084 = vadd.f32 %v2076, 1e-05
    %v2085 = vadd.f32 %v2077, 1e-05
    %v2086 = vadd.f32 %v2078, 1e-05
    %v2087 = vrsqrt.pop %v2079
    %v2088 = vrsqrt.pop %v2080
    %v2089 = vrsqrt.pop %v2081
    %v2090 = vrsqrt.pop %v2082
    %v2091 = vrsqrt.pop %v2083
    %v2092 = vrsqrt.pop %v2084
    %v2093 = vrsqrt.pop %v2085
    %v2094 = vrsqrt.pop %v2086
    %v2095 = vmul.f32 %v2031, %v2087
    %v2096 = vmul.f32 %v2032, %v2088
    %v2097 = vmul.f32 %v2033, %v2089
    %v2098 = vmul.f32 %v2034, %v2090
    %v2099 = vmul.f32 %v2035, %v2091
    %v2100 = vmul.f32 %v2036, %v2092
    %v2101 = vmul.f32 %v2037, %v2093
    %v2102 = vmul.f32 %v2038, %v2094
    %v2103 = vlaneseq
    %v2104 = vshrl.u32 %v2103, 7
    %v2105 = vsub.s32 0, %v2104
    %v2106 = vrot.slane %v231, %v2105
    %v2107 = vmul.f32 %v2095, %v2106
    %v2108 = vmul.f32 %v2096, %v2106
    %v2109 = vmul.f32 %v2097, %v2106
    %v2110 = vmul.f32 %v2098, %v2106
    %v2111 = vmul.f32 %v2099, %v2106
    %v2112 = vmul.f32 %v2100, %v2106
    %v2113 = vmul.f32 %v2101, %v2106
    %v2114 = vmul.f32 %v2102, %v2106
    %v2115 = vlaneseq
    %v2116 = vshrl.u32 %v2115, 7
    %v2117 = vsub.s32 0, %v2116
    %v2118 = vrot.slane %v232, %v2117
    %v2119 = vadd.f32 %v2107, %v2118
    %v2120 = vadd.f32 %v2108, %v2118
    %v2121 = vadd.f32 %v2109, %v2118
    %v2122 = vadd.f32 %v2110, %v2118
    %v2123 = vadd.f32 %v2111, %v2118
    %v2124 = vadd.f32 %v2112, %v2118
    %v2125 = vadd.f32 %v2113, %v2118
    %v2126 = vadd.f32 %v2114, %v2118
    %v2127 = vld [vmem:[%s5] sm:$0xff]
    %v2128 = vld [vmem:[%s5 + $0x8] sm:$0xff]
    %v2129 = vld [vmem:[%s5 + $0x10] sm:$0xff]
    %v2130 = vld [vmem:[%s5 + $0x18] sm:$0xff]
    %v2131 = vlaneseq
    %v2132 = vshrl.u32 %v2131, 7
    %v2133 = vsub.s32 0, %v2132
    %v2134 = vrot.slane %v233, %v2133
    %v2136 = vsel %vm235, %v2119, 0
    %v2139 = vsel %vm235, %v2120, 0
    %v2142 = vsel %vm235, %v2121, 0
    %v2145 = vsel %vm235, %v2122, 0
    %v2148 = vsel %vm235, %v2123, 0
    %v2151 = vsel %vm235, %v2124, 0
    %v2154 = vsel %vm235, %v2125, 0
    %v2157 = vsel %vm235, %v2126, 0
    %2159 = vmatprep.subr.mxu0 0.0
    %2160 = vmatpush1.msra.mxu0 0.0
    %2161 = vmatprep.subr.mxu0 0.0
    %2162 = vmatpush1.msra.mxu0 0.0
    %2163 = vmatprep.subr.mxu0 0.0
    %2164 = vmatpush1.msra.mxu0 0.0
    %2165 = vmatprep.subr.mxu0 0.0
    %2166 = vmatpush1.msra.mxu0 0.0
    %2167 = vmatprep.subr.mxu0 0.0
    %2168 = vmatpush1.msra.mxu0 0.0
    %2169 = vmatprep.subr.mxu0 0.0
    %2170 = vmatpush1.msra.mxu0 0.0
    %2171 = vmatprep.subr.mxu0 0.0
    %2172 = vmatpush1.msra.mxu0 0.0
    %2173 = vmatprep.subr.mxu0 0.0
    %2174 = vmatpush1.msra.mxu0 0.0
    %2175 = vmatprep.subr.mxu0 0.0
    %2176 = vmatpush1.msra.mxu0 0.0
    %2177 = vmatprep.subr.mxu0 0.0
    %2178 = vmatpush1.msra.mxu0 0.0
    %2179 = vmatprep.subr.mxu0 0.0
    %2180 = vmatpush1.msra.mxu0 0.0
    %2181 = vmatprep.subr.mxu0 0.0
    %2182 = vmatpush1.msra.mxu0 0.0
    %2183 = vmatprep.subr.mxu0 0.0
    %2184 = vmatpush1.msra.mxu0 %v2130
    %2185 = vmatprep.subr.mxu0 0.0
    %2186 = vmatpush1.msra.mxu0 %v2129
    %2187 = vmatprep.subr.mxu0 0.0
    %2188 = vmatpush1.msra.mxu0 %v2128
    %2189 = vmatprep.subr.mxu0 0.0
    %2190 = vmatpush1.msra.mxu0 %v2127
    %2191 = vmatprep.subr.mxu0 0.0
    %2192 = vmatpush2.msra.mxu0 0.0
    %2193 = vmatprep.subr.mxu0 0.0
    %2194 = vmatpush2.msra.mxu0 0.0
    %2195 = vmatprep.subr.mxu0 0.0
    %2196 = vmatpush2.msra.mxu0 0.0
    %2197 = vmatprep.subr.mxu0 0.0
    %2198 = vmatpush2.msra.mxu0 0.0
    %2199 = vmatprep.subr.mxu0 0.0
    %2200 = vmatpush2.msra.mxu0 0.0
    %2201 = vmatprep.subr.mxu0 0.0
    %2202 = vmatpush2.msra.mxu0 0.0
    %2203 = vmatprep.subr.mxu0 0.0
    %2204 = vmatpush2.msra.mxu0 0.0
    %2205 = vmatprep.subr.mxu0 0.0
    %2206 = vmatpush2.msra.mxu0 0.0
    %2207 = vmatprep.subr.mxu0 0.0
    %2208 = vmatpush2.msra.mxu0 0.0
    %2209 = vmatprep.subr.mxu0 0.0
    %2210 = vmatpush2.msra.mxu0 0.0
    %2211 = vmatprep.subr.mxu0 0.0
    %2212 = vmatpush2.msra.mxu0 0.0
    %2213 = vmatprep.subr.mxu0 0.0
    %2214 = vmatpush2.msra.mxu0 0.0
    %2215 = vmatprep.subr.mxu0 0.0
    %2216 = vmatpush2.msra.mxu0 0.0
    %2217 = vmatprep.subr.mxu0 0.0
    %2218 = vmatpush2.msra.mxu0 0.0
    %2219 = vmatprep.subr.mxu0 0.0
    %2220 = vmatpush2.msra.mxu0 0.0
    %2221 = vmatprep.subr.mxu0 0.0
    %2222 = vmatpush2.msra.mxu0 0.0
    %2223 = vmatprep.mubr.f32.mxu0 0.0
    %2224 = vmatmul.mubr.f32.gmra.mxu0 %v2136
    %v2225 = vpop.f32.mrf.mxu0
    %v2226 = vadd.f32 %v2134, %v2225
    %v2227 = vpop.f32.mrf.mxu0
    %2228 = vmatprep.mubr.f32.mxu0 0.0
    %2229 = vmatmul.mubr.f32.gmra.mxu0 %v2139
    %v2230 = vpop.f32.mrf.mxu0
    %v2231 = vadd.f32 %v2134, %v2230
    %v2232 = vpop.f32.mrf.mxu0
    %2233 = vmatprep.mubr.f32.mxu0 0.0
    %2234 = vmatmul.mubr.f32.gmra.mxu0 %v2142
    %v2235 = vpop.f32.mrf.mxu0
    %v2236 = vadd.f32 %v2134, %v2235
    %v2237 = vpop.f32.mrf.mxu0
    %2238 = vmatprep.mubr.f32.mxu0 0.0
    %2239 = vmatmul.mubr.f32.gmra.mxu0 %v2145
    %v2240 = vpop.f32.mrf.mxu0
    %v2241 = vadd.f32 %v2134, %v2240
    %v2242 = vpop.f32.mrf.mxu0
    %2243 = vmatprep.mubr.f32.mxu0 0.0
    %2244 = vmatmul.mubr.f32.gmra.mxu0 %v2148
    %v2245 = vpop.f32.mrf.mxu0
    %v2246 = vadd.f32 %v2134, %v2245
    %v2247 = vpop.f32.mrf.mxu0
    %2248 = vmatprep.mubr.f32.mxu0 0.0
    %2249 = vmatmul.mubr.f32.gmra.mxu0 %v2151
    %v2250 = vpop.f32.mrf.mxu0
    %v2251 = vadd.f32 %v2134, %v2250
    %v2252 = vpop.f32.mrf.mxu0
    %2253 = vmatprep.mubr.f32.mxu0 0.0
    %2254 = vmatmul.mubr.f32.gmra.mxu0 %v2154
    %v2255 = vpop.f32.mrf.mxu0
    %v2256 = vadd.f32 %v2134, %v2255
    %v2257 = vpop.f32.mrf.mxu0
    %2258 = vmatprep.mubr.f32.mxu0 0.0
    %2259 = vmatmul.mubr.f32.gmra.mxu0 %v2157
    %v2260 = vpop.f32.mrf.mxu0
    %v2261 = vadd.f32 %v2134, %v2260
    %v2262 = vpop.f32.mrf.mxu0
    %2263 = vdwg.mxu0
    %v2264 = vmax.f32 %v2226, 0.0
    %v2265 = vmax.f32 %v2231, 0.0
    %v2266 = vmax.f32 %v2236, 0.0
    %v2267 = vmax.f32 %v2241, 0.0
    %v2268 = vmax.f32 %v2246, 0.0
    %v2269 = vmax.f32 %v2251, 0.0
    %v2270 = vmax.f32 %v2256, 0.0
    %v2271 = vmax.f32 %v2261, 0.0
    %v2272 = vld [vmem:[%s6] sm:$0xff]
    %v2273 = vld [vmem:[%s6 + $0x8] sm:$0xff]
    %v2274 = vld [vmem:[%s6 + $0x10] sm:$0xff]
    %v2275 = vld [vmem:[%s6 + $0x18] sm:$0xff]
    %v2276 = vld [vmem:[%s6 + $0x20] sm:$0xff]
    %v2277 = vld [vmem:[%s6 + $0x28] sm:$0xff]
    %v2278 = vld [vmem:[%s6 + $0x30] sm:$0xff]
    %v2279 = vld [vmem:[%s6 + $0x38] sm:$0xff]
    %v2280 = vld [vmem:[%s6 + $0x40] sm:$0xff]
    %v2281 = vld [vmem:[%s6 + $0x48] sm:$0xff]
    %v2282 = vld [vmem:[%s6 + $0x50] sm:$0xff]
    %v2283 = vld [vmem:[%s6 + $0x58] sm:$0xff]
    %v2284 = vld [vmem:[%s6 + $0x60] sm:$0xff]
    %v2285 = vld [vmem:[%s6 + $0x68] sm:$0xff]
    %v2286 = vld [vmem:[%s6 + $0x70] sm:$0xff]
    %v2287 = vld [vmem:[%s6 + $0x78] sm:$0xff]
    %v2288 = vlaneseq
    %v2289 = vshrl.u32 %v2288, 7
    %v2290 = vsub.s32 0, %v2289
    %v2291 = vrot.slane %v234, %v2290
    %2292 = vmatprep.subr.mxu0 0.0
    %2293 = vmatpush1.msra.mxu0 %v2287
    %2294 = vmatprep.subr.mxu0 0.0
    %2295 = vmatpush1.msra.mxu0 %v2286
    %2296 = vmatprep.subr.mxu0 0.0
    %2297 = vmatpush1.msra.mxu0 %v2285
    %2298 = vmatprep.subr.mxu0 0.0
    %2299 = vmatpush1.msra.mxu0 %v2284
    %2300 = vmatprep.subr.mxu0 0.0
    %2301 = vmatpush1.msra.mxu0 %v2283
    %2302 = vmatprep.subr.mxu0 0.0
    %2303 = vmatpush1.msra.mxu0 %v2282
    %2304 = vmatprep.subr.mxu0 0.0
    %2305 = vmatpush1.msra.mxu0 %v2281
    %2306 = vmatprep.subr.mxu0 0.0
    %2307 = vmatpush1.msra.mxu0 %v2280
    %2308 = vmatprep.subr.mxu0 0.0
    %2309 = vmatpush1.msra.mxu0 %v2279
    %2310 = vmatprep.subr.mxu0 0.0
    %2311 = vmatpush1.msra.mxu0 %v2278
    %2312 = vmatprep.subr.mxu0 0.0
    %2313 = vmatpush1.msra.mxu0 %v2277
    %2314 = vmatprep.subr.mxu0 0.0
    %2315 = vmatpush1.msra.mxu0 %v2276
    %2316 = vmatprep.subr.mxu0 0.0
    %2317 = vmatpush1.msra.mxu0 %v2275
    %2318 = vmatprep.subr.mxu0 0.0
    %2319 = vmatpush1.msra.mxu0 %v2274
    %2320 = vmatprep.subr.mxu0 0.0
    %2321 = vmatpush1.msra.mxu0 %v2273
    %2322 = vmatprep.subr.mxu0 0.0
    %2323 = vmatpush1.msra.mxu0 %v2272
    %2324 = vmatprep.subr.mxu0 0.0
    %2325 = vmatpush2.msra.mxu0 0.0
    %2326 = vmatprep.subr.mxu0 0.0
    %2327 = vmatpush2.msra.mxu0 0.0
    %2328 = vmatprep.subr.mxu0 0.0
    %2329 = vmatpush2.msra.mxu0 0.0
    %2330 = vmatprep.subr.mxu0 0.0
    %2331 = vmatpush2.msra.mxu0 0.0
    %2332 = vmatprep.subr.mxu0 0.0
    %2333 = vmatpush2.msra.mxu0 0.0
    %2334 = vmatprep.subr.mxu0 0.0
    %2335 = vmatpush2.msra.mxu0 0.0
    %2336 = vmatprep.subr.mxu0 0.0
    %2337 = vmatpush2.msra.mxu0 0.0
    %2338 = vmatprep.subr.mxu0 0.0
    %2339 = vmatpush2.msra.mxu0 0.0
    %2340 = vmatprep.subr.mxu0 0.0
    %2341 = vmatpush2.msra.mxu0 0.0
    %2342 = vmatprep.subr.mxu0 0.0
    %2343 = vmatpush2.msra.mxu0 0.0
    %2344 = vmatprep.subr.mxu0 0.0
    %2345 = vmatpush2.msra.mxu0 0.0
    %2346 = vmatprep.subr.mxu0 0.0
    %2347 = vmatpush2.msra.mxu0 0.0
    %2348 = vmatprep.subr.mxu0 0.0
    %2349 = vmatpush2.msra.mxu0 0.0
    %2350 = vmatprep.subr.mxu0 0.0
    %2351 = vmatpush2.msra.mxu0 0.0
    %2352 = vmatprep.subr.mxu0 0.0
    %2353 = vmatpush2.msra.mxu0 0.0
    %2354 = vmatprep.subr.mxu0 0.0
    %2355 = vmatpush2.msra.mxu0 0.0
    %2356 = vmatprep.mubr.f32.mxu0 0.0
    %2357 = vmatmul.mubr.f32.gmra.mxu0 %v2264
    %v2358 = vpop.f32.mrf.mxu0
    %v2359 = vadd.f32 %v2291, %v2358
    %v2360 = vpop.f32.mrf.mxu0
    %2361 = vmatprep.mubr.f32.mxu0 0.0
    %2362 = vmatmul.mubr.f32.gmra.mxu0 %v2265
    %v2363 = vpop.f32.mrf.mxu0
    %v2364 = vadd.f32 %v2291, %v2363
    %v2365 = vpop.f32.mrf.mxu0
    %2366 = vmatprep.mubr.f32.mxu0 0.0
    %2367 = vmatmul.mubr.f32.gmra.mxu0 %v2266
    %v2368 = vpop.f32.mrf.mxu0
    %v2369 = vadd.f32 %v2291, %v2368
    %v2370 = vpop.f32.mrf.mxu0
    %2371 = vmatprep.mubr.f32.mxu0 0.0
    %2372 = vmatmul.mubr.f32.gmra.mxu0 %v2267
    %v2373 = vpop.f32.mrf.mxu0
    %v2374 = vadd.f32 %v2291, %v2373
    %v2375 = vpop.f32.mrf.mxu0
    %2376 = vmatprep.mubr.f32.mxu0 0.0
    %2377 = vmatmul.mubr.f32.gmra.mxu0 %v2268
    %v2378 = vpop.f32.mrf.mxu0
    %v2379 = vadd.f32 %v2291, %v2378
    %v2380 = vpop.f32.mrf.mxu0
    %2381 = vmatprep.mubr.f32.mxu0 0.0
    %2382 = vmatmul.mubr.f32.gmra.mxu0 %v2269
    %v2383 = vpop.f32.mrf.mxu0
    %v2384 = vadd.f32 %v2291, %v2383
    %v2385 = vpop.f32.mrf.mxu0
    %2386 = vmatprep.mubr.f32.mxu0 0.0
    %2387 = vmatmul.mubr.f32.gmra.mxu0 %v2270
    %v2388 = vpop.f32.mrf.mxu0
    %v2389 = vadd.f32 %v2291, %v2388
    %v2390 = vpop.f32.mrf.mxu0
    %2391 = vmatprep.mubr.f32.mxu0 0.0
    %2392 = vmatmul.mubr.f32.gmra.mxu0 %v2271
    %v2393 = vpop.f32.mrf.mxu0
    %v2394 = vadd.f32 %v2291, %v2393
    %v2395 = vpop.f32.mrf.mxu0
    %2396 = vdwg.mxu0
    %v2397 = vadd.f32 %v1991, %v2359
    %v2398 = vadd.f32 %v1992, %v2364
    %v2399 = vadd.f32 %v1993, %v2369
    %v2400 = vadd.f32 %v1994, %v2374
    %v2401 = vadd.f32 %v1995, %v2379
    %v2402 = vadd.f32 %v1996, %v2384
    %v2403 = vadd.f32 %v1997, %v2389
    %v2404 = vadd.f32 %v1998, %v2394
    %s2405 = scalar_lea.vmem %s7, 8
    %v2406 = vld [vmem:[%s2405] sm:$0x1]
    %v2407 = vld [vmem:[%s2405 + $0x1] sm:$0x1]
    %v2408 = vld [vmem:[%s2405 + $0x2] sm:$0x1]
    %v2409 = vld [vmem:[%s2405 + $0x3] sm:$0x1]
    %v2410 = vld [vmem:[%s2405 + $0x4] sm:$0x1]
    %v2411 = vld [vmem:[%s2405 + $0x5] sm:$0x1]
    %v2412 = vld [vmem:[%s2405 + $0x6] sm:$0x1]
    %v2413 = vsel %vm235, %v2397, 0.0
    %2414 = vadd.xlane.f32.xlu0 %v2413
    %v2415 = vpop.xlane.xlu0 %2414
    %v2416 = vsel %vm235, %v2398, 0.0
    %2417 = vadd.xlane.f32.xlu0 %v2416
    %v2418 = vpop.xlane.xlu0 %2417
    %v2419 = vsel %vm235, %v2399, 0.0
    %2420 = vadd.xlane.f32.xlu0 %v2419
    %v2421 = vpop.xlane.xlu0 %2420
    %v2422 = vsel %vm235, %v2400, 0.0
    %2423 = vadd.xlane.f32.xlu0 %v2422
    %v2424 = vpop.xlane.xlu0 %2423
    %v2425 = vsel %vm235, %v2401, 0.0
    %2426 = vadd.xlane.f32.xlu0 %v2425
    %v2427 = vpop.xlane.xlu0 %2426
    %v2428 = vsel %vm235, %v2402, 0.0
    %2429 = vadd.xlane.f32.xlu0 %v2428
    %v2430 = vpop.xlane.xlu0 %2429
    %v2431 = vsel %vm235, %v2403, 0.0
    %2432 = vadd.xlane.f32.xlu0 %v2431
    %v2433 = vpop.xlane.xlu0 %2432
    %v2434 = vsel %vm235, %v2404, 0.0
    %2435 = vadd.xlane.f32.xlu0 %v2434
    %v2436 = vpop.xlane.xlu0 %2435
    %v2437 = vmul.f32 %v2415, %v260
    %v2438 = vmul.f32 %v2418, %v260
    %v2439 = vmul.f32 %v2421, %v260
    %v2440 = vmul.f32 %v2424, %v260
    %v2441 = vmul.f32 %v2427, %v260
    %v2442 = vmul.f32 %v2430, %v260
    %v2443 = vmul.f32 %v2433, %v260
    %v2444 = vmul.f32 %v2436, %v260
    %v2445 = vsub.f32 %v2397, %v2437
    %v2446 = vsub.f32 %v2398, %v2438
    %v2447 = vsub.f32 %v2399, %v2439
    %v2448 = vsub.f32 %v2400, %v2440
    %v2449 = vsub.f32 %v2401, %v2441
    %v2450 = vsub.f32 %v2402, %v2442
    %v2451 = vsub.f32 %v2403, %v2443
    %v2452 = vsub.f32 %v2404, %v2444
    %v2453 = vmul.f32 %v2445, %v2445
    %v2454 = vmul.f32 %v2446, %v2446
    %v2455 = vmul.f32 %v2447, %v2447
    %v2456 = vmul.f32 %v2448, %v2448
    %v2457 = vmul.f32 %v2449, %v2449
    %v2458 = vmul.f32 %v2450, %v2450
    %v2459 = vmul.f32 %v2451, %v2451
    %v2460 = vmul.f32 %v2452, %v2452
    %v2461 = vsel %vm235, %v2453, 0.0
    %2462 = vadd.xlane.f32.xlu0 %v2461
    %v2463 = vpop.xlane.xlu0 %2462
    %v2464 = vsel %vm235, %v2454, 0.0
    %2465 = vadd.xlane.f32.xlu0 %v2464
    %v2466 = vpop.xlane.xlu0 %2465
    %v2467 = vsel %vm235, %v2455, 0.0
    %2468 = vadd.xlane.f32.xlu0 %v2467
    %v2469 = vpop.xlane.xlu0 %2468
    %v2470 = vsel %vm235, %v2456, 0.0
    %2471 = vadd.xlane.f32.xlu0 %v2470
    %v2472 = vpop.xlane.xlu0 %2471
    %v2473 = vsel %vm235, %v2457, 0.0
    %2474 = vadd.xlane.f32.xlu0 %v2473
    %v2475 = vpop.xlane.xlu0 %2474
    %v2476 = vsel %vm235, %v2458, 0.0
    %2477 = vadd.xlane.f32.xlu0 %v2476
    %v2478 = vpop.xlane.xlu0 %2477
    %v2479 = vsel %vm235, %v2459, 0.0
    %2480 = vadd.xlane.f32.xlu0 %v2479
    %v2481 = vpop.xlane.xlu0 %2480
    %v2482 = vsel %vm235, %v2460, 0.0
    %2483 = vadd.xlane.f32.xlu0 %v2482
    %v2484 = vpop.xlane.xlu0 %2483
    %v2485 = vmul.f32 %v2463, %v260
    %v2486 = vmul.f32 %v2466, %v260
    %v2487 = vmul.f32 %v2469, %v260
    %v2488 = vmul.f32 %v2472, %v260
    %v2489 = vmul.f32 %v2475, %v260
    %v2490 = vmul.f32 %v2478, %v260
    %v2491 = vmul.f32 %v2481, %v260
    %v2492 = vmul.f32 %v2484, %v260
    %v2493 = vadd.f32 %v2485, 1e-05
    %v2494 = vadd.f32 %v2486, 1e-05
    %v2495 = vadd.f32 %v2487, 1e-05
    %v2496 = vadd.f32 %v2488, 1e-05
    %v2497 = vadd.f32 %v2489, 1e-05
    %v2498 = vadd.f32 %v2490, 1e-05
    %v2499 = vadd.f32 %v2491, 1e-05
    %v2500 = vadd.f32 %v2492, 1e-05
    %v2501 = vrsqrt.pop %v2493
    %v2502 = vrsqrt.pop %v2494
    %v2503 = vrsqrt.pop %v2495
    %v2504 = vrsqrt.pop %v2496
    %v2505 = vrsqrt.pop %v2497
    %v2506 = vrsqrt.pop %v2498
    %v2507 = vrsqrt.pop %v2499
    %v2508 = vrsqrt.pop %v2500
    %v2509 = vmul.f32 %v2445, %v2501
    %v2510 = vmul.f32 %v2446, %v2502
    %v2511 = vmul.f32 %v2447, %v2503
    %v2512 = vmul.f32 %v2448, %v2504
    %v2513 = vmul.f32 %v2449, %v2505
    %v2514 = vmul.f32 %v2450, %v2506
    %v2515 = vmul.f32 %v2451, %v2507
    %v2516 = vmul.f32 %v2452, %v2508
    %v2517 = vlaneseq
    %v2518 = vshrl.u32 %v2517, 7
    %v2519 = vsub.s32 0, %v2518
    %v2520 = vrot.slane %v2406, %v2519
    %v2521 = vmul.f32 %v2509, %v2520
    %v2522 = vmul.f32 %v2510, %v2520
    %v2523 = vmul.f32 %v2511, %v2520
    %v2524 = vmul.f32 %v2512, %v2520
    %v2525 = vmul.f32 %v2513, %v2520
    %v2526 = vmul.f32 %v2514, %v2520
    %v2527 = vmul.f32 %v2515, %v2520
    %v2528 = vmul.f32 %v2516, %v2520
    %v2529 = vlaneseq
    %v2530 = vshrl.u32 %v2529, 7
    %v2531 = vsub.s32 0, %v2530
    %v2532 = vrot.slane %v2407, %v2531
    %v2533 = vadd.f32 %v2521, %v2532
    %v2534 = vadd.f32 %v2522, %v2532
    %v2535 = vadd.f32 %v2523, %v2532
    %v2536 = vadd.f32 %v2524, %v2532
    %v2537 = vadd.f32 %v2525, %v2532
    %v2538 = vadd.f32 %v2526, %v2532
    %v2539 = vadd.f32 %v2527, %v2532
    %v2540 = vadd.f32 %v2528, %v2532
    %s2541 = scalar_lea.vmem %s3, 32
    %v2542 = vld [vmem:[%s2541] sm:$0xff]
    %v2543 = vld [vmem:[%s2541 + $0x8] sm:$0xff]
    %v2544 = vld [vmem:[%s2541 + $0x10] sm:$0xff]
    %v2545 = vld [vmem:[%s2541 + $0x18] sm:$0xff]
    %v2547 = vsel %vm235, %v2533, 0
    %v2550 = vsel %vm235, %v2534, 0
    %v2553 = vsel %vm235, %v2535, 0
    %v2556 = vsel %vm235, %v2536, 0
    %v2559 = vsel %vm235, %v2537, 0
    %v2562 = vsel %vm235, %v2538, 0
    %v2565 = vsel %vm235, %v2539, 0
    %v2568 = vsel %vm235, %v2540, 0
    %2570 = vmatprep.subr.mxu0 0.0
    %2571 = vmatpush1.msra.mxu0 0.0
    %2572 = vmatprep.subr.mxu0 0.0
    %2573 = vmatpush1.msra.mxu0 0.0
    %2574 = vmatprep.subr.mxu0 0.0
    %2575 = vmatpush1.msra.mxu0 0.0
    %2576 = vmatprep.subr.mxu0 0.0
    %2577 = vmatpush1.msra.mxu0 0.0
    %2578 = vmatprep.subr.mxu0 0.0
    %2579 = vmatpush1.msra.mxu0 0.0
    %2580 = vmatprep.subr.mxu0 0.0
    %2581 = vmatpush1.msra.mxu0 0.0
    %2582 = vmatprep.subr.mxu0 0.0
    %2583 = vmatpush1.msra.mxu0 0.0
    %2584 = vmatprep.subr.mxu0 0.0
    %2585 = vmatpush1.msra.mxu0 0.0
    %2586 = vmatprep.subr.mxu0 0.0
    %2587 = vmatpush1.msra.mxu0 0.0
    %2588 = vmatprep.subr.mxu0 0.0
    %2589 = vmatpush1.msra.mxu0 0.0
    %2590 = vmatprep.subr.mxu0 0.0
    %2591 = vmatpush1.msra.mxu0 0.0
    %2592 = vmatprep.subr.mxu0 0.0
    %2593 = vmatpush1.msra.mxu0 0.0
    %2594 = vmatprep.subr.mxu0 0.0
    %2595 = vmatpush1.msra.mxu0 %v2545
    %2596 = vmatprep.subr.mxu0 0.0
    %2597 = vmatpush1.msra.mxu0 %v2544
    %2598 = vmatprep.subr.mxu0 0.0
    %2599 = vmatpush1.msra.mxu0 %v2543
    %2600 = vmatprep.subr.mxu0 0.0
    %2601 = vmatpush1.msra.mxu0 %v2542
    %2602 = vmatprep.subr.mxu0 0.0
    %2603 = vmatpush2.msra.mxu0 0.0
    %2604 = vmatprep.subr.mxu0 0.0
    %2605 = vmatpush2.msra.mxu0 0.0
    %2606 = vmatprep.subr.mxu0 0.0
    %2607 = vmatpush2.msra.mxu0 0.0
    %2608 = vmatprep.subr.mxu0 0.0
    %2609 = vmatpush2.msra.mxu0 0.0
    %2610 = vmatprep.subr.mxu0 0.0
    %2611 = vmatpush2.msra.mxu0 0.0
    %2612 = vmatprep.subr.mxu0 0.0
    %2613 = vmatpush2.msra.mxu0 0.0
    %2614 = vmatprep.subr.mxu0 0.0
    %2615 = vmatpush2.msra.mxu0 0.0
    %2616 = vmatprep.subr.mxu0 0.0
    %2617 = vmatpush2.msra.mxu0 0.0
    %2618 = vmatprep.subr.mxu0 0.0
    %2619 = vmatpush2.msra.mxu0 0.0
    %2620 = vmatprep.subr.mxu0 0.0
    %2621 = vmatpush2.msra.mxu0 0.0
    %2622 = vmatprep.subr.mxu0 0.0
    %2623 = vmatpush2.msra.mxu0 0.0
    %2624 = vmatprep.subr.mxu0 0.0
    %2625 = vmatpush2.msra.mxu0 0.0
    %2626 = vmatprep.subr.mxu0 0.0
    %2627 = vmatpush2.msra.mxu0 0.0
    %2628 = vmatprep.subr.mxu0 0.0
    %2629 = vmatpush2.msra.mxu0 0.0
    %2630 = vmatprep.subr.mxu0 0.0
    %2631 = vmatpush2.msra.mxu0 0.0
    %2632 = vmatprep.subr.mxu0 0.0
    %2633 = vmatpush2.msra.mxu0 0.0
    %2634 = vmatprep.mubr.f32.mxu0 0.0
    %2635 = vmatmul.mubr.f32.gmra.mxu0 %v2547
    %v2636 = vpop.f32.mrf.mxu0
    %v2637 = vadd.f32 0.0, %v2636
    %v2638 = vpop.f32.mrf.mxu0
    %2639 = vmatprep.mubr.f32.mxu0 0.0
    %2640 = vmatmul.mubr.f32.gmra.mxu0 %v2550
    %v2641 = vpop.f32.mrf.mxu0
    %v2642 = vadd.f32 0.0, %v2641
    %v2643 = vpop.f32.mrf.mxu0
    %2644 = vmatprep.mubr.f32.mxu0 0.0
    %2645 = vmatmul.mubr.f32.gmra.mxu0 %v2553
    %v2646 = vpop.f32.mrf.mxu0
    %v2647 = vadd.f32 0.0, %v2646
    %v2648 = vpop.f32.mrf.mxu0
    %2649 = vmatprep.mubr.f32.mxu0 0.0
    %2650 = vmatmul.mubr.f32.gmra.mxu0 %v2556
    %v2651 = vpop.f32.mrf.mxu0
    %v2652 = vadd.f32 0.0, %v2651
    %v2653 = vpop.f32.mrf.mxu0
    %2654 = vmatprep.mubr.f32.mxu0 0.0
    %2655 = vmatmul.mubr.f32.gmra.mxu0 %v2559
    %v2656 = vpop.f32.mrf.mxu0
    %v2657 = vadd.f32 0.0, %v2656
    %v2658 = vpop.f32.mrf.mxu0
    %2659 = vmatprep.mubr.f32.mxu0 0.0
    %2660 = vmatmul.mubr.f32.gmra.mxu0 %v2562
    %v2661 = vpop.f32.mrf.mxu0
    %v2662 = vadd.f32 0.0, %v2661
    %v2663 = vpop.f32.mrf.mxu0
    %2664 = vmatprep.mubr.f32.mxu0 0.0
    %2665 = vmatmul.mubr.f32.gmra.mxu0 %v2565
    %v2666 = vpop.f32.mrf.mxu0
    %v2667 = vadd.f32 0.0, %v2666
    %v2668 = vpop.f32.mrf.mxu0
    %2669 = vmatprep.mubr.f32.mxu0 0.0
    %2670 = vmatmul.mubr.f32.gmra.mxu0 %v2568
    %v2671 = vpop.f32.mrf.mxu0
    %v2672 = vadd.f32 0.0, %v2671
    %v2673 = vpop.f32.mrf.mxu0
    %2674 = vdwg.mxu0
    %2679 = vrot.lane.b32.xlu0 %v2637, 96
    %v2680 = vpop.permute.xlu0 %2679
    %2681 = vrot.lane.b32.xlu0 %v2642, 96
    %v2682 = vpop.permute.xlu0 %2681
    %2683 = vrot.lane.b32.xlu0 %v2647, 96
    %v2684 = vpop.permute.xlu0 %2683
    %2685 = vrot.lane.b32.xlu0 %v2652, 96
    %v2686 = vpop.permute.xlu0 %2685
    %v2687 = vsel %vm510, %v2637, 0
    %v2689 = vsel %vm510, %v2642, 0
    %v2691 = vsel %vm510, %v2647, 0
    %v2693 = vsel %vm510, %v2652, 0
    %v2695 = vsel %vm510, %v2680, 0
    %v2697 = vsel %vm510, %v2682, 0
    %v2699 = vsel %vm510, %v2684, 0
    %v2701 = vsel %vm510, %v2686, 0
    %2703 = vmatprep.subr.mxu0 0.0
    %2704 = vmatpush1.xpose.msra.mxu0 0.0
    %2705 = vmatprep.subr.mxu0 0.0
    %2706 = vmatpush1.xpose.msra.mxu0 0.0
    %2707 = vmatprep.subr.mxu0 0.0
    %2708 = vmatpush1.xpose.msra.mxu0 0.0
    %2709 = vmatprep.subr.mxu0 0.0
    %2710 = vmatpush1.xpose.msra.mxu0 0.0
    %2711 = vmatprep.subr.mxu0 0.0
    %2712 = vmatpush1.xpose.msra.mxu0 0.0
    %2713 = vmatprep.subr.mxu0 0.0
    %2714 = vmatpush1.xpose.msra.mxu0 0.0
    %2715 = vmatprep.subr.mxu0 0.0
    %2716 = vmatpush1.xpose.msra.mxu0 0.0
    %2717 = vmatprep.subr.mxu0 0.0
    %2718 = vmatpush1.xpose.msra.mxu0 0.0
    %2719 = vmatprep.subr.mxu0 0.0
    %2720 = vmatpush1.xpose.msra.mxu0 0.0
    %2721 = vmatprep.subr.mxu0 0.0
    %2722 = vmatpush1.xpose.msra.mxu0 0.0
    %2723 = vmatprep.subr.mxu0 0.0
    %2724 = vmatpush1.xpose.msra.mxu0 0.0
    %2725 = vmatprep.subr.mxu0 0.0
    %2726 = vmatpush1.xpose.msra.mxu0 0.0
    %2727 = vmatprep.subr.mxu0 0.0
    %2728 = vmatpush1.xpose.msra.mxu0 %v2701
    %2729 = vmatprep.subr.mxu0 0.0
    %2730 = vmatpush1.xpose.msra.mxu0 %v2699
    %2731 = vmatprep.subr.mxu0 0.0
    %2732 = vmatpush1.xpose.msra.mxu0 %v2697
    %2733 = vmatprep.subr.mxu0 0.0
    %2734 = vmatpush1.xpose.msra.mxu0 %v2695
    %2735 = vmatprep.subr.mxu0 0.0
    %2736 = vmatpush2.xpose.msra.mxu0 0.0
    %2737 = vmatprep.subr.mxu0 0.0
    %2738 = vmatpush2.xpose.msra.mxu0 0.0
    %2739 = vmatprep.subr.mxu0 0.0
    %2740 = vmatpush2.xpose.msra.mxu0 0.0
    %2741 = vmatprep.subr.mxu0 0.0
    %2742 = vmatpush2.xpose.msra.mxu0 0.0
    %2743 = vmatprep.subr.mxu0 0.0
    %2744 = vmatpush2.xpose.msra.mxu0 0.0
    %2745 = vmatprep.subr.mxu0 0.0
    %2746 = vmatpush2.xpose.msra.mxu0 0.0
    %2747 = vmatprep.subr.mxu0 0.0
    %2748 = vmatpush2.xpose.msra.mxu0 0.0
    %2749 = vmatprep.subr.mxu0 0.0
    %2750 = vmatpush2.xpose.msra.mxu0 0.0
    %2751 = vmatprep.subr.mxu0 0.0
    %2752 = vmatpush2.xpose.msra.mxu0 0.0
    %2753 = vmatprep.subr.mxu0 0.0
    %2754 = vmatpush2.xpose.msra.mxu0 0.0
    %2755 = vmatprep.subr.mxu0 0.0
    %2756 = vmatpush2.xpose.msra.mxu0 0.0
    %2757 = vmatprep.subr.mxu0 0.0
    %2758 = vmatpush2.xpose.msra.mxu0 0.0
    %2759 = vmatprep.subr.mxu0 0.0
    %2760 = vmatpush2.xpose.msra.mxu0 0.0
    %2761 = vmatprep.subr.mxu0 0.0
    %2762 = vmatpush2.xpose.msra.mxu0 0.0
    %2763 = vmatprep.subr.mxu0 0.0
    %2764 = vmatpush2.xpose.msra.mxu0 0.0
    %2765 = vmatprep.subr.mxu0 0.0
    %2766 = vmatpush2.xpose.msra.mxu0 0.0
    %2767 = vmatprep.mubr.f32.mxu0 0.0
    %2768 = vmatmul.mubr.f32.gmra.mxu0 %v2687
    %v2769 = vpop.f32.mrf.mxu0
    %v2770 = vadd.f32 0.0, %v2769
    %v2771 = vpop.f32.mrf.mxu0
    %2772 = vmatprep.mubr.f32.mxu0 0.0
    %2773 = vmatmul.mubr.f32.gmra.mxu0 %v2689
    %v2774 = vpop.f32.mrf.mxu0
    %v2775 = vadd.f32 0.0, %v2774
    %v2776 = vpop.f32.mrf.mxu0
    %2777 = vmatprep.mubr.f32.mxu0 0.0
    %2778 = vmatmul.mubr.f32.gmra.mxu0 %v2691
    %v2779 = vpop.f32.mrf.mxu0
    %v2780 = vadd.f32 0.0, %v2779
    %v2781 = vpop.f32.mrf.mxu0
    %2782 = vmatprep.mubr.f32.mxu0 0.0
    %2783 = vmatmul.mubr.f32.gmra.mxu0 %v2693
    %v2784 = vpop.f32.mrf.mxu0
    %v2785 = vadd.f32 0.0, %v2784
    %v2786 = vpop.f32.mrf.mxu0
    %2787 = vdwg.mxu0
    %v2788 = vsel %vm224, %v2770, -1e+30
    %v2789 = vsel %vm225, %v2775, -1e+30
    %v2790 = vsel %vm226, %v2780, -1e+30
    %v2791 = vsel %vm227, %v2785, -1e+30
    %v2792 = vsel %vm235, %v2788, -inf
    %2793 = vmax.xlane.f32.xlu0 %v2792
    %v2794 = vpop.xlane.xlu0 %2793
    %v2795 = vsel %vm235, %v2789, -inf
    %2796 = vmax.xlane.f32.xlu0 %v2795
    %v2797 = vpop.xlane.xlu0 %2796
    %v2798 = vsel %vm235, %v2790, -inf
    %2799 = vmax.xlane.f32.xlu0 %v2798
    %v2800 = vpop.xlane.xlu0 %2799
    %v2801 = vsel %vm235, %v2791, -inf
    %2802 = vmax.xlane.f32.xlu0 %v2801
    %v2803 = vpop.xlane.xlu0 %2802
    %v2804 = vsub.f32 %v2788, %v2794
    %v2805 = vsub.f32 %v2789, %v2797
    %v2806 = vsub.f32 %v2790, %v2800
    %v2807 = vsub.f32 %v2791, %v2803
    %v2808 = vmul.f32 %v2804, 1.442695
    %v2809 = vpow.pop %v2808
    %v2810 = vmul.f32 %v2805, 1.442695
    %v2811 = vpow.pop %v2810
    %v2812 = vmul.f32 %v2806, 1.442695
    %v2813 = vpow.pop %v2812
    %v2814 = vmul.f32 %v2807, 1.442695
    %v2815 = vpow.pop %v2814
    %v2816 = vsel %vm235, %v2809, 0.0
    %2817 = vadd.xlane.f32.xlu0 %v2816
    %v2818 = vpop.xlane.xlu0 %2817
    %v2819 = vsel %vm235, %v2811, 0.0
    %2820 = vadd.xlane.f32.xlu0 %v2819
    %v2821 = vpop.xlane.xlu0 %2820
    %v2822 = vsel %vm235, %v2813, 0.0
    %2823 = vadd.xlane.f32.xlu0 %v2822
    %v2824 = vpop.xlane.xlu0 %2823
    %v2825 = vsel %vm235, %v2815, 0.0
    %2826 = vadd.xlane.f32.xlu0 %v2825
    %v2827 = vpop.xlane.xlu0 %2826
    %2828 = vrot.lane.b32.xlu0 %v2637, 64
    %v2829 = vpop.permute.xlu0 %2828
    %2830 = vrot.lane.b32.xlu0 %v2642, 64
    %v2831 = vpop.permute.xlu0 %2830
    %2832 = vrot.lane.b32.xlu0 %v2647, 64
    %v2833 = vpop.permute.xlu0 %2832
    %2834 = vrot.lane.b32.xlu0 %v2652, 64
    %v2835 = vpop.permute.xlu0 %2834
    %v2841 = vsel %vm235, %v2809, 0
    %v2844 = vsel %vm235, %v2811, 0
    %v2847 = vsel %vm235, %v2813, 0
    %v2850 = vsel %vm235, %v2815, 0
    %2852 = vmatprep.subr.mxu0 0.0
    %2853 = vmatpush1.msra.mxu0 0.0
    %2854 = vmatprep.subr.mxu0 0.0
    %2855 = vmatpush1.msra.mxu0 0.0
    %2856 = vmatprep.subr.mxu0 0.0
    %2857 = vmatpush1.msra.mxu0 0.0
    %2858 = vmatprep.subr.mxu0 0.0
    %2859 = vmatpush1.msra.mxu0 0.0
    %2860 = vmatprep.subr.mxu0 0.0
    %2861 = vmatpush1.msra.mxu0 0.0
    %2862 = vmatprep.subr.mxu0 0.0
    %2863 = vmatpush1.msra.mxu0 0.0
    %2864 = vmatprep.subr.mxu0 0.0
    %2865 = vmatpush1.msra.mxu0 0.0
    %2866 = vmatprep.subr.mxu0 0.0
    %2867 = vmatpush1.msra.mxu0 0.0
    %2868 = vmatprep.subr.mxu0 0.0
    %2869 = vmatpush1.msra.mxu0 0.0
    %2870 = vmatprep.subr.mxu0 0.0
    %2871 = vmatpush1.msra.mxu0 0.0
    %2872 = vmatprep.subr.mxu0 0.0
    %2873 = vmatpush1.msra.mxu0 0.0
    %2874 = vmatprep.subr.mxu0 0.0
    %2875 = vmatpush1.msra.mxu0 0.0
    %2876 = vmatprep.subr.mxu0 0.0
    %2877 = vmatpush1.msra.mxu0 %v2835
    %2878 = vmatprep.subr.mxu0 0.0
    %2879 = vmatpush1.msra.mxu0 %v2833
    %2880 = vmatprep.subr.mxu0 0.0
    %2881 = vmatpush1.msra.mxu0 %v2831
    %2882 = vmatprep.subr.mxu0 0.0
    %2883 = vmatpush1.msra.mxu0 %v2829
    %2884 = vmatprep.subr.mxu0 0.0
    %2885 = vmatpush2.msra.mxu0 0.0
    %2886 = vmatprep.subr.mxu0 0.0
    %2887 = vmatpush2.msra.mxu0 0.0
    %2888 = vmatprep.subr.mxu0 0.0
    %2889 = vmatpush2.msra.mxu0 0.0
    %2890 = vmatprep.subr.mxu0 0.0
    %2891 = vmatpush2.msra.mxu0 0.0
    %2892 = vmatprep.subr.mxu0 0.0
    %2893 = vmatpush2.msra.mxu0 0.0
    %2894 = vmatprep.subr.mxu0 0.0
    %2895 = vmatpush2.msra.mxu0 0.0
    %2896 = vmatprep.subr.mxu0 0.0
    %2897 = vmatpush2.msra.mxu0 0.0
    %2898 = vmatprep.subr.mxu0 0.0
    %2899 = vmatpush2.msra.mxu0 0.0
    %2900 = vmatprep.subr.mxu0 0.0
    %2901 = vmatpush2.msra.mxu0 0.0
    %2902 = vmatprep.subr.mxu0 0.0
    %2903 = vmatpush2.msra.mxu0 0.0
    %2904 = vmatprep.subr.mxu0 0.0
    %2905 = vmatpush2.msra.mxu0 0.0
    %2906 = vmatprep.subr.mxu0 0.0
    %2907 = vmatpush2.msra.mxu0 0.0
    %2908 = vmatprep.subr.mxu0 0.0
    %2909 = vmatpush2.msra.mxu0 0.0
    %2910 = vmatprep.subr.mxu0 0.0
    %2911 = vmatpush2.msra.mxu0 0.0
    %2912 = vmatprep.subr.mxu0 0.0
    %2913 = vmatpush2.msra.mxu0 0.0
    %2914 = vmatprep.subr.mxu0 0.0
    %2915 = vmatpush2.msra.mxu0 0.0
    %2916 = vmatprep.mubr.f32.mxu0 0.0
    %2917 = vmatmul.mubr.f32.gmra.mxu0 %v2841
    %v2918 = vpop.f32.mrf.mxu0
    %v2919 = vadd.f32 0.0, %v2918
    %v2920 = vpop.f32.mrf.mxu0
    %2921 = vmatprep.mubr.f32.mxu0 0.0
    %2922 = vmatmul.mubr.f32.gmra.mxu0 %v2844
    %v2923 = vpop.f32.mrf.mxu0
    %v2924 = vadd.f32 0.0, %v2923
    %v2925 = vpop.f32.mrf.mxu0
    %2926 = vmatprep.mubr.f32.mxu0 0.0
    %2927 = vmatmul.mubr.f32.gmra.mxu0 %v2847
    %v2928 = vpop.f32.mrf.mxu0
    %v2929 = vadd.f32 0.0, %v2928
    %v2930 = vpop.f32.mrf.mxu0
    %2931 = vmatprep.mubr.f32.mxu0 0.0
    %2932 = vmatmul.mubr.f32.gmra.mxu0 %v2850
    %v2933 = vpop.f32.mrf.mxu0
    %v2934 = vadd.f32 0.0, %v2933
    %v2935 = vpop.f32.mrf.mxu0
    %2936 = vdwg.mxu0
    %v2937 = vrcp.pop %v2818
    %v2938 = vmul.f32 %v2919, %v2937
    %v2939 = vrcp.pop %v2821
    %v2940 = vmul.f32 %v2924, %v2939
    %v2941 = vrcp.pop %v2824
    %v2942 = vmul.f32 %v2929, %v2941
    %v2943 = vrcp.pop %v2827
    %v2944 = vmul.f32 %v2934, %v2943
    %s2945 = scalar_lea.vmem %s4, 32
    %v2946 = vld [vmem:[%s2945] sm:$0xff]
    %v2947 = vld [vmem:[%s2945 + $0x8] sm:$0xff]
    %2948 = vrot.lane.b32.xlu0 %v2637, 112
    %v2949 = vpop.permute.xlu0 %2948
    %2950 = vrot.lane.b32.xlu0 %v2642, 112
    %v2951 = vpop.permute.xlu0 %2950
    %2952 = vrot.lane.b32.xlu0 %v2647, 112
    %v2953 = vpop.permute.xlu0 %2952
    %2954 = vrot.lane.b32.xlu0 %v2652, 112
    %v2955 = vpop.permute.xlu0 %2954
    %2956 = vrot.lane.b32.xlu0 %v2637, 80
    %v2957 = vpop.permute.xlu0 %2956
    %2958 = vrot.lane.b32.xlu0 %v2642, 80
    %v2959 = vpop.permute.xlu0 %2958
    %2960 = vrot.lane.b32.xlu0 %v2647, 80
    %v2961 = vpop.permute.xlu0 %2960
    %2962 = vrot.lane.b32.xlu0 %v2652, 80
    %v2963 = vpop.permute.xlu0 %2962
    %v2964 = vsel %vm510, %v2949, 0
    %v2966 = vsel %vm510, %v2951, 0
    %v2968 = vsel %vm510, %v2953, 0
    %v2970 = vsel %vm510, %v2955, 0
    %v2972 = vsel %vm510, %v2957, 0
    %v2974 = vsel %vm510, %v2959, 0
    %v2976 = vsel %vm510, %v2961, 0
    %v2978 = vsel %vm510, %v2963, 0
    %2980 = vmatprep.subr.mxu0 0.0
    %2981 = vmatpush1.xpose.msra.mxu0 0.0
    %2982 = vmatprep.subr.mxu0 0.0
    %2983 = vmatpush1.xpose.msra.mxu0 0.0
    %2984 = vmatprep.subr.mxu0 0.0
    %2985 = vmatpush1.xpose.msra.mxu0 0.0
    %2986 = vmatprep.subr.mxu0 0.0
    %2987 = vmatpush1.xpose.msra.mxu0 0.0
    %2988 = vmatprep.subr.mxu0 0.0
    %2989 = vmatpush1.xpose.msra.mxu0 0.0
    %2990 = vmatprep.subr.mxu0 0.0
    %2991 = vmatpush1.xpose.msra.mxu0 0.0
    %2992 = vmatprep.subr.mxu0 0.0
    %2993 = vmatpush1.xpose.msra.mxu0 0.0
    %2994 = vmatprep.subr.mxu0 0.0
    %2995 = vmatpush1.xpose.msra.mxu0 0.0
    %2996 = vmatprep.subr.mxu0 0.0
    %2997 = vmatpush1.xpose.msra.mxu0 0.0
    %2998 = vmatprep.subr.mxu0 0.0
    %2999 = vmatpush1.xpose.msra.mxu0 0.0
    %3000 = vmatprep.subr.mxu0 0.0
    %3001 = vmatpush1.xpose.msra.mxu0 0.0
    %3002 = vmatprep.subr.mxu0 0.0
    %3003 = vmatpush1.xpose.msra.mxu0 0.0
    %3004 = vmatprep.subr.mxu0 0.0
    %3005 = vmatpush1.xpose.msra.mxu0 %v2978
    %3006 = vmatprep.subr.mxu0 0.0
    %3007 = vmatpush1.xpose.msra.mxu0 %v2976
    %3008 = vmatprep.subr.mxu0 0.0
    %3009 = vmatpush1.xpose.msra.mxu0 %v2974
    %3010 = vmatprep.subr.mxu0 0.0
    %3011 = vmatpush1.xpose.msra.mxu0 %v2972
    %3012 = vmatprep.subr.mxu0 0.0
    %3013 = vmatpush2.xpose.msra.mxu0 0.0
    %3014 = vmatprep.subr.mxu0 0.0
    %3015 = vmatpush2.xpose.msra.mxu0 0.0
    %3016 = vmatprep.subr.mxu0 0.0
    %3017 = vmatpush2.xpose.msra.mxu0 0.0
    %3018 = vmatprep.subr.mxu0 0.0
    %3019 = vmatpush2.xpose.msra.mxu0 0.0
    %3020 = vmatprep.subr.mxu0 0.0
    %3021 = vmatpush2.xpose.msra.mxu0 0.0
    %3022 = vmatprep.subr.mxu0 0.0
    %3023 = vmatpush2.xpose.msra.mxu0 0.0
    %3024 = vmatprep.subr.mxu0 0.0
    %3025 = vmatpush2.xpose.msra.mxu0 0.0
    %3026 = vmatprep.subr.mxu0 0.0
    %3027 = vmatpush2.xpose.msra.mxu0 0.0
    %3028 = vmatprep.subr.mxu0 0.0
    %3029 = vmatpush2.xpose.msra.mxu0 0.0
    %3030 = vmatprep.subr.mxu0 0.0
    %3031 = vmatpush2.xpose.msra.mxu0 0.0
    %3032 = vmatprep.subr.mxu0 0.0
    %3033 = vmatpush2.xpose.msra.mxu0 0.0
    %3034 = vmatprep.subr.mxu0 0.0
    %3035 = vmatpush2.xpose.msra.mxu0 0.0
    %3036 = vmatprep.subr.mxu0 0.0
    %3037 = vmatpush2.xpose.msra.mxu0 0.0
    %3038 = vmatprep.subr.mxu0 0.0
    %3039 = vmatpush2.xpose.msra.mxu0 0.0
    %3040 = vmatprep.subr.mxu0 0.0
    %3041 = vmatpush2.xpose.msra.mxu0 0.0
    %3042 = vmatprep.subr.mxu0 0.0
    %3043 = vmatpush2.xpose.msra.mxu0 0.0
    %3044 = vmatprep.mubr.f32.mxu0 0.0
    %3045 = vmatmul.mubr.f32.gmra.mxu0 %v2964
    %v3046 = vpop.f32.mrf.mxu0
    %v3047 = vadd.f32 0.0, %v3046
    %v3048 = vpop.f32.mrf.mxu0
    %3049 = vmatprep.mubr.f32.mxu0 0.0
    %3050 = vmatmul.mubr.f32.gmra.mxu0 %v2966
    %v3051 = vpop.f32.mrf.mxu0
    %v3052 = vadd.f32 0.0, %v3051
    %v3053 = vpop.f32.mrf.mxu0
    %3054 = vmatprep.mubr.f32.mxu0 0.0
    %3055 = vmatmul.mubr.f32.gmra.mxu0 %v2968
    %v3056 = vpop.f32.mrf.mxu0
    %v3057 = vadd.f32 0.0, %v3056
    %v3058 = vpop.f32.mrf.mxu0
    %3059 = vmatprep.mubr.f32.mxu0 0.0
    %3060 = vmatmul.mubr.f32.gmra.mxu0 %v2970
    %v3061 = vpop.f32.mrf.mxu0
    %v3062 = vadd.f32 0.0, %v3061
    %v3063 = vpop.f32.mrf.mxu0
    %3064 = vdwg.mxu0
    %v3065 = vsel %vm224, %v3047, -1e+30
    %v3066 = vsel %vm225, %v3052, -1e+30
    %v3067 = vsel %vm226, %v3057, -1e+30
    %v3068 = vsel %vm227, %v3062, -1e+30
    %v3069 = vsel %vm235, %v3065, -inf
    %3070 = vmax.xlane.f32.xlu0 %v3069
    %v3071 = vpop.xlane.xlu0 %3070
    %v3072 = vsel %vm235, %v3066, -inf
    %3073 = vmax.xlane.f32.xlu0 %v3072
    %v3074 = vpop.xlane.xlu0 %3073
    %v3075 = vsel %vm235, %v3067, -inf
    %3076 = vmax.xlane.f32.xlu0 %v3075
    %v3077 = vpop.xlane.xlu0 %3076
    %v3078 = vsel %vm235, %v3068, -inf
    %3079 = vmax.xlane.f32.xlu0 %v3078
    %v3080 = vpop.xlane.xlu0 %3079
    %v3081 = vsub.f32 %v3065, %v3071
    %v3082 = vsub.f32 %v3066, %v3074
    %v3083 = vsub.f32 %v3067, %v3077
    %v3084 = vsub.f32 %v3068, %v3080
    %v3085 = vmul.f32 %v3081, 1.442695
    %v3086 = vpow.pop %v3085
    %v3087 = vmul.f32 %v3082, 1.442695
    %v3088 = vpow.pop %v3087
    %v3089 = vmul.f32 %v3083, 1.442695
    %v3090 = vpow.pop %v3089
    %v3091 = vmul.f32 %v3084, 1.442695
    %v3092 = vpow.pop %v3091
    %v3093 = vsel %vm235, %v3086, 0.0
    %3094 = vadd.xlane.f32.xlu0 %v3093
    %v3095 = vpop.xlane.xlu0 %3094
    %v3096 = vsel %vm235, %v3088, 0.0
    %3097 = vadd.xlane.f32.xlu0 %v3096
    %v3098 = vpop.xlane.xlu0 %3097
    %v3099 = vsel %vm235, %v3090, 0.0
    %3100 = vadd.xlane.f32.xlu0 %v3099
    %v3101 = vpop.xlane.xlu0 %3100
    %v3102 = vsel %vm235, %v3092, 0.0
    %3103 = vadd.xlane.f32.xlu0 %v3102
    %v3104 = vpop.xlane.xlu0 %3103
    %3105 = vrot.lane.b32.xlu0 %v2637, 48
    %v3106 = vpop.permute.xlu0 %3105
    %3107 = vrot.lane.b32.xlu0 %v2642, 48
    %v3108 = vpop.permute.xlu0 %3107
    %3109 = vrot.lane.b32.xlu0 %v2647, 48
    %v3110 = vpop.permute.xlu0 %3109
    %3111 = vrot.lane.b32.xlu0 %v2652, 48
    %v3112 = vpop.permute.xlu0 %3111
    %v3118 = vsel %vm235, %v3086, 0
    %v3121 = vsel %vm235, %v3088, 0
    %v3124 = vsel %vm235, %v3090, 0
    %v3127 = vsel %vm235, %v3092, 0
    %3129 = vmatprep.subr.mxu0 0.0
    %3130 = vmatpush1.msra.mxu0 0.0
    %3131 = vmatprep.subr.mxu0 0.0
    %3132 = vmatpush1.msra.mxu0 0.0
    %3133 = vmatprep.subr.mxu0 0.0
    %3134 = vmatpush1.msra.mxu0 0.0
    %3135 = vmatprep.subr.mxu0 0.0
    %3136 = vmatpush1.msra.mxu0 0.0
    %3137 = vmatprep.subr.mxu0 0.0
    %3138 = vmatpush1.msra.mxu0 0.0
    %3139 = vmatprep.subr.mxu0 0.0
    %3140 = vmatpush1.msra.mxu0 0.0
    %3141 = vmatprep.subr.mxu0 0.0
    %3142 = vmatpush1.msra.mxu0 0.0
    %3143 = vmatprep.subr.mxu0 0.0
    %3144 = vmatpush1.msra.mxu0 0.0
    %3145 = vmatprep.subr.mxu0 0.0
    %3146 = vmatpush1.msra.mxu0 0.0
    %3147 = vmatprep.subr.mxu0 0.0
    %3148 = vmatpush1.msra.mxu0 0.0
    %3149 = vmatprep.subr.mxu0 0.0
    %3150 = vmatpush1.msra.mxu0 0.0
    %3151 = vmatprep.subr.mxu0 0.0
    %3152 = vmatpush1.msra.mxu0 0.0
    %3153 = vmatprep.subr.mxu0 0.0
    %3154 = vmatpush1.msra.mxu0 %v3112
    %3155 = vmatprep.subr.mxu0 0.0
    %3156 = vmatpush1.msra.mxu0 %v3110
    %3157 = vmatprep.subr.mxu0 0.0
    %3158 = vmatpush1.msra.mxu0 %v3108
    %3159 = vmatprep.subr.mxu0 0.0
    %3160 = vmatpush1.msra.mxu0 %v3106
    %3161 = vmatprep.subr.mxu0 0.0
    %3162 = vmatpush2.msra.mxu0 0.0
    %3163 = vmatprep.subr.mxu0 0.0
    %3164 = vmatpush2.msra.mxu0 0.0
    %3165 = vmatprep.subr.mxu0 0.0
    %3166 = vmatpush2.msra.mxu0 0.0
    %3167 = vmatprep.subr.mxu0 0.0
    %3168 = vmatpush2.msra.mxu0 0.0
    %3169 = vmatprep.subr.mxu0 0.0
    %3170 = vmatpush2.msra.mxu0 0.0
    %3171 = vmatprep.subr.mxu0 0.0
    %3172 = vmatpush2.msra.mxu0 0.0
    %3173 = vmatprep.subr.mxu0 0.0
    %3174 = vmatpush2.msra.mxu0 0.0
    %3175 = vmatprep.subr.mxu0 0.0
    %3176 = vmatpush2.msra.mxu0 0.0
    %3177 = vmatprep.subr.mxu0 0.0
    %3178 = vmatpush2.msra.mxu0 0.0
    %3179 = vmatprep.subr.mxu0 0.0
    %3180 = vmatpush2.msra.mxu0 0.0
    %3181 = vmatprep.subr.mxu0 0.0
    %3182 = vmatpush2.msra.mxu0 0.0
    %3183 = vmatprep.subr.mxu0 0.0
    %3184 = vmatpush2.msra.mxu0 0.0
    %3185 = vmatprep.subr.mxu0 0.0
    %3186 = vmatpush2.msra.mxu0 0.0
    %3187 = vmatprep.subr.mxu0 0.0
    %3188 = vmatpush2.msra.mxu0 0.0
    %3189 = vmatprep.subr.mxu0 0.0
    %3190 = vmatpush2.msra.mxu0 0.0
    %3191 = vmatprep.subr.mxu0 0.0
    %3192 = vmatpush2.msra.mxu0 0.0
    %3193 = vmatprep.mubr.f32.mxu0 0.0
    %3194 = vmatmul.mubr.f32.gmra.mxu0 %v3118
    %v3195 = vpop.f32.mrf.mxu0
    %v3196 = vadd.f32 0.0, %v3195
    %v3197 = vpop.f32.mrf.mxu0
    %3198 = vmatprep.mubr.f32.mxu0 0.0
    %3199 = vmatmul.mubr.f32.gmra.mxu0 %v3121
    %v3200 = vpop.f32.mrf.mxu0
    %v3201 = vadd.f32 0.0, %v3200
    %v3202 = vpop.f32.mrf.mxu0
    %3203 = vmatprep.mubr.f32.mxu0 0.0
    %3204 = vmatmul.mubr.f32.gmra.mxu0 %v3124
    %v3205 = vpop.f32.mrf.mxu0
    %v3206 = vadd.f32 0.0, %v3205
    %v3207 = vpop.f32.mrf.mxu0
    %3208 = vmatprep.mubr.f32.mxu0 0.0
    %3209 = vmatmul.mubr.f32.gmra.mxu0 %v3127
    %v3210 = vpop.f32.mrf.mxu0
    %v3211 = vadd.f32 0.0, %v3210
    %v3212 = vpop.f32.mrf.mxu0
    %3213 = vdwg.mxu0
    %v3214 = vrcp.pop %v3095
    %v3215 = vmul.f32 %v3196, %v3214
    %v3216 = vrcp.pop %v3098
    %v3217 = vmul.f32 %v3201, %v3216
    %v3218 = vrcp.pop %v3101
    %v3219 = vmul.f32 %v3206, %v3218
    %v3220 = vrcp.pop %v3104
    %v3221 = vmul.f32 %v3211, %v3220
    %v3222 = vld [vmem:[%s2945 + $0x10] sm:$0xff]
    %v3223 = vld [vmem:[%s2945 + $0x18] sm:$0xff]
    %v3225 = vsel %vm510, %v3215, 0
    %v3228 = vsel %vm510, %v3217, 0
    %v3231 = vsel %vm510, %v3219, 0
    %v3234 = vsel %vm510, %v3221, 0
    %3236 = vmatprep.subr.mxu0 0.0
    %3237 = vmatpush1.msra.mxu0 0.0
    %3238 = vmatprep.subr.mxu0 0.0
    %3239 = vmatpush1.msra.mxu0 0.0
    %3240 = vmatprep.subr.mxu0 0.0
    %3241 = vmatpush1.msra.mxu0 0.0
    %3242 = vmatprep.subr.mxu0 0.0
    %3243 = vmatpush1.msra.mxu0 0.0
    %3244 = vmatprep.subr.mxu0 0.0
    %3245 = vmatpush1.msra.mxu0 0.0
    %3246 = vmatprep.subr.mxu0 0.0
    %3247 = vmatpush1.msra.mxu0 0.0
    %3248 = vmatprep.subr.mxu0 0.0
    %3249 = vmatpush1.msra.mxu0 0.0
    %3250 = vmatprep.subr.mxu0 0.0
    %3251 = vmatpush1.msra.mxu0 0.0
    %3252 = vmatprep.subr.mxu0 0.0
    %3253 = vmatpush1.msra.mxu0 0.0
    %3254 = vmatprep.subr.mxu0 0.0
    %3255 = vmatpush1.msra.mxu0 0.0
    %3256 = vmatprep.subr.mxu0 0.0
    %3257 = vmatpush1.msra.mxu0 0.0
    %3258 = vmatprep.subr.mxu0 0.0
    %3259 = vmatpush1.msra.mxu0 0.0
    %3260 = vmatprep.subr.mxu0 0.0
    %3261 = vmatpush1.msra.mxu0 0.0
    %3262 = vmatprep.subr.mxu0 0.0
    %3263 = vmatpush1.msra.mxu0 0.0
    %3264 = vmatprep.subr.mxu0 0.0
    %3265 = vmatpush1.msra.mxu0 %v3223
    %3266 = vmatprep.subr.mxu0 0.0
    %3267 = vmatpush1.msra.mxu0 %v3222
    %3268 = vmatprep.subr.mxu0 0.0
    %3269 = vmatpush2.msra.mxu0 0.0
    %3270 = vmatprep.subr.mxu0 0.0
    %3271 = vmatpush2.msra.mxu0 0.0
    %3272 = vmatprep.subr.mxu0 0.0
    %3273 = vmatpush2.msra.mxu0 0.0
    %3274 = vmatprep.subr.mxu0 0.0
    %3275 = vmatpush2.msra.mxu0 0.0
    %3276 = vmatprep.subr.mxu0 0.0
    %3277 = vmatpush2.msra.mxu0 0.0
    %3278 = vmatprep.subr.mxu0 0.0
    %3279 = vmatpush2.msra.mxu0 0.0
    %3280 = vmatprep.subr.mxu0 0.0
    %3281 = vmatpush2.msra.mxu0 0.0
    %3282 = vmatprep.subr.mxu0 0.0
    %3283 = vmatpush2.msra.mxu0 0.0
    %3284 = vmatprep.subr.mxu0 0.0
    %3285 = vmatpush2.msra.mxu0 0.0
    %3286 = vmatprep.subr.mxu0 0.0
    %3287 = vmatpush2.msra.mxu0 0.0
    %3288 = vmatprep.subr.mxu0 0.0
    %3289 = vmatpush2.msra.mxu0 0.0
    %3290 = vmatprep.subr.mxu0 0.0
    %3291 = vmatpush2.msra.mxu0 0.0
    %3292 = vmatprep.subr.mxu0 0.0
    %3293 = vmatpush2.msra.mxu0 0.0
    %3294 = vmatprep.subr.mxu0 0.0
    %3295 = vmatpush2.msra.mxu0 0.0
    %3296 = vmatprep.subr.mxu0 0.0
    %3297 = vmatpush2.msra.mxu0 0.0
    %3298 = vmatprep.subr.mxu0 0.0
    %3299 = vmatpush2.msra.mxu0 0.0
    %3300 = vmatprep.mubr.f32.mxu0 0.0
    %3301 = vmatmul.mubr.f32.gmra.mxu0 %v3225
    %v3302 = vpop.f32.mrf.mxu0
    %v3303 = vadd.f32 0.0, %v3302
    %v3304 = vpop.f32.mrf.mxu0
    %3305 = vmatprep.mubr.f32.mxu0 0.0
    %3306 = vmatmul.mubr.f32.gmra.mxu0 %v3228
    %v3307 = vpop.f32.mrf.mxu0
    %v3308 = vadd.f32 0.0, %v3307
    %v3309 = vpop.f32.mrf.mxu0
    %3310 = vmatprep.mubr.f32.mxu0 0.0
    %3311 = vmatmul.mubr.f32.gmra.mxu0 %v3231
    %v3312 = vpop.f32.mrf.mxu0
    %v3313 = vadd.f32 0.0, %v3312
    %v3314 = vpop.f32.mrf.mxu0
    %3315 = vmatprep.mubr.f32.mxu0 0.0
    %3316 = vmatmul.mubr.f32.gmra.mxu0 %v3234
    %v3317 = vpop.f32.mrf.mxu0
    %v3318 = vadd.f32 0.0, %v3317
    %v3319 = vpop.f32.mrf.mxu0
    %3320 = vdwg.mxu0
    %v3322 = vsel %vm510, %v2938, 0
    %v3325 = vsel %vm510, %v2940, 0
    %v3328 = vsel %vm510, %v2942, 0
    %v3331 = vsel %vm510, %v2944, 0
    %3333 = vmatprep.subr.mxu0 0.0
    %3334 = vmatpush1.msra.mxu0 0.0
    %3335 = vmatprep.subr.mxu0 0.0
    %3336 = vmatpush1.msra.mxu0 0.0
    %3337 = vmatprep.subr.mxu0 0.0
    %3338 = vmatpush1.msra.mxu0 0.0
    %3339 = vmatprep.subr.mxu0 0.0
    %3340 = vmatpush1.msra.mxu0 0.0
    %3341 = vmatprep.subr.mxu0 0.0
    %3342 = vmatpush1.msra.mxu0 0.0
    %3343 = vmatprep.subr.mxu0 0.0
    %3344 = vmatpush1.msra.mxu0 0.0
    %3345 = vmatprep.subr.mxu0 0.0
    %3346 = vmatpush1.msra.mxu0 0.0
    %3347 = vmatprep.subr.mxu0 0.0
    %3348 = vmatpush1.msra.mxu0 0.0
    %3349 = vmatprep.subr.mxu0 0.0
    %3350 = vmatpush1.msra.mxu0 0.0
    %3351 = vmatprep.subr.mxu0 0.0
    %3352 = vmatpush1.msra.mxu0 0.0
    %3353 = vmatprep.subr.mxu0 0.0
    %3354 = vmatpush1.msra.mxu0 0.0
    %3355 = vmatprep.subr.mxu0 0.0
    %3356 = vmatpush1.msra.mxu0 0.0
    %3357 = vmatprep.subr.mxu0 0.0
    %3358 = vmatpush1.msra.mxu0 0.0
    %3359 = vmatprep.subr.mxu0 0.0
    %3360 = vmatpush1.msra.mxu0 0.0
    %3361 = vmatprep.subr.mxu0 0.0
    %3362 = vmatpush1.msra.mxu0 %v2947
    %3363 = vmatprep.subr.mxu0 0.0
    %3364 = vmatpush1.msra.mxu0 %v2946
    %3365 = vmatprep.subr.mxu0 0.0
    %3366 = vmatpush2.msra.mxu0 0.0
    %3367 = vmatprep.subr.mxu0 0.0
    %3368 = vmatpush2.msra.mxu0 0.0
    %3369 = vmatprep.subr.mxu0 0.0
    %3370 = vmatpush2.msra.mxu0 0.0
    %3371 = vmatprep.subr.mxu0 0.0
    %3372 = vmatpush2.msra.mxu0 0.0
    %3373 = vmatprep.subr.mxu0 0.0
    %3374 = vmatpush2.msra.mxu0 0.0
    %3375 = vmatprep.subr.mxu0 0.0
    %3376 = vmatpush2.msra.mxu0 0.0
    %3377 = vmatprep.subr.mxu0 0.0
    %3378 = vmatpush2.msra.mxu0 0.0
    %3379 = vmatprep.subr.mxu0 0.0
    %3380 = vmatpush2.msra.mxu0 0.0
    %3381 = vmatprep.subr.mxu0 0.0
    %3382 = vmatpush2.msra.mxu0 0.0
    %3383 = vmatprep.subr.mxu0 0.0
    %3384 = vmatpush2.msra.mxu0 0.0
    %3385 = vmatprep.subr.mxu0 0.0
    %3386 = vmatpush2.msra.mxu0 0.0
    %3387 = vmatprep.subr.mxu0 0.0
    %3388 = vmatpush2.msra.mxu0 0.0
    %3389 = vmatprep.subr.mxu0 0.0
    %3390 = vmatpush2.msra.mxu0 0.0
    %3391 = vmatprep.subr.mxu0 0.0
    %3392 = vmatpush2.msra.mxu0 0.0
    %3393 = vmatprep.subr.mxu0 0.0
    %3394 = vmatpush2.msra.mxu0 0.0
    %3395 = vmatprep.subr.mxu0 0.0
    %3396 = vmatpush2.msra.mxu0 0.0
    %3397 = vmatprep.mubr.f32.mxu0 0.0
    %3398 = vmatmul.mubr.f32.gmra.mxu0 %v3322
    %v3399 = vpop.f32.mrf.mxu0
    %v3400 = vadd.f32 %v3303, %v3399
    %v3401 = vpop.f32.mrf.mxu0
    %3402 = vmatprep.mubr.f32.mxu0 0.0
    %3403 = vmatmul.mubr.f32.gmra.mxu0 %v3325
    %v3404 = vpop.f32.mrf.mxu0
    %v3405 = vadd.f32 %v3308, %v3404
    %v3406 = vpop.f32.mrf.mxu0
    %3407 = vmatprep.mubr.f32.mxu0 0.0
    %3408 = vmatmul.mubr.f32.gmra.mxu0 %v3328
    %v3409 = vpop.f32.mrf.mxu0
    %v3410 = vadd.f32 %v3313, %v3409
    %v3411 = vpop.f32.mrf.mxu0
    %3412 = vmatprep.mubr.f32.mxu0 0.0
    %3413 = vmatmul.mubr.f32.gmra.mxu0 %v3331
    %v3414 = vpop.f32.mrf.mxu0
    %v3415 = vadd.f32 %v3318, %v3414
    %v3416 = vpop.f32.mrf.mxu0
    %3417 = vdwg.mxu0
    %3422 = vrot.lane.b32.xlu0 %v2657, 96
    %v3423 = vpop.permute.xlu0 %3422
    %3424 = vrot.lane.b32.xlu0 %v2662, 96
    %v3425 = vpop.permute.xlu0 %3424
    %3426 = vrot.lane.b32.xlu0 %v2667, 96
    %v3427 = vpop.permute.xlu0 %3426
    %3428 = vrot.lane.b32.xlu0 %v2672, 96
    %v3429 = vpop.permute.xlu0 %3428
    %v3430 = vsel %vm510, %v2657, 0
    %v3432 = vsel %vm510, %v2662, 0
    %v3434 = vsel %vm510, %v2667, 0
    %v3436 = vsel %vm510, %v2672, 0
    %v3438 = vsel %vm510, %v3423, 0
    %v3440 = vsel %vm510, %v3425, 0
    %v3442 = vsel %vm510, %v3427, 0
    %v3444 = vsel %vm510, %v3429, 0
    %3446 = vmatprep.subr.mxu0 0.0
    %3447 = vmatpush1.xpose.msra.mxu0 0.0
    %3448 = vmatprep.subr.mxu0 0.0
    %3449 = vmatpush1.xpose.msra.mxu0 0.0
    %3450 = vmatprep.subr.mxu0 0.0
    %3451 = vmatpush1.xpose.msra.mxu0 0.0
    %3452 = vmatprep.subr.mxu0 0.0
    %3453 = vmatpush1.xpose.msra.mxu0 0.0
    %3454 = vmatprep.subr.mxu0 0.0
    %3455 = vmatpush1.xpose.msra.mxu0 0.0
    %3456 = vmatprep.subr.mxu0 0.0
    %3457 = vmatpush1.xpose.msra.mxu0 0.0
    %3458 = vmatprep.subr.mxu0 0.0
    %3459 = vmatpush1.xpose.msra.mxu0 0.0
    %3460 = vmatprep.subr.mxu0 0.0
    %3461 = vmatpush1.xpose.msra.mxu0 0.0
    %3462 = vmatprep.subr.mxu0 0.0
    %3463 = vmatpush1.xpose.msra.mxu0 0.0
    %3464 = vmatprep.subr.mxu0 0.0
    %3465 = vmatpush1.xpose.msra.mxu0 0.0
    %3466 = vmatprep.subr.mxu0 0.0
    %3467 = vmatpush1.xpose.msra.mxu0 0.0
    %3468 = vmatprep.subr.mxu0 0.0
    %3469 = vmatpush1.xpose.msra.mxu0 0.0
    %3470 = vmatprep.subr.mxu0 0.0
    %3471 = vmatpush1.xpose.msra.mxu0 %v3444
    %3472 = vmatprep.subr.mxu0 0.0
    %3473 = vmatpush1.xpose.msra.mxu0 %v3442
    %3474 = vmatprep.subr.mxu0 0.0
    %3475 = vmatpush1.xpose.msra.mxu0 %v3440
    %3476 = vmatprep.subr.mxu0 0.0
    %3477 = vmatpush1.xpose.msra.mxu0 %v3438
    %3478 = vmatprep.subr.mxu0 0.0
    %3479 = vmatpush2.xpose.msra.mxu0 0.0
    %3480 = vmatprep.subr.mxu0 0.0
    %3481 = vmatpush2.xpose.msra.mxu0 0.0
    %3482 = vmatprep.subr.mxu0 0.0
    %3483 = vmatpush2.xpose.msra.mxu0 0.0
    %3484 = vmatprep.subr.mxu0 0.0
    %3485 = vmatpush2.xpose.msra.mxu0 0.0
    %3486 = vmatprep.subr.mxu0 0.0
    %3487 = vmatpush2.xpose.msra.mxu0 0.0
    %3488 = vmatprep.subr.mxu0 0.0
    %3489 = vmatpush2.xpose.msra.mxu0 0.0
    %3490 = vmatprep.subr.mxu0 0.0
    %3491 = vmatpush2.xpose.msra.mxu0 0.0
    %3492 = vmatprep.subr.mxu0 0.0
    %3493 = vmatpush2.xpose.msra.mxu0 0.0
    %3494 = vmatprep.subr.mxu0 0.0
    %3495 = vmatpush2.xpose.msra.mxu0 0.0
    %3496 = vmatprep.subr.mxu0 0.0
    %3497 = vmatpush2.xpose.msra.mxu0 0.0
    %3498 = vmatprep.subr.mxu0 0.0
    %3499 = vmatpush2.xpose.msra.mxu0 0.0
    %3500 = vmatprep.subr.mxu0 0.0
    %3501 = vmatpush2.xpose.msra.mxu0 0.0
    %3502 = vmatprep.subr.mxu0 0.0
    %3503 = vmatpush2.xpose.msra.mxu0 0.0
    %3504 = vmatprep.subr.mxu0 0.0
    %3505 = vmatpush2.xpose.msra.mxu0 0.0
    %3506 = vmatprep.subr.mxu0 0.0
    %3507 = vmatpush2.xpose.msra.mxu0 0.0
    %3508 = vmatprep.subr.mxu0 0.0
    %3509 = vmatpush2.xpose.msra.mxu0 0.0
    %3510 = vmatprep.mubr.f32.mxu0 0.0
    %3511 = vmatmul.mubr.f32.gmra.mxu0 %v3430
    %v3512 = vpop.f32.mrf.mxu0
    %v3513 = vadd.f32 0.0, %v3512
    %v3514 = vpop.f32.mrf.mxu0
    %3515 = vmatprep.mubr.f32.mxu0 0.0
    %3516 = vmatmul.mubr.f32.gmra.mxu0 %v3432
    %v3517 = vpop.f32.mrf.mxu0
    %v3518 = vadd.f32 0.0, %v3517
    %v3519 = vpop.f32.mrf.mxu0
    %3520 = vmatprep.mubr.f32.mxu0 0.0
    %3521 = vmatmul.mubr.f32.gmra.mxu0 %v3434
    %v3522 = vpop.f32.mrf.mxu0
    %v3523 = vadd.f32 0.0, %v3522
    %v3524 = vpop.f32.mrf.mxu0
    %3525 = vmatprep.mubr.f32.mxu0 0.0
    %3526 = vmatmul.mubr.f32.gmra.mxu0 %v3436
    %v3527 = vpop.f32.mrf.mxu0
    %v3528 = vadd.f32 0.0, %v3527
    %v3529 = vpop.f32.mrf.mxu0
    %3530 = vdwg.mxu0
    %v3531 = vsel %vm224, %v3513, -1e+30
    %v3532 = vsel %vm225, %v3518, -1e+30
    %v3533 = vsel %vm226, %v3523, -1e+30
    %v3534 = vsel %vm227, %v3528, -1e+30
    %v3535 = vsel %vm235, %v3531, -inf
    %3536 = vmax.xlane.f32.xlu0 %v3535
    %v3537 = vpop.xlane.xlu0 %3536
    %v3538 = vsel %vm235, %v3532, -inf
    %3539 = vmax.xlane.f32.xlu0 %v3538
    %v3540 = vpop.xlane.xlu0 %3539
    %v3541 = vsel %vm235, %v3533, -inf
    %3542 = vmax.xlane.f32.xlu0 %v3541
    %v3543 = vpop.xlane.xlu0 %3542
    %v3544 = vsel %vm235, %v3534, -inf
    %3545 = vmax.xlane.f32.xlu0 %v3544
    %v3546 = vpop.xlane.xlu0 %3545
    %v3547 = vsub.f32 %v3531, %v3537
    %v3548 = vsub.f32 %v3532, %v3540
    %v3549 = vsub.f32 %v3533, %v3543
    %v3550 = vsub.f32 %v3534, %v3546
    %v3551 = vmul.f32 %v3547, 1.442695
    %v3552 = vpow.pop %v3551
    %v3553 = vmul.f32 %v3548, 1.442695
    %v3554 = vpow.pop %v3553
    %v3555 = vmul.f32 %v3549, 1.442695
    %v3556 = vpow.pop %v3555
    %v3557 = vmul.f32 %v3550, 1.442695
    %v3558 = vpow.pop %v3557
    %v3559 = vsel %vm235, %v3552, 0.0
    %3560 = vadd.xlane.f32.xlu0 %v3559
    %v3561 = vpop.xlane.xlu0 %3560
    %v3562 = vsel %vm235, %v3554, 0.0
    %3563 = vadd.xlane.f32.xlu0 %v3562
    %v3564 = vpop.xlane.xlu0 %3563
    %v3565 = vsel %vm235, %v3556, 0.0
    %3566 = vadd.xlane.f32.xlu0 %v3565
    %v3567 = vpop.xlane.xlu0 %3566
    %v3568 = vsel %vm235, %v3558, 0.0
    %3569 = vadd.xlane.f32.xlu0 %v3568
    %v3570 = vpop.xlane.xlu0 %3569
    %3571 = vrot.lane.b32.xlu0 %v2657, 64
    %v3572 = vpop.permute.xlu0 %3571
    %3573 = vrot.lane.b32.xlu0 %v2662, 64
    %v3574 = vpop.permute.xlu0 %3573
    %3575 = vrot.lane.b32.xlu0 %v2667, 64
    %v3576 = vpop.permute.xlu0 %3575
    %3577 = vrot.lane.b32.xlu0 %v2672, 64
    %v3578 = vpop.permute.xlu0 %3577
    %v3584 = vsel %vm235, %v3552, 0
    %v3587 = vsel %vm235, %v3554, 0
    %v3590 = vsel %vm235, %v3556, 0
    %v3593 = vsel %vm235, %v3558, 0
    %3595 = vmatprep.subr.mxu0 0.0
    %3596 = vmatpush1.msra.mxu0 0.0
    %3597 = vmatprep.subr.mxu0 0.0
    %3598 = vmatpush1.msra.mxu0 0.0
    %3599 = vmatprep.subr.mxu0 0.0
    %3600 = vmatpush1.msra.mxu0 0.0
    %3601 = vmatprep.subr.mxu0 0.0
    %3602 = vmatpush1.msra.mxu0 0.0
    %3603 = vmatprep.subr.mxu0 0.0
    %3604 = vmatpush1.msra.mxu0 0.0
    %3605 = vmatprep.subr.mxu0 0.0
    %3606 = vmatpush1.msra.mxu0 0.0
    %3607 = vmatprep.subr.mxu0 0.0
    %3608 = vmatpush1.msra.mxu0 0.0
    %3609 = vmatprep.subr.mxu0 0.0
    %3610 = vmatpush1.msra.mxu0 0.0
    %3611 = vmatprep.subr.mxu0 0.0
    %3612 = vmatpush1.msra.mxu0 0.0
    %3613 = vmatprep.subr.mxu0 0.0
    %3614 = vmatpush1.msra.mxu0 0.0
    %3615 = vmatprep.subr.mxu0 0.0
    %3616 = vmatpush1.msra.mxu0 0.0
    %3617 = vmatprep.subr.mxu0 0.0
    %3618 = vmatpush1.msra.mxu0 0.0
    %3619 = vmatprep.subr.mxu0 0.0
    %3620 = vmatpush1.msra.mxu0 %v3578
    %3621 = vmatprep.subr.mxu0 0.0
    %3622 = vmatpush1.msra.mxu0 %v3576
    %3623 = vmatprep.subr.mxu0 0.0
    %3624 = vmatpush1.msra.mxu0 %v3574
    %3625 = vmatprep.subr.mxu0 0.0
    %3626 = vmatpush1.msra.mxu0 %v3572
    %3627 = vmatprep.subr.mxu0 0.0
    %3628 = vmatpush2.msra.mxu0 0.0
    %3629 = vmatprep.subr.mxu0 0.0
    %3630 = vmatpush2.msra.mxu0 0.0
    %3631 = vmatprep.subr.mxu0 0.0
    %3632 = vmatpush2.msra.mxu0 0.0
    %3633 = vmatprep.subr.mxu0 0.0
    %3634 = vmatpush2.msra.mxu0 0.0
    %3635 = vmatprep.subr.mxu0 0.0
    %3636 = vmatpush2.msra.mxu0 0.0
    %3637 = vmatprep.subr.mxu0 0.0
    %3638 = vmatpush2.msra.mxu0 0.0
    %3639 = vmatprep.subr.mxu0 0.0
    %3640 = vmatpush2.msra.mxu0 0.0
    %3641 = vmatprep.subr.mxu0 0.0
    %3642 = vmatpush2.msra.mxu0 0.0
    %3643 = vmatprep.subr.mxu0 0.0
    %3644 = vmatpush2.msra.mxu0 0.0
    %3645 = vmatprep.subr.mxu0 0.0
    %3646 = vmatpush2.msra.mxu0 0.0
    %3647 = vmatprep.subr.mxu0 0.0
    %3648 = vmatpush2.msra.mxu0 0.0
    %3649 = vmatprep.subr.mxu0 0.0
    %3650 = vmatpush2.msra.mxu0 0.0
    %3651 = vmatprep.subr.mxu0 0.0
    %3652 = vmatpush2.msra.mxu0 0.0
    %3653 = vmatprep.subr.mxu0 0.0
    %3654 = vmatpush2.msra.mxu0 0.0
    %3655 = vmatprep.subr.mxu0 0.0
    %3656 = vmatpush2.msra.mxu0 0.0
    %3657 = vmatprep.subr.mxu0 0.0
    %3658 = vmatpush2.msra.mxu0 0.0
    %3659 = vmatprep.mubr.f32.mxu0 0.0
    %3660 = vmatmul.mubr.f32.gmra.mxu0 %v3584
    %v3661 = vpop.f32.mrf.mxu0
    %v3662 = vadd.f32 0.0, %v3661
    %v3663 = vpop.f32.mrf.mxu0
    %3664 = vmatprep.mubr.f32.mxu0 0.0
    %3665 = vmatmul.mubr.f32.gmra.mxu0 %v3587
    %v3666 = vpop.f32.mrf.mxu0
    %v3667 = vadd.f32 0.0, %v3666
    %v3668 = vpop.f32.mrf.mxu0
    %3669 = vmatprep.mubr.f32.mxu0 0.0
    %3670 = vmatmul.mubr.f32.gmra.mxu0 %v3590
    %v3671 = vpop.f32.mrf.mxu0
    %v3672 = vadd.f32 0.0, %v3671
    %v3673 = vpop.f32.mrf.mxu0
    %3674 = vmatprep.mubr.f32.mxu0 0.0
    %3675 = vmatmul.mubr.f32.gmra.mxu0 %v3593
    %v3676 = vpop.f32.mrf.mxu0
    %v3677 = vadd.f32 0.0, %v3676
    %v3678 = vpop.f32.mrf.mxu0
    %3679 = vdwg.mxu0
    %v3680 = vrcp.pop %v3561
    %v3681 = vmul.f32 %v3662, %v3680
    %v3682 = vrcp.pop %v3564
    %v3683 = vmul.f32 %v3667, %v3682
    %v3684 = vrcp.pop %v3567
    %v3685 = vmul.f32 %v3672, %v3684
    %v3686 = vrcp.pop %v3570
    %v3687 = vmul.f32 %v3677, %v3686
    %3688 = vrot.lane.b32.xlu0 %v2657, 112
    %v3689 = vpop.permute.xlu0 %3688
    %3690 = vrot.lane.b32.xlu0 %v2662, 112
    %v3691 = vpop.permute.xlu0 %3690
    %3692 = vrot.lane.b32.xlu0 %v2667, 112
    %v3693 = vpop.permute.xlu0 %3692
    %3694 = vrot.lane.b32.xlu0 %v2672, 112
    %v3695 = vpop.permute.xlu0 %3694
    %3696 = vrot.lane.b32.xlu0 %v2657, 80
    %v3697 = vpop.permute.xlu0 %3696
    %3698 = vrot.lane.b32.xlu0 %v2662, 80
    %v3699 = vpop.permute.xlu0 %3698
    %3700 = vrot.lane.b32.xlu0 %v2667, 80
    %v3701 = vpop.permute.xlu0 %3700
    %3702 = vrot.lane.b32.xlu0 %v2672, 80
    %v3703 = vpop.permute.xlu0 %3702
    %v3704 = vsel %vm510, %v3689, 0
    %v3706 = vsel %vm510, %v3691, 0
    %v3708 = vsel %vm510, %v3693, 0
    %v3710 = vsel %vm510, %v3695, 0
    %v3712 = vsel %vm510, %v3697, 0
    %v3714 = vsel %vm510, %v3699, 0
    %v3716 = vsel %vm510, %v3701, 0
    %v3718 = vsel %vm510, %v3703, 0
    %3720 = vmatprep.subr.mxu0 0.0
    %3721 = vmatpush1.xpose.msra.mxu0 0.0
    %3722 = vmatprep.subr.mxu0 0.0
    %3723 = vmatpush1.xpose.msra.mxu0 0.0
    %3724 = vmatprep.subr.mxu0 0.0
    %3725 = vmatpush1.xpose.msra.mxu0 0.0
    %3726 = vmatprep.subr.mxu0 0.0
    %3727 = vmatpush1.xpose.msra.mxu0 0.0
    %3728 = vmatprep.subr.mxu0 0.0
    %3729 = vmatpush1.xpose.msra.mxu0 0.0
    %3730 = vmatprep.subr.mxu0 0.0
    %3731 = vmatpush1.xpose.msra.mxu0 0.0
    %3732 = vmatprep.subr.mxu0 0.0
    %3733 = vmatpush1.xpose.msra.mxu0 0.0
    %3734 = vmatprep.subr.mxu0 0.0
    %3735 = vmatpush1.xpose.msra.mxu0 0.0
    %3736 = vmatprep.subr.mxu0 0.0
    %3737 = vmatpush1.xpose.msra.mxu0 0.0
    %3738 = vmatprep.subr.mxu0 0.0
    %3739 = vmatpush1.xpose.msra.mxu0 0.0
    %3740 = vmatprep.subr.mxu0 0.0
    %3741 = vmatpush1.xpose.msra.mxu0 0.0
    %3742 = vmatprep.subr.mxu0 0.0
    %3743 = vmatpush1.xpose.msra.mxu0 0.0
    %3744 = vmatprep.subr.mxu0 0.0
    %3745 = vmatpush1.xpose.msra.mxu0 %v3718
    %3746 = vmatprep.subr.mxu0 0.0
    %3747 = vmatpush1.xpose.msra.mxu0 %v3716
    %3748 = vmatprep.subr.mxu0 0.0
    %3749 = vmatpush1.xpose.msra.mxu0 %v3714
    %3750 = vmatprep.subr.mxu0 0.0
    %3751 = vmatpush1.xpose.msra.mxu0 %v3712
    %3752 = vmatprep.subr.mxu0 0.0
    %3753 = vmatpush2.xpose.msra.mxu0 0.0
    %3754 = vmatprep.subr.mxu0 0.0
    %3755 = vmatpush2.xpose.msra.mxu0 0.0
    %3756 = vmatprep.subr.mxu0 0.0
    %3757 = vmatpush2.xpose.msra.mxu0 0.0
    %3758 = vmatprep.subr.mxu0 0.0
    %3759 = vmatpush2.xpose.msra.mxu0 0.0
    %3760 = vmatprep.subr.mxu0 0.0
    %3761 = vmatpush2.xpose.msra.mxu0 0.0
    %3762 = vmatprep.subr.mxu0 0.0
    %3763 = vmatpush2.xpose.msra.mxu0 0.0
    %3764 = vmatprep.subr.mxu0 0.0
    %3765 = vmatpush2.xpose.msra.mxu0 0.0
    %3766 = vmatprep.subr.mxu0 0.0
    %3767 = vmatpush2.xpose.msra.mxu0 0.0
    %3768 = vmatprep.subr.mxu0 0.0
    %3769 = vmatpush2.xpose.msra.mxu0 0.0
    %3770 = vmatprep.subr.mxu0 0.0
    %3771 = vmatpush2.xpose.msra.mxu0 0.0
    %3772 = vmatprep.subr.mxu0 0.0
    %3773 = vmatpush2.xpose.msra.mxu0 0.0
    %3774 = vmatprep.subr.mxu0 0.0
    %3775 = vmatpush2.xpose.msra.mxu0 0.0
    %3776 = vmatprep.subr.mxu0 0.0
    %3777 = vmatpush2.xpose.msra.mxu0 0.0
    %3778 = vmatprep.subr.mxu0 0.0
    %3779 = vmatpush2.xpose.msra.mxu0 0.0
    %3780 = vmatprep.subr.mxu0 0.0
    %3781 = vmatpush2.xpose.msra.mxu0 0.0
    %3782 = vmatprep.subr.mxu0 0.0
    %3783 = vmatpush2.xpose.msra.mxu0 0.0
    %3784 = vmatprep.mubr.f32.mxu0 0.0
    %3785 = vmatmul.mubr.f32.gmra.mxu0 %v3704
    %v3786 = vpop.f32.mrf.mxu0
    %v3787 = vadd.f32 0.0, %v3786
    %v3788 = vpop.f32.mrf.mxu0
    %3789 = vmatprep.mubr.f32.mxu0 0.0
    %3790 = vmatmul.mubr.f32.gmra.mxu0 %v3706
    %v3791 = vpop.f32.mrf.mxu0
    %v3792 = vadd.f32 0.0, %v3791
    %v3793 = vpop.f32.mrf.mxu0
    %3794 = vmatprep.mubr.f32.mxu0 0.0
    %3795 = vmatmul.mubr.f32.gmra.mxu0 %v3708
    %v3796 = vpop.f32.mrf.mxu0
    %v3797 = vadd.f32 0.0, %v3796
    %v3798 = vpop.f32.mrf.mxu0
    %3799 = vmatprep.mubr.f32.mxu0 0.0
    %3800 = vmatmul.mubr.f32.gmra.mxu0 %v3710
    %v3801 = vpop.f32.mrf.mxu0
    %v3802 = vadd.f32 0.0, %v3801
    %v3803 = vpop.f32.mrf.mxu0
    %3804 = vdwg.mxu0
    %v3805 = vsel %vm224, %v3787, -1e+30
    %v3806 = vsel %vm225, %v3792, -1e+30
    %v3807 = vsel %vm226, %v3797, -1e+30
    %v3808 = vsel %vm227, %v3802, -1e+30
    %v3809 = vsel %vm235, %v3805, -inf
    %3810 = vmax.xlane.f32.xlu0 %v3809
    %v3811 = vpop.xlane.xlu0 %3810
    %v3812 = vsel %vm235, %v3806, -inf
    %3813 = vmax.xlane.f32.xlu0 %v3812
    %v3814 = vpop.xlane.xlu0 %3813
    %v3815 = vsel %vm235, %v3807, -inf
    %3816 = vmax.xlane.f32.xlu0 %v3815
    %v3817 = vpop.xlane.xlu0 %3816
    %v3818 = vsel %vm235, %v3808, -inf
    %3819 = vmax.xlane.f32.xlu0 %v3818
    %v3820 = vpop.xlane.xlu0 %3819
    %v3821 = vsub.f32 %v3805, %v3811
    %v3822 = vsub.f32 %v3806, %v3814
    %v3823 = vsub.f32 %v3807, %v3817
    %v3824 = vsub.f32 %v3808, %v3820
    %v3825 = vmul.f32 %v3821, 1.442695
    %v3826 = vpow.pop %v3825
    %v3827 = vmul.f32 %v3822, 1.442695
    %v3828 = vpow.pop %v3827
    %v3829 = vmul.f32 %v3823, 1.442695
    %v3830 = vpow.pop %v3829
    %v3831 = vmul.f32 %v3824, 1.442695
    %v3832 = vpow.pop %v3831
    %v3833 = vsel %vm235, %v3826, 0.0
    %3834 = vadd.xlane.f32.xlu0 %v3833
    %v3835 = vpop.xlane.xlu0 %3834
    %v3836 = vsel %vm235, %v3828, 0.0
    %3837 = vadd.xlane.f32.xlu0 %v3836
    %v3838 = vpop.xlane.xlu0 %3837
    %v3839 = vsel %vm235, %v3830, 0.0
    %3840 = vadd.xlane.f32.xlu0 %v3839
    %v3841 = vpop.xlane.xlu0 %3840
    %v3842 = vsel %vm235, %v3832, 0.0
    %3843 = vadd.xlane.f32.xlu0 %v3842
    %v3844 = vpop.xlane.xlu0 %3843
    %3845 = vrot.lane.b32.xlu0 %v2657, 48
    %v3846 = vpop.permute.xlu0 %3845
    %3847 = vrot.lane.b32.xlu0 %v2662, 48
    %v3848 = vpop.permute.xlu0 %3847
    %3849 = vrot.lane.b32.xlu0 %v2667, 48
    %v3850 = vpop.permute.xlu0 %3849
    %3851 = vrot.lane.b32.xlu0 %v2672, 48
    %v3852 = vpop.permute.xlu0 %3851
    %v3858 = vsel %vm235, %v3826, 0
    %v3861 = vsel %vm235, %v3828, 0
    %v3864 = vsel %vm235, %v3830, 0
    %v3867 = vsel %vm235, %v3832, 0
    %3869 = vmatprep.subr.mxu0 0.0
    %3870 = vmatpush1.msra.mxu0 0.0
    %3871 = vmatprep.subr.mxu0 0.0
    %3872 = vmatpush1.msra.mxu0 0.0
    %3873 = vmatprep.subr.mxu0 0.0
    %3874 = vmatpush1.msra.mxu0 0.0
    %3875 = vmatprep.subr.mxu0 0.0
    %3876 = vmatpush1.msra.mxu0 0.0
    %3877 = vmatprep.subr.mxu0 0.0
    %3878 = vmatpush1.msra.mxu0 0.0
    %3879 = vmatprep.subr.mxu0 0.0
    %3880 = vmatpush1.msra.mxu0 0.0
    %3881 = vmatprep.subr.mxu0 0.0
    %3882 = vmatpush1.msra.mxu0 0.0
    %3883 = vmatprep.subr.mxu0 0.0
    %3884 = vmatpush1.msra.mxu0 0.0
    %3885 = vmatprep.subr.mxu0 0.0
    %3886 = vmatpush1.msra.mxu0 0.0
    %3887 = vmatprep.subr.mxu0 0.0
    %3888 = vmatpush1.msra.mxu0 0.0
    %3889 = vmatprep.subr.mxu0 0.0
    %3890 = vmatpush1.msra.mxu0 0.0
    %3891 = vmatprep.subr.mxu0 0.0
    %3892 = vmatpush1.msra.mxu0 0.0
    %3893 = vmatprep.subr.mxu0 0.0
    %3894 = vmatpush1.msra.mxu0 %v3852
    %3895 = vmatprep.subr.mxu0 0.0
    %3896 = vmatpush1.msra.mxu0 %v3850
    %3897 = vmatprep.subr.mxu0 0.0
    %3898 = vmatpush1.msra.mxu0 %v3848
    %3899 = vmatprep.subr.mxu0 0.0
    %3900 = vmatpush1.msra.mxu0 %v3846
    %3901 = vmatprep.subr.mxu0 0.0
    %3902 = vmatpush2.msra.mxu0 0.0
    %3903 = vmatprep.subr.mxu0 0.0
    %3904 = vmatpush2.msra.mxu0 0.0
    %3905 = vmatprep.subr.mxu0 0.0
    %3906 = vmatpush2.msra.mxu0 0.0
    %3907 = vmatprep.subr.mxu0 0.0
    %3908 = vmatpush2.msra.mxu0 0.0
    %3909 = vmatprep.subr.mxu0 0.0
    %3910 = vmatpush2.msra.mxu0 0.0
    %3911 = vmatprep.subr.mxu0 0.0
    %3912 = vmatpush2.msra.mxu0 0.0
    %3913 = vmatprep.subr.mxu0 0.0
    %3914 = vmatpush2.msra.mxu0 0.0
    %3915 = vmatprep.subr.mxu0 0.0
    %3916 = vmatpush2.msra.mxu0 0.0
    %3917 = vmatprep.subr.mxu0 0.0
    %3918 = vmatpush2.msra.mxu0 0.0
    %3919 = vmatprep.subr.mxu0 0.0
    %3920 = vmatpush2.msra.mxu0 0.0
    %3921 = vmatprep.subr.mxu0 0.0
    %3922 = vmatpush2.msra.mxu0 0.0
    %3923 = vmatprep.subr.mxu0 0.0
    %3924 = vmatpush2.msra.mxu0 0.0
    %3925 = vmatprep.subr.mxu0 0.0
    %3926 = vmatpush2.msra.mxu0 0.0
    %3927 = vmatprep.subr.mxu0 0.0
    %3928 = vmatpush2.msra.mxu0 0.0
    %3929 = vmatprep.subr.mxu0 0.0
    %3930 = vmatpush2.msra.mxu0 0.0
    %3931 = vmatprep.subr.mxu0 0.0
    %3932 = vmatpush2.msra.mxu0 0.0
    %3933 = vmatprep.mubr.f32.mxu0 0.0
    %3934 = vmatmul.mubr.f32.gmra.mxu0 %v3858
    %v3935 = vpop.f32.mrf.mxu0
    %v3936 = vadd.f32 0.0, %v3935
    %v3937 = vpop.f32.mrf.mxu0
    %3938 = vmatprep.mubr.f32.mxu0 0.0
    %3939 = vmatmul.mubr.f32.gmra.mxu0 %v3861
    %v3940 = vpop.f32.mrf.mxu0
    %v3941 = vadd.f32 0.0, %v3940
    %v3942 = vpop.f32.mrf.mxu0
    %3943 = vmatprep.mubr.f32.mxu0 0.0
    %3944 = vmatmul.mubr.f32.gmra.mxu0 %v3864
    %v3945 = vpop.f32.mrf.mxu0
    %v3946 = vadd.f32 0.0, %v3945
    %v3947 = vpop.f32.mrf.mxu0
    %3948 = vmatprep.mubr.f32.mxu0 0.0
    %3949 = vmatmul.mubr.f32.gmra.mxu0 %v3867
    %v3950 = vpop.f32.mrf.mxu0
    %v3951 = vadd.f32 0.0, %v3950
    %v3952 = vpop.f32.mrf.mxu0
    %3953 = vdwg.mxu0
    %v3954 = vrcp.pop %v3835
    %v3955 = vmul.f32 %v3936, %v3954
    %v3956 = vrcp.pop %v3838
    %v3957 = vmul.f32 %v3941, %v3956
    %v3958 = vrcp.pop %v3841
    %v3959 = vmul.f32 %v3946, %v3958
    %v3960 = vrcp.pop %v3844
    %v3961 = vmul.f32 %v3951, %v3960
    %v3963 = vsel %vm510, %v3955, 0
    %v3966 = vsel %vm510, %v3957, 0
    %v3969 = vsel %vm510, %v3959, 0
    %v3972 = vsel %vm510, %v3961, 0
    %3974 = vmatprep.subr.mxu0 0.0
    %3975 = vmatpush1.msra.mxu0 0.0
    %3976 = vmatprep.subr.mxu0 0.0
    %3977 = vmatpush1.msra.mxu0 0.0
    %3978 = vmatprep.subr.mxu0 0.0
    %3979 = vmatpush1.msra.mxu0 0.0
    %3980 = vmatprep.subr.mxu0 0.0
    %3981 = vmatpush1.msra.mxu0 0.0
    %3982 = vmatprep.subr.mxu0 0.0
    %3983 = vmatpush1.msra.mxu0 0.0
    %3984 = vmatprep.subr.mxu0 0.0
    %3985 = vmatpush1.msra.mxu0 0.0
    %3986 = vmatprep.subr.mxu0 0.0
    %3987 = vmatpush1.msra.mxu0 0.0
    %3988 = vmatprep.subr.mxu0 0.0
    %3989 = vmatpush1.msra.mxu0 0.0
    %3990 = vmatprep.subr.mxu0 0.0
    %3991 = vmatpush1.msra.mxu0 0.0
    %3992 = vmatprep.subr.mxu0 0.0
    %3993 = vmatpush1.msra.mxu0 0.0
    %3994 = vmatprep.subr.mxu0 0.0
    %3995 = vmatpush1.msra.mxu0 0.0
    %3996 = vmatprep.subr.mxu0 0.0
    %3997 = vmatpush1.msra.mxu0 0.0
    %3998 = vmatprep.subr.mxu0 0.0
    %3999 = vmatpush1.msra.mxu0 0.0
    %4000 = vmatprep.subr.mxu0 0.0
    %4001 = vmatpush1.msra.mxu0 0.0
    %4002 = vmatprep.subr.mxu0 0.0
    %4003 = vmatpush1.msra.mxu0 %v3223
    %4004 = vmatprep.subr.mxu0 0.0
    %4005 = vmatpush1.msra.mxu0 %v3222
    %4006 = vmatprep.subr.mxu0 0.0
    %4007 = vmatpush2.msra.mxu0 0.0
    %4008 = vmatprep.subr.mxu0 0.0
    %4009 = vmatpush2.msra.mxu0 0.0
    %4010 = vmatprep.subr.mxu0 0.0
    %4011 = vmatpush2.msra.mxu0 0.0
    %4012 = vmatprep.subr.mxu0 0.0
    %4013 = vmatpush2.msra.mxu0 0.0
    %4014 = vmatprep.subr.mxu0 0.0
    %4015 = vmatpush2.msra.mxu0 0.0
    %4016 = vmatprep.subr.mxu0 0.0
    %4017 = vmatpush2.msra.mxu0 0.0
    %4018 = vmatprep.subr.mxu0 0.0
    %4019 = vmatpush2.msra.mxu0 0.0
    %4020 = vmatprep.subr.mxu0 0.0
    %4021 = vmatpush2.msra.mxu0 0.0
    %4022 = vmatprep.subr.mxu0 0.0
    %4023 = vmatpush2.msra.mxu0 0.0
    %4024 = vmatprep.subr.mxu0 0.0
    %4025 = vmatpush2.msra.mxu0 0.0
    %4026 = vmatprep.subr.mxu0 0.0
    %4027 = vmatpush2.msra.mxu0 0.0
    %4028 = vmatprep.subr.mxu0 0.0
    %4029 = vmatpush2.msra.mxu0 0.0
    %4030 = vmatprep.subr.mxu0 0.0
    %4031 = vmatpush2.msra.mxu0 0.0
    %4032 = vmatprep.subr.mxu0 0.0
    %4033 = vmatpush2.msra.mxu0 0.0
    %4034 = vmatprep.subr.mxu0 0.0
    %4035 = vmatpush2.msra.mxu0 0.0
    %4036 = vmatprep.subr.mxu0 0.0
    %4037 = vmatpush2.msra.mxu0 0.0
    %4038 = vmatprep.mubr.f32.mxu0 0.0
    %4039 = vmatmul.mubr.f32.gmra.mxu0 %v3963
    %v4040 = vpop.f32.mrf.mxu0
    %v4041 = vadd.f32 0.0, %v4040
    %v4042 = vpop.f32.mrf.mxu0
    %4043 = vmatprep.mubr.f32.mxu0 0.0
    %4044 = vmatmul.mubr.f32.gmra.mxu0 %v3966
    %v4045 = vpop.f32.mrf.mxu0
    %v4046 = vadd.f32 0.0, %v4045
    %v4047 = vpop.f32.mrf.mxu0
    %4048 = vmatprep.mubr.f32.mxu0 0.0
    %4049 = vmatmul.mubr.f32.gmra.mxu0 %v3969
    %v4050 = vpop.f32.mrf.mxu0
    %v4051 = vadd.f32 0.0, %v4050
    %v4052 = vpop.f32.mrf.mxu0
    %4053 = vmatprep.mubr.f32.mxu0 0.0
    %4054 = vmatmul.mubr.f32.gmra.mxu0 %v3972
    %v4055 = vpop.f32.mrf.mxu0
    %v4056 = vadd.f32 0.0, %v4055
    %v4057 = vpop.f32.mrf.mxu0
    %4058 = vdwg.mxu0
    %v4060 = vsel %vm510, %v3681, 0
    %v4063 = vsel %vm510, %v3683, 0
    %v4066 = vsel %vm510, %v3685, 0
    %v4069 = vsel %vm510, %v3687, 0
    %4071 = vmatprep.subr.mxu0 0.0
    %4072 = vmatpush1.msra.mxu0 0.0
    %4073 = vmatprep.subr.mxu0 0.0
    %4074 = vmatpush1.msra.mxu0 0.0
    %4075 = vmatprep.subr.mxu0 0.0
    %4076 = vmatpush1.msra.mxu0 0.0
    %4077 = vmatprep.subr.mxu0 0.0
    %4078 = vmatpush1.msra.mxu0 0.0
    %4079 = vmatprep.subr.mxu0 0.0
    %4080 = vmatpush1.msra.mxu0 0.0
    %4081 = vmatprep.subr.mxu0 0.0
    %4082 = vmatpush1.msra.mxu0 0.0
    %4083 = vmatprep.subr.mxu0 0.0
    %4084 = vmatpush1.msra.mxu0 0.0
    %4085 = vmatprep.subr.mxu0 0.0
    %4086 = vmatpush1.msra.mxu0 0.0
    %4087 = vmatprep.subr.mxu0 0.0
    %4088 = vmatpush1.msra.mxu0 0.0
    %4089 = vmatprep.subr.mxu0 0.0
    %4090 = vmatpush1.msra.mxu0 0.0
    %4091 = vmatprep.subr.mxu0 0.0
    %4092 = vmatpush1.msra.mxu0 0.0
    %4093 = vmatprep.subr.mxu0 0.0
    %4094 = vmatpush1.msra.mxu0 0.0
    %4095 = vmatprep.subr.mxu0 0.0
    %4096 = vmatpush1.msra.mxu0 0.0
    %4097 = vmatprep.subr.mxu0 0.0
    %4098 = vmatpush1.msra.mxu0 0.0
    %4099 = vmatprep.subr.mxu0 0.0
    %4100 = vmatpush1.msra.mxu0 %v2947
    %4101 = vmatprep.subr.mxu0 0.0
    %4102 = vmatpush1.msra.mxu0 %v2946
    %4103 = vmatprep.subr.mxu0 0.0
    %4104 = vmatpush2.msra.mxu0 0.0
    %4105 = vmatprep.subr.mxu0 0.0
    %4106 = vmatpush2.msra.mxu0 0.0
    %4107 = vmatprep.subr.mxu0 0.0
    %4108 = vmatpush2.msra.mxu0 0.0
    %4109 = vmatprep.subr.mxu0 0.0
    %4110 = vmatpush2.msra.mxu0 0.0
    %4111 = vmatprep.subr.mxu0 0.0
    %4112 = vmatpush2.msra.mxu0 0.0
    %4113 = vmatprep.subr.mxu0 0.0
    %4114 = vmatpush2.msra.mxu0 0.0
    %4115 = vmatprep.subr.mxu0 0.0
    %4116 = vmatpush2.msra.mxu0 0.0
    %4117 = vmatprep.subr.mxu0 0.0
    %4118 = vmatpush2.msra.mxu0 0.0
    %4119 = vmatprep.subr.mxu0 0.0
    %4120 = vmatpush2.msra.mxu0 0.0
    %4121 = vmatprep.subr.mxu0 0.0
    %4122 = vmatpush2.msra.mxu0 0.0
    %4123 = vmatprep.subr.mxu0 0.0
    %4124 = vmatpush2.msra.mxu0 0.0
    %4125 = vmatprep.subr.mxu0 0.0
    %4126 = vmatpush2.msra.mxu0 0.0
    %4127 = vmatprep.subr.mxu0 0.0
    %4128 = vmatpush2.msra.mxu0 0.0
    %4129 = vmatprep.subr.mxu0 0.0
    %4130 = vmatpush2.msra.mxu0 0.0
    %4131 = vmatprep.subr.mxu0 0.0
    %4132 = vmatpush2.msra.mxu0 0.0
    %4133 = vmatprep.subr.mxu0 0.0
    %4134 = vmatpush2.msra.mxu0 0.0
    %4135 = vmatprep.mubr.f32.mxu0 0.0
    %4136 = vmatmul.mubr.f32.gmra.mxu0 %v4060
    %v4137 = vpop.f32.mrf.mxu0
    %v4138 = vadd.f32 %v4041, %v4137
    %v4139 = vpop.f32.mrf.mxu0
    %4140 = vmatprep.mubr.f32.mxu0 0.0
    %4141 = vmatmul.mubr.f32.gmra.mxu0 %v4063
    %v4142 = vpop.f32.mrf.mxu0
    %v4143 = vadd.f32 %v4046, %v4142
    %v4144 = vpop.f32.mrf.mxu0
    %4145 = vmatprep.mubr.f32.mxu0 0.0
    %4146 = vmatmul.mubr.f32.gmra.mxu0 %v4066
    %v4147 = vpop.f32.mrf.mxu0
    %v4148 = vadd.f32 %v4051, %v4147
    %v4149 = vpop.f32.mrf.mxu0
    %4150 = vmatprep.mubr.f32.mxu0 0.0
    %4151 = vmatmul.mubr.f32.gmra.mxu0 %v4069
    %v4152 = vpop.f32.mrf.mxu0
    %v4153 = vadd.f32 %v4056, %v4152
    %v4154 = vpop.f32.mrf.mxu0
    %4155 = vdwg.mxu0
    %v4156 = vadd.f32 %v2397, %v3400
    %v4157 = vadd.f32 %v2398, %v3405
    %v4158 = vadd.f32 %v2399, %v3410
    %v4159 = vadd.f32 %v2400, %v3415
    %v4160 = vadd.f32 %v2401, %v4138
    %v4161 = vadd.f32 %v2402, %v4143
    %v4162 = vadd.f32 %v2403, %v4148
    %v4163 = vadd.f32 %v2404, %v4153
    %v4164 = vlaneseq
    %v4165 = vshrl.u32 %v4164, 7
    %v4166 = vsub.s32 0, %v4165
    %v4167 = vrot.slane %v2408, %v4166
    %v4168 = vadd.f32 %v4156, %v4167
    %v4169 = vadd.f32 %v4157, %v4167
    %v4170 = vadd.f32 %v4158, %v4167
    %v4171 = vadd.f32 %v4159, %v4167
    %v4172 = vadd.f32 %v4160, %v4167
    %v4173 = vadd.f32 %v4161, %v4167
    %v4174 = vadd.f32 %v4162, %v4167
    %v4175 = vadd.f32 %v4163, %v4167
    %v4176 = vsel %vm235, %v4168, 0.0
    %4177 = vadd.xlane.f32.xlu0 %v4176
    %v4178 = vpop.xlane.xlu0 %4177
    %v4179 = vsel %vm235, %v4169, 0.0
    %4180 = vadd.xlane.f32.xlu0 %v4179
    %v4181 = vpop.xlane.xlu0 %4180
    %v4182 = vsel %vm235, %v4170, 0.0
    %4183 = vadd.xlane.f32.xlu0 %v4182
    %v4184 = vpop.xlane.xlu0 %4183
    %v4185 = vsel %vm235, %v4171, 0.0
    %4186 = vadd.xlane.f32.xlu0 %v4185
    %v4187 = vpop.xlane.xlu0 %4186
    %v4188 = vsel %vm235, %v4172, 0.0
    %4189 = vadd.xlane.f32.xlu0 %v4188
    %v4190 = vpop.xlane.xlu0 %4189
    %v4191 = vsel %vm235, %v4173, 0.0
    %4192 = vadd.xlane.f32.xlu0 %v4191
    %v4193 = vpop.xlane.xlu0 %4192
    %v4194 = vsel %vm235, %v4174, 0.0
    %4195 = vadd.xlane.f32.xlu0 %v4194
    %v4196 = vpop.xlane.xlu0 %4195
    %v4197 = vsel %vm235, %v4175, 0.0
    %4198 = vadd.xlane.f32.xlu0 %v4197
    %v4199 = vpop.xlane.xlu0 %4198
    %v4200 = vmul.f32 %v4178, %v260
    %v4201 = vmul.f32 %v4181, %v260
    %v4202 = vmul.f32 %v4184, %v260
    %v4203 = vmul.f32 %v4187, %v260
    %v4204 = vmul.f32 %v4190, %v260
    %v4205 = vmul.f32 %v4193, %v260
    %v4206 = vmul.f32 %v4196, %v260
    %v4207 = vmul.f32 %v4199, %v260
    %v4208 = vsub.f32 %v4168, %v4200
    %v4209 = vsub.f32 %v4169, %v4201
    %v4210 = vsub.f32 %v4170, %v4202
    %v4211 = vsub.f32 %v4171, %v4203
    %v4212 = vsub.f32 %v4172, %v4204
    %v4213 = vsub.f32 %v4173, %v4205
    %v4214 = vsub.f32 %v4174, %v4206
    %v4215 = vsub.f32 %v4175, %v4207
    %v4216 = vmul.f32 %v4208, %v4208
    %v4217 = vmul.f32 %v4209, %v4209
    %v4218 = vmul.f32 %v4210, %v4210
    %v4219 = vmul.f32 %v4211, %v4211
    %v4220 = vmul.f32 %v4212, %v4212
    %v4221 = vmul.f32 %v4213, %v4213
    %v4222 = vmul.f32 %v4214, %v4214
    %v4223 = vmul.f32 %v4215, %v4215
    %v4224 = vsel %vm235, %v4216, 0.0
    %4225 = vadd.xlane.f32.xlu0 %v4224
    %v4226 = vpop.xlane.xlu0 %4225
    %v4227 = vsel %vm235, %v4217, 0.0
    %4228 = vadd.xlane.f32.xlu0 %v4227
    %v4229 = vpop.xlane.xlu0 %4228
    %v4230 = vsel %vm235, %v4218, 0.0
    %4231 = vadd.xlane.f32.xlu0 %v4230
    %v4232 = vpop.xlane.xlu0 %4231
    %v4233 = vsel %vm235, %v4219, 0.0
    %4234 = vadd.xlane.f32.xlu0 %v4233
    %v4235 = vpop.xlane.xlu0 %4234
    %v4236 = vsel %vm235, %v4220, 0.0
    %4237 = vadd.xlane.f32.xlu0 %v4236
    %v4238 = vpop.xlane.xlu0 %4237
    %v4239 = vsel %vm235, %v4221, 0.0
    %4240 = vadd.xlane.f32.xlu0 %v4239
    %v4241 = vpop.xlane.xlu0 %4240
    %v4242 = vsel %vm235, %v4222, 0.0
    %4243 = vadd.xlane.f32.xlu0 %v4242
    %v4244 = vpop.xlane.xlu0 %4243
    %v4245 = vsel %vm235, %v4223, 0.0
    %4246 = vadd.xlane.f32.xlu0 %v4245
    %v4247 = vpop.xlane.xlu0 %4246
    %v4248 = vmul.f32 %v4226, %v260
    %v4249 = vmul.f32 %v4229, %v260
    %v4250 = vmul.f32 %v4232, %v260
    %v4251 = vmul.f32 %v4235, %v260
    %v4252 = vmul.f32 %v4238, %v260
    %v4253 = vmul.f32 %v4241, %v260
    %v4254 = vmul.f32 %v4244, %v260
    %v4255 = vmul.f32 %v4247, %v260
    %v4256 = vadd.f32 %v4248, 1e-05
    %v4257 = vadd.f32 %v4249, 1e-05
    %v4258 = vadd.f32 %v4250, 1e-05
    %v4259 = vadd.f32 %v4251, 1e-05
    %v4260 = vadd.f32 %v4252, 1e-05
    %v4261 = vadd.f32 %v4253, 1e-05
    %v4262 = vadd.f32 %v4254, 1e-05
    %v4263 = vadd.f32 %v4255, 1e-05
    %v4264 = vrsqrt.pop %v4256
    %v4265 = vrsqrt.pop %v4257
    %v4266 = vrsqrt.pop %v4258
    %v4267 = vrsqrt.pop %v4259
    %v4268 = vrsqrt.pop %v4260
    %v4269 = vrsqrt.pop %v4261
    %v4270 = vrsqrt.pop %v4262
    %v4271 = vrsqrt.pop %v4263
    %v4272 = vmul.f32 %v4208, %v4264
    %v4273 = vmul.f32 %v4209, %v4265
    %v4274 = vmul.f32 %v4210, %v4266
    %v4275 = vmul.f32 %v4211, %v4267
    %v4276 = vmul.f32 %v4212, %v4268
    %v4277 = vmul.f32 %v4213, %v4269
    %v4278 = vmul.f32 %v4214, %v4270
    %v4279 = vmul.f32 %v4215, %v4271
    %v4280 = vlaneseq
    %v4281 = vshrl.u32 %v4280, 7
    %v4282 = vsub.s32 0, %v4281
    %v4283 = vrot.slane %v2409, %v4282
    %v4284 = vmul.f32 %v4272, %v4283
    %v4285 = vmul.f32 %v4273, %v4283
    %v4286 = vmul.f32 %v4274, %v4283
    %v4287 = vmul.f32 %v4275, %v4283
    %v4288 = vmul.f32 %v4276, %v4283
    %v4289 = vmul.f32 %v4277, %v4283
    %v4290 = vmul.f32 %v4278, %v4283
    %v4291 = vmul.f32 %v4279, %v4283
    %v4292 = vlaneseq
    %v4293 = vshrl.u32 %v4292, 7
    %v4294 = vsub.s32 0, %v4293
    %v4295 = vrot.slane %v2410, %v4294
    %v4296 = vadd.f32 %v4284, %v4295
    %v4297 = vadd.f32 %v4285, %v4295
    %v4298 = vadd.f32 %v4286, %v4295
    %v4299 = vadd.f32 %v4287, %v4295
    %v4300 = vadd.f32 %v4288, %v4295
    %v4301 = vadd.f32 %v4289, %v4295
    %v4302 = vadd.f32 %v4290, %v4295
    %v4303 = vadd.f32 %v4291, %v4295
    %s4304 = scalar_lea.vmem %s5, 32
    %v4305 = vld [vmem:[%s4304] sm:$0xff]
    %v4306 = vld [vmem:[%s4304 + $0x8] sm:$0xff]
    %v4307 = vld [vmem:[%s4304 + $0x10] sm:$0xff]
    %v4308 = vld [vmem:[%s4304 + $0x18] sm:$0xff]
    %v4309 = vlaneseq
    %v4310 = vshrl.u32 %v4309, 7
    %v4311 = vsub.s32 0, %v4310
    %v4312 = vrot.slane %v2411, %v4311
    %v4314 = vsel %vm235, %v4296, 0
    %v4317 = vsel %vm235, %v4297, 0
    %v4320 = vsel %vm235, %v4298, 0
    %v4323 = vsel %vm235, %v4299, 0
    %v4326 = vsel %vm235, %v4300, 0
    %v4329 = vsel %vm235, %v4301, 0
    %v4332 = vsel %vm235, %v4302, 0
    %v4335 = vsel %vm235, %v4303, 0
    %4337 = vmatprep.subr.mxu0 0.0
    %4338 = vmatpush1.msra.mxu0 0.0
    %4339 = vmatprep.subr.mxu0 0.0
    %4340 = vmatpush1.msra.mxu0 0.0
    %4341 = vmatprep.subr.mxu0 0.0
    %4342 = vmatpush1.msra.mxu0 0.0
    %4343 = vmatprep.subr.mxu0 0.0
    %4344 = vmatpush1.msra.mxu0 0.0
    %4345 = vmatprep.subr.mxu0 0.0
    %4346 = vmatpush1.msra.mxu0 0.0
    %4347 = vmatprep.subr.mxu0 0.0
    %4348 = vmatpush1.msra.mxu0 0.0
    %4349 = vmatprep.subr.mxu0 0.0
    %4350 = vmatpush1.msra.mxu0 0.0
    %4351 = vmatprep.subr.mxu0 0.0
    %4352 = vmatpush1.msra.mxu0 0.0
    %4353 = vmatprep.subr.mxu0 0.0
    %4354 = vmatpush1.msra.mxu0 0.0
    %4355 = vmatprep.subr.mxu0 0.0
    %4356 = vmatpush1.msra.mxu0 0.0
    %4357 = vmatprep.subr.mxu0 0.0
    %4358 = vmatpush1.msra.mxu0 0.0
    %4359 = vmatprep.subr.mxu0 0.0
    %4360 = vmatpush1.msra.mxu0 0.0
    %4361 = vmatprep.subr.mxu0 0.0
    %4362 = vmatpush1.msra.mxu0 %v4308
    %4363 = vmatprep.subr.mxu0 0.0
    %4364 = vmatpush1.msra.mxu0 %v4307
    %4365 = vmatprep.subr.mxu0 0.0
    %4366 = vmatpush1.msra.mxu0 %v4306
    %4367 = vmatprep.subr.mxu0 0.0
    %4368 = vmatpush1.msra.mxu0 %v4305
    %4369 = vmatprep.subr.mxu0 0.0
    %4370 = vmatpush2.msra.mxu0 0.0
    %4371 = vmatprep.subr.mxu0 0.0
    %4372 = vmatpush2.msra.mxu0 0.0
    %4373 = vmatprep.subr.mxu0 0.0
    %4374 = vmatpush2.msra.mxu0 0.0
    %4375 = vmatprep.subr.mxu0 0.0
    %4376 = vmatpush2.msra.mxu0 0.0
    %4377 = vmatprep.subr.mxu0 0.0
    %4378 = vmatpush2.msra.mxu0 0.0
    %4379 = vmatprep.subr.mxu0 0.0
    %4380 = vmatpush2.msra.mxu0 0.0
    %4381 = vmatprep.subr.mxu0 0.0
    %4382 = vmatpush2.msra.mxu0 0.0
    %4383 = vmatprep.subr.mxu0 0.0
    %4384 = vmatpush2.msra.mxu0 0.0
    %4385 = vmatprep.subr.mxu0 0.0
    %4386 = vmatpush2.msra.mxu0 0.0
    %4387 = vmatprep.subr.mxu0 0.0
    %4388 = vmatpush2.msra.mxu0 0.0
    %4389 = vmatprep.subr.mxu0 0.0
    %4390 = vmatpush2.msra.mxu0 0.0
    %4391 = vmatprep.subr.mxu0 0.0
    %4392 = vmatpush2.msra.mxu0 0.0
    %4393 = vmatprep.subr.mxu0 0.0
    %4394 = vmatpush2.msra.mxu0 0.0
    %4395 = vmatprep.subr.mxu0 0.0
    %4396 = vmatpush2.msra.mxu0 0.0
    %4397 = vmatprep.subr.mxu0 0.0
    %4398 = vmatpush2.msra.mxu0 0.0
    %4399 = vmatprep.subr.mxu0 0.0
    %4400 = vmatpush2.msra.mxu0 0.0
    %4401 = vmatprep.mubr.f32.mxu0 0.0
    %4402 = vmatmul.mubr.f32.gmra.mxu0 %v4314
    %v4403 = vpop.f32.mrf.mxu0
    %v4404 = vadd.f32 %v4312, %v4403
    %v4405 = vpop.f32.mrf.mxu0
    %4406 = vmatprep.mubr.f32.mxu0 0.0
    %4407 = vmatmul.mubr.f32.gmra.mxu0 %v4317
    %v4408 = vpop.f32.mrf.mxu0
    %v4409 = vadd.f32 %v4312, %v4408
    %v4410 = vpop.f32.mrf.mxu0
    %4411 = vmatprep.mubr.f32.mxu0 0.0
    %4412 = vmatmul.mubr.f32.gmra.mxu0 %v4320
    %v4413 = vpop.f32.mrf.mxu0
    %v4414 = vadd.f32 %v4312, %v4413
    %v4415 = vpop.f32.mrf.mxu0
    %4416 = vmatprep.mubr.f32.mxu0 0.0
    %4417 = vmatmul.mubr.f32.gmra.mxu0 %v4323
    %v4418 = vpop.f32.mrf.mxu0
    %v4419 = vadd.f32 %v4312, %v4418
    %v4420 = vpop.f32.mrf.mxu0
    %4421 = vmatprep.mubr.f32.mxu0 0.0
    %4422 = vmatmul.mubr.f32.gmra.mxu0 %v4326
    %v4423 = vpop.f32.mrf.mxu0
    %v4424 = vadd.f32 %v4312, %v4423
    %v4425 = vpop.f32.mrf.mxu0
    %4426 = vmatprep.mubr.f32.mxu0 0.0
    %4427 = vmatmul.mubr.f32.gmra.mxu0 %v4329
    %v4428 = vpop.f32.mrf.mxu0
    %v4429 = vadd.f32 %v4312, %v4428
    %v4430 = vpop.f32.mrf.mxu0
    %4431 = vmatprep.mubr.f32.mxu0 0.0
    %4432 = vmatmul.mubr.f32.gmra.mxu0 %v4332
    %v4433 = vpop.f32.mrf.mxu0
    %v4434 = vadd.f32 %v4312, %v4433
    %v4435 = vpop.f32.mrf.mxu0
    %4436 = vmatprep.mubr.f32.mxu0 0.0
    %4437 = vmatmul.mubr.f32.gmra.mxu0 %v4335
    %v4438 = vpop.f32.mrf.mxu0
    %v4439 = vadd.f32 %v4312, %v4438
    %v4440 = vpop.f32.mrf.mxu0
    %4441 = vdwg.mxu0
    %v4442 = vmax.f32 %v4404, 0.0
    %v4443 = vmax.f32 %v4409, 0.0
    %v4444 = vmax.f32 %v4414, 0.0
    %v4445 = vmax.f32 %v4419, 0.0
    %v4446 = vmax.f32 %v4424, 0.0
    %v4447 = vmax.f32 %v4429, 0.0
    %v4448 = vmax.f32 %v4434, 0.0
    %v4449 = vmax.f32 %v4439, 0.0
    %s4450 = scalar_lea.vmem %s6, 128
    %v4451 = vld [vmem:[%s4450] sm:$0xff]
    %v4452 = vld [vmem:[%s4450 + $0x8] sm:$0xff]
    %v4453 = vld [vmem:[%s4450 + $0x10] sm:$0xff]
    %v4454 = vld [vmem:[%s4450 + $0x18] sm:$0xff]
    %v4455 = vld [vmem:[%s4450 + $0x20] sm:$0xff]
    %v4456 = vld [vmem:[%s4450 + $0x28] sm:$0xff]
    %v4457 = vld [vmem:[%s4450 + $0x30] sm:$0xff]
    %v4458 = vld [vmem:[%s4450 + $0x38] sm:$0xff]
    %v4459 = vld [vmem:[%s4450 + $0x40] sm:$0xff]
    %v4460 = vld [vmem:[%s4450 + $0x48] sm:$0xff]
    %v4461 = vld [vmem:[%s4450 + $0x50] sm:$0xff]
    %v4462 = vld [vmem:[%s4450 + $0x58] sm:$0xff]
    %v4463 = vld [vmem:[%s4450 + $0x60] sm:$0xff]
    %v4464 = vld [vmem:[%s4450 + $0x68] sm:$0xff]
    %v4465 = vld [vmem:[%s4450 + $0x70] sm:$0xff]
    %v4466 = vld [vmem:[%s4450 + $0x78] sm:$0xff]
    %v4467 = vlaneseq
    %v4468 = vshrl.u32 %v4467, 7
    %v4469 = vsub.s32 0, %v4468
    %v4470 = vrot.slane %v2412, %v4469
    %4471 = vmatprep.subr.mxu0 0.0
    %4472 = vmatpush1.msra.mxu0 %v4466
    %4473 = vmatprep.subr.mxu0 0.0
    %4474 = vmatpush1.msra.mxu0 %v4465
    %4475 = vmatprep.subr.mxu0 0.0
    %4476 = vmatpush1.msra.mxu0 %v4464
    %4477 = vmatprep.subr.mxu0 0.0
    %4478 = vmatpush1.msra.mxu0 %v4463
    %4479 = vmatprep.subr.mxu0 0.0
    %4480 = vmatpush1.msra.mxu0 %v4462
    %4481 = vmatprep.subr.mxu0 0.0
    %4482 = vmatpush1.msra.mxu0 %v4461
    %4483 = vmatprep.subr.mxu0 0.0
    %4484 = vmatpush1.msra.mxu0 %v4460
    %4485 = vmatprep.subr.mxu0 0.0
    %4486 = vmatpush1.msra.mxu0 %v4459
    %4487 = vmatprep.subr.mxu0 0.0
    %4488 = vmatpush1.msra.mxu0 %v4458
    %4489 = vmatprep.subr.mxu0 0.0
    %4490 = vmatpush1.msra.mxu0 %v4457
    %4491 = vmatprep.subr.mxu0 0.0
    %4492 = vmatpush1.msra.mxu0 %v4456
    %4493 = vmatprep.subr.mxu0 0.0
    %4494 = vmatpush1.msra.mxu0 %v4455
    %4495 = vmatprep.subr.mxu0 0.0
    %4496 = vmatpush1.msra.mxu0 %v4454
    %4497 = vmatprep.subr.mxu0 0.0
    %4498 = vmatpush1.msra.mxu0 %v4453
    %4499 = vmatprep.subr.mxu0 0.0
    %4500 = vmatpush1.msra.mxu0 %v4452
    %4501 = vmatprep.subr.mxu0 0.0
    %4502 = vmatpush1.msra.mxu0 %v4451
    %4503 = vmatprep.subr.mxu0 0.0
    %4504 = vmatpush2.msra.mxu0 0.0
    %4505 = vmatprep.subr.mxu0 0.0
    %4506 = vmatpush2.msra.mxu0 0.0
    %4507 = vmatprep.subr.mxu0 0.0
    %4508 = vmatpush2.msra.mxu0 0.0
    %4509 = vmatprep.subr.mxu0 0.0
    %4510 = vmatpush2.msra.mxu0 0.0
    %4511 = vmatprep.subr.mxu0 0.0
    %4512 = vmatpush2.msra.mxu0 0.0
    %4513 = vmatprep.subr.mxu0 0.0
    %4514 = vmatpush2.msra.mxu0 0.0
    %4515 = vmatprep.subr.mxu0 0.0
    %4516 = vmatpush2.msra.mxu0 0.0
    %4517 = vmatprep.subr.mxu0 0.0
    %4518 = vmatpush2.msra.mxu0 0.0
    %4519 = vmatprep.subr.mxu0 0.0
    %4520 = vmatpush2.msra.mxu0 0.0
    %4521 = vmatprep.subr.mxu0 0.0
    %4522 = vmatpush2.msra.mxu0 0.0
    %4523 = vmatprep.subr.mxu0 0.0
    %4524 = vmatpush2.msra.mxu0 0.0
    %4525 = vmatprep.subr.mxu0 0.0
    %4526 = vmatpush2.msra.mxu0 0.0
    %4527 = vmatprep.subr.mxu0 0.0
    %4528 = vmatpush2.msra.mxu0 0.0
    %4529 = vmatprep.subr.mxu0 0.0
    %4530 = vmatpush2.msra.mxu0 0.0
    %4531 = vmatprep.subr.mxu0 0.0
    %4532 = vmatpush2.msra.mxu0 0.0
    %4533 = vmatprep.subr.mxu0 0.0
    %4534 = vmatpush2.msra.mxu0 0.0
    %4535 = vmatprep.mubr.f32.mxu0 0.0
    %4536 = vmatmul.mubr.f32.gmra.mxu0 %v4442
    %v4537 = vpop.f32.mrf.mxu0
    %v4538 = vadd.f32 %v4470, %v4537
    %v4539 = vpop.f32.mrf.mxu0
    %4540 = vmatprep.mubr.f32.mxu0 0.0
    %4541 = vmatmul.mubr.f32.gmra.mxu0 %v4443
    %v4542 = vpop.f32.mrf.mxu0
    %v4543 = vadd.f32 %v4470, %v4542
    %v4544 = vpop.f32.mrf.mxu0
    %4545 = vmatprep.mubr.f32.mxu0 0.0
    %4546 = vmatmul.mubr.f32.gmra.mxu0 %v4444
    %v4547 = vpop.f32.mrf.mxu0
    %v4548 = vadd.f32 %v4470, %v4547
    %v4549 = vpop.f32.mrf.mxu0
    %4550 = vmatprep.mubr.f32.mxu0 0.0
    %4551 = vmatmul.mubr.f32.gmra.mxu0 %v4445
    %v4552 = vpop.f32.mrf.mxu0
    %v4553 = vadd.f32 %v4470, %v4552
    %v4554 = vpop.f32.mrf.mxu0
    %4555 = vmatprep.mubr.f32.mxu0 0.0
    %4556 = vmatmul.mubr.f32.gmra.mxu0 %v4446
    %v4557 = vpop.f32.mrf.mxu0
    %v4558 = vadd.f32 %v4470, %v4557
    %v4559 = vpop.f32.mrf.mxu0
    %4560 = vmatprep.mubr.f32.mxu0 0.0
    %4561 = vmatmul.mubr.f32.gmra.mxu0 %v4447
    %v4562 = vpop.f32.mrf.mxu0
    %v4563 = vadd.f32 %v4470, %v4562
    %v4564 = vpop.f32.mrf.mxu0
    %4565 = vmatprep.mubr.f32.mxu0 0.0
    %4566 = vmatmul.mubr.f32.gmra.mxu0 %v4448
    %v4567 = vpop.f32.mrf.mxu0
    %v4568 = vadd.f32 %v4470, %v4567
    %v4569 = vpop.f32.mrf.mxu0
    %4570 = vmatprep.mubr.f32.mxu0 0.0
    %4571 = vmatmul.mubr.f32.gmra.mxu0 %v4449
    %v4572 = vpop.f32.mrf.mxu0
    %v4573 = vadd.f32 %v4470, %v4572
    %v4574 = vpop.f32.mrf.mxu0
    %4575 = vdwg.mxu0
    %v4576 = vadd.f32 %v4168, %v4538
    %v4577 = vadd.f32 %v4169, %v4543
    %v4578 = vadd.f32 %v4170, %v4548
    %v4579 = vadd.f32 %v4171, %v4553
    %v4580 = vadd.f32 %v4172, %v4558
    %v4581 = vadd.f32 %v4173, %v4563
    %v4582 = vadd.f32 %v4174, %v4568
    %v4583 = vadd.f32 %v4175, %v4573
    %v4584 = vld [vmem:[%s9] sm:$0x1]
    %v4585 = vld [vmem:[%s9 + $0x1] sm:$0x1]
    %v4586 = vld [vmem:[%s9 + $0x2] sm:$0x1]
    %v4587 = vsel %vm235, %v4576, 0.0
    %4588 = vadd.xlane.f32.xlu0 %v4587
    %v4589 = vpop.xlane.xlu0 %4588
    %v4590 = vsel %vm235, %v4577, 0.0
    %4591 = vadd.xlane.f32.xlu0 %v4590
    %v4592 = vpop.xlane.xlu0 %4591
    %v4593 = vsel %vm235, %v4578, 0.0
    %4594 = vadd.xlane.f32.xlu0 %v4593
    %v4595 = vpop.xlane.xlu0 %4594
    %v4596 = vsel %vm235, %v4579, 0.0
    %4597 = vadd.xlane.f32.xlu0 %v4596
    %v4598 = vpop.xlane.xlu0 %4597
    %v4599 = vsel %vm235, %v4580, 0.0
    %4600 = vadd.xlane.f32.xlu0 %v4599
    %v4601 = vpop.xlane.xlu0 %4600
    %v4602 = vsel %vm235, %v4581, 0.0
    %4603 = vadd.xlane.f32.xlu0 %v4602
    %v4604 = vpop.xlane.xlu0 %4603
    %v4605 = vsel %vm235, %v4582, 0.0
    %4606 = vadd.xlane.f32.xlu0 %v4605
    %v4607 = vpop.xlane.xlu0 %4606
    %v4608 = vsel %vm235, %v4583, 0.0
    %4609 = vadd.xlane.f32.xlu0 %v4608
    %v4610 = vpop.xlane.xlu0 %4609
    %v4611 = vmul.f32 %v4589, %v260
    %v4612 = vmul.f32 %v4592, %v260
    %v4613 = vmul.f32 %v4595, %v260
    %v4614 = vmul.f32 %v4598, %v260
    %v4615 = vmul.f32 %v4601, %v260
    %v4616 = vmul.f32 %v4604, %v260
    %v4617 = vmul.f32 %v4607, %v260
    %v4618 = vmul.f32 %v4610, %v260
    %v4619 = vsub.f32 %v4576, %v4611
    %v4620 = vsub.f32 %v4577, %v4612
    %v4621 = vsub.f32 %v4578, %v4613
    %v4622 = vsub.f32 %v4579, %v4614
    %v4623 = vsub.f32 %v4580, %v4615
    %v4624 = vsub.f32 %v4581, %v4616
    %v4625 = vsub.f32 %v4582, %v4617
    %v4626 = vsub.f32 %v4583, %v4618
    %v4627 = vmul.f32 %v4619, %v4619
    %v4628 = vmul.f32 %v4620, %v4620
    %v4629 = vmul.f32 %v4621, %v4621
    %v4630 = vmul.f32 %v4622, %v4622
    %v4631 = vmul.f32 %v4623, %v4623
    %v4632 = vmul.f32 %v4624, %v4624
    %v4633 = vmul.f32 %v4625, %v4625
    %v4634 = vmul.f32 %v4626, %v4626
    %v4635 = vsel %vm235, %v4627, 0.0
    %4636 = vadd.xlane.f32.xlu0 %v4635
    %v4637 = vpop.xlane.xlu0 %4636
    %v4638 = vsel %vm235, %v4628, 0.0
    %4639 = vadd.xlane.f32.xlu0 %v4638
    %v4640 = vpop.xlane.xlu0 %4639
    %v4641 = vsel %vm235, %v4629, 0.0
    %4642 = vadd.xlane.f32.xlu0 %v4641
    %v4643 = vpop.xlane.xlu0 %4642
    %v4644 = vsel %vm235, %v4630, 0.0
    %4645 = vadd.xlane.f32.xlu0 %v4644
    %v4646 = vpop.xlane.xlu0 %4645
    %v4647 = vsel %vm235, %v4631, 0.0
    %4648 = vadd.xlane.f32.xlu0 %v4647
    %v4649 = vpop.xlane.xlu0 %4648
    %v4650 = vsel %vm235, %v4632, 0.0
    %4651 = vadd.xlane.f32.xlu0 %v4650
    %v4652 = vpop.xlane.xlu0 %4651
    %v4653 = vsel %vm235, %v4633, 0.0
    %4654 = vadd.xlane.f32.xlu0 %v4653
    %v4655 = vpop.xlane.xlu0 %4654
    %v4656 = vsel %vm235, %v4634, 0.0
    %4657 = vadd.xlane.f32.xlu0 %v4656
    %v4658 = vpop.xlane.xlu0 %4657
    %v4659 = vmul.f32 %v4637, %v260
    %v4660 = vmul.f32 %v4640, %v260
    %v4661 = vmul.f32 %v4643, %v260
    %v4662 = vmul.f32 %v4646, %v260
    %v4663 = vmul.f32 %v4649, %v260
    %v4664 = vmul.f32 %v4652, %v260
    %v4665 = vmul.f32 %v4655, %v260
    %v4666 = vmul.f32 %v4658, %v260
    %v4667 = vadd.f32 %v4659, 1e-05
    %v4668 = vadd.f32 %v4660, 1e-05
    %v4669 = vadd.f32 %v4661, 1e-05
    %v4670 = vadd.f32 %v4662, 1e-05
    %v4671 = vadd.f32 %v4663, 1e-05
    %v4672 = vadd.f32 %v4664, 1e-05
    %v4673 = vadd.f32 %v4665, 1e-05
    %v4674 = vadd.f32 %v4666, 1e-05
    %v4675 = vrsqrt.pop %v4667
    %v4676 = vrsqrt.pop %v4668
    %v4677 = vrsqrt.pop %v4669
    %v4678 = vrsqrt.pop %v4670
    %v4679 = vrsqrt.pop %v4671
    %v4680 = vrsqrt.pop %v4672
    %v4681 = vrsqrt.pop %v4673
    %v4682 = vrsqrt.pop %v4674
    %v4683 = vmul.f32 %v4619, %v4675
    %v4684 = vmul.f32 %v4620, %v4676
    %v4685 = vmul.f32 %v4621, %v4677
    %v4686 = vmul.f32 %v4622, %v4678
    %v4687 = vmul.f32 %v4623, %v4679
    %v4688 = vmul.f32 %v4624, %v4680
    %v4689 = vmul.f32 %v4625, %v4681
    %v4690 = vmul.f32 %v4626, %v4682
    %v4691 = vlaneseq
    %v4692 = vshrl.u32 %v4691, 7
    %v4693 = vsub.s32 0, %v4692
    %v4694 = vrot.slane %v4584, %v4693
    %v4695 = vmul.f32 %v4683, %v4694
    %v4696 = vmul.f32 %v4684, %v4694
    %v4697 = vmul.f32 %v4685, %v4694
    %v4698 = vmul.f32 %v4686, %v4694
    %v4699 = vmul.f32 %v4687, %v4694
    %v4700 = vmul.f32 %v4688, %v4694
    %v4701 = vmul.f32 %v4689, %v4694
    %v4702 = vmul.f32 %v4690, %v4694
    %v4703 = vlaneseq
    %v4704 = vshrl.u32 %v4703, 7
    %v4705 = vsub.s32 0, %v4704
    %v4706 = vrot.slane %v4585, %v4705
    %v4707 = vadd.f32 %v4695, %v4706
    %v4708 = vadd.f32 %v4696, %v4706
    %v4709 = vadd.f32 %v4697, %v4706
    %v4710 = vadd.f32 %v4698, %v4706
    %v4711 = vadd.f32 %v4699, %v4706
    %v4712 = vadd.f32 %v4700, %v4706
    %v4713 = vadd.f32 %v4701, %v4706
    %v4714 = vadd.f32 %v4702, %v4706
    %v4715 = vld [vmem:[%s8] sm:$0xff]
    %v4716 = vld [vmem:[%s8 + $0x8] sm:$0xff]
    %v4717 = vld [vmem:[%s8 + $0x10] sm:$0xff]
    %v4718 = vld [vmem:[%s8 + $0x18] sm:$0xff]
    %v4719 = vlaneseq
    %v4720 = vshrl.u32 %v4719, 7
    %v4721 = vsub.s32 0, %v4720
    %v4722 = vrot.slane %v4586, %v4721
    %v4724 = vsel %vm235, %v4707, 0
    %v4727 = vsel %vm235, %v4708, 0
    %v4730 = vsel %vm235, %v4709, 0
    %v4733 = vsel %vm235, %v4710, 0
    %v4736 = vsel %vm235, %v4711, 0
    %v4739 = vsel %vm235, %v4712, 0
    %v4742 = vsel %vm235, %v4713, 0
    %v4745 = vsel %vm235, %v4714, 0
    %4747 = vmatprep.subr.mxu0 0.0
    %4748 = vmatpush1.msra.mxu0 0.0
    %4749 = vmatprep.subr.mxu0 0.0
    %4750 = vmatpush1.msra.mxu0 0.0
    %4751 = vmatprep.subr.mxu0 0.0
    %4752 = vmatpush1.msra.mxu0 0.0
    %4753 = vmatprep.subr.mxu0 0.0
    %4754 = vmatpush1.msra.mxu0 0.0
    %4755 = vmatprep.subr.mxu0 0.0
    %4756 = vmatpush1.msra.mxu0 0.0
    %4757 = vmatprep.subr.mxu0 0.0
    %4758 = vmatpush1.msra.mxu0 0.0
    %4759 = vmatprep.subr.mxu0 0.0
    %4760 = vmatpush1.msra.mxu0 0.0
    %4761 = vmatprep.subr.mxu0 0.0
    %4762 = vmatpush1.msra.mxu0 0.0
    %4763 = vmatprep.subr.mxu0 0.0
    %4764 = vmatpush1.msra.mxu0 0.0
    %4765 = vmatprep.subr.mxu0 0.0
    %4766 = vmatpush1.msra.mxu0 0.0
    %4767 = vmatprep.subr.mxu0 0.0
    %4768 = vmatpush1.msra.mxu0 0.0
    %4769 = vmatprep.subr.mxu0 0.0
    %4770 = vmatpush1.msra.mxu0 0.0
    %4771 = vmatprep.subr.mxu0 0.0
    %4772 = vmatpush1.msra.mxu0 %v4718
    %4773 = vmatprep.subr.mxu0 0.0
    %4774 = vmatpush1.msra.mxu0 %v4717
    %4775 = vmatprep.subr.mxu0 0.0
    %4776 = vmatpush1.msra.mxu0 %v4716
    %4777 = vmatprep.subr.mxu0 0.0
    %4778 = vmatpush1.msra.mxu0 %v4715
    %4779 = vmatprep.subr.mxu0 0.0
    %4780 = vmatpush2.msra.mxu0 0.0
    %4781 = vmatprep.subr.mxu0 0.0
    %4782 = vmatpush2.msra.mxu0 0.0
    %4783 = vmatprep.subr.mxu0 0.0
    %4784 = vmatpush2.msra.mxu0 0.0
    %4785 = vmatprep.subr.mxu0 0.0
    %4786 = vmatpush2.msra.mxu0 0.0
    %4787 = vmatprep.subr.mxu0 0.0
    %4788 = vmatpush2.msra.mxu0 0.0
    %4789 = vmatprep.subr.mxu0 0.0
    %4790 = vmatpush2.msra.mxu0 0.0
    %4791 = vmatprep.subr.mxu0 0.0
    %4792 = vmatpush2.msra.mxu0 0.0
    %4793 = vmatprep.subr.mxu0 0.0
    %4794 = vmatpush2.msra.mxu0 0.0
    %4795 = vmatprep.subr.mxu0 0.0
    %4796 = vmatpush2.msra.mxu0 0.0
    %4797 = vmatprep.subr.mxu0 0.0
    %4798 = vmatpush2.msra.mxu0 0.0
    %4799 = vmatprep.subr.mxu0 0.0
    %4800 = vmatpush2.msra.mxu0 0.0
    %4801 = vmatprep.subr.mxu0 0.0
    %4802 = vmatpush2.msra.mxu0 0.0
    %4803 = vmatprep.subr.mxu0 0.0
    %4804 = vmatpush2.msra.mxu0 0.0
    %4805 = vmatprep.subr.mxu0 0.0
    %4806 = vmatpush2.msra.mxu0 0.0
    %4807 = vmatprep.subr.mxu0 0.0
    %4808 = vmatpush2.msra.mxu0 0.0
    %4809 = vmatprep.subr.mxu0 0.0
    %4810 = vmatpush2.msra.mxu0 0.0
    %4811 = vmatprep.mubr.f32.mxu0 0.0
    %4812 = vmatmul.mubr.f32.gmra.mxu0 %v4724
    %v4813 = vpop.f32.mrf.mxu0
    %v4814 = vadd.f32 %v4722, %v4813
    %v4815 = vpop.f32.mrf.mxu0
    %4816 = vmatprep.mubr.f32.mxu0 0.0
    %4817 = vmatmul.mubr.f32.gmra.mxu0 %v4727
    %v4818 = vpop.f32.mrf.mxu0
    %v4819 = vadd.f32 %v4722, %v4818
    %v4820 = vpop.f32.mrf.mxu0
    %4821 = vmatprep.mubr.f32.mxu0 0.0
    %4822 = vmatmul.mubr.f32.gmra.mxu0 %v4730
    %v4823 = vpop.f32.mrf.mxu0
    %v4824 = vadd.f32 %v4722, %v4823
    %v4825 = vpop.f32.mrf.mxu0
    %4826 = vmatprep.mubr.f32.mxu0 0.0
    %4827 = vmatmul.mubr.f32.gmra.mxu0 %v4733
    %v4828 = vpop.f32.mrf.mxu0
    %v4829 = vadd.f32 %v4722, %v4828
    %v4830 = vpop.f32.mrf.mxu0
    %4831 = vmatprep.mubr.f32.mxu0 0.0
    %4832 = vmatmul.mubr.f32.gmra.mxu0 %v4736
    %v4833 = vpop.f32.mrf.mxu0
    %v4834 = vadd.f32 %v4722, %v4833
    %v4835 = vpop.f32.mrf.mxu0
    %4836 = vmatprep.mubr.f32.mxu0 0.0
    %4837 = vmatmul.mubr.f32.gmra.mxu0 %v4739
    %v4838 = vpop.f32.mrf.mxu0
    %v4839 = vadd.f32 %v4722, %v4838
    %v4840 = vpop.f32.mrf.mxu0
    %4841 = vmatprep.mubr.f32.mxu0 0.0
    %4842 = vmatmul.mubr.f32.gmra.mxu0 %v4742
    %v4843 = vpop.f32.mrf.mxu0
    %v4844 = vadd.f32 %v4722, %v4843
    %v4845 = vpop.f32.mrf.mxu0
    %4846 = vmatprep.mubr.f32.mxu0 0.0
    %4847 = vmatmul.mubr.f32.gmra.mxu0 %v4745
    %v4848 = vpop.f32.mrf.mxu0
    %v4849 = vadd.f32 %v4722, %v4848
    %v4850 = vpop.f32.mrf.mxu0
    %4851 = vdwg.mxu0
    %4852 = vst [vmem:[#allocation2] sm:$0xff] %v4814
    %4853 = vst [vmem:[#allocation2 + $0x8] sm:$0xff] %v4819
    %4854 = vst [vmem:[#allocation2 + $0x10] sm:$0xff] %v4824
    %4855 = vst [vmem:[#allocation2 + $0x18] sm:$0xff] %v4829
    %4856 = vst [vmem:[#allocation2 + $0x20] sm:$0xff] %v4834
    %4857 = vst [vmem:[#allocation2 + $0x28] sm:$0xff] %v4839
    %4858 = vst [vmem:[#allocation2 + $0x30] sm:$0xff] %v4844
    %4859 = vst [vmem:[#allocation2 + $0x38] sm:$0xff] %v4849
    // Predicated region
    $region42: #{gpt_forward.1} parent=1 // pred_check
      _
    $region43: #{gpt_forward.1} parent=1 // pred_check_branch
      %4861 = sbr.rel (0) target = $region45
    $region44: #{gpt_forward.1} parent=1 // pred_region
      %s4863 = ssub.s32 1024, 1024
      %4864 = vsyncadd [#allocation3], %s4863
      %s4865 = sshll.u32 [#allocation2], 4
      %s4866 = int_to_ptr.vmem [resolvable:$true] %s4865
      %4871 = dma.vmem_to_hbm [thread:$0]  %s4866, 1024, %s10, [#allocation3], 128, 128, 8
    $region45: #{gpt_forward.1} parent=1 // pred_fallthru
      _
    // Predicated region
    $region46: #{gpt_forward.1} parent=1 // pred_check
      _
    $region47: #{gpt_forward.1} parent=1 // pred_check_branch
      %4873 = sbr.rel (0) target = $region49
    $region48: #{gpt_forward.1} parent=1 // pred_region
      %4874 = dma.done [#allocation3], 1024
    $region49: #{gpt_forward.1} parent=1 // pred_fallthru
      _
    %4875 = vsyncpa [#allocation3], 1

</llo_original>
